<compile_context>
chip_gen: v7x
topology: tpu7x:2x2x1
jax: 0.10.0
libtpu: 0.0.40
codegen_flags: <defaults>
</compile_context>

<pallas_src>
import functools
import math

import jax
import jax.numpy as jnp
from jax.experimental import pallas as pl
from jax.experimental.pallas import tpu as pltpu

NEGATIVE_SLOPE = 0.1
LANE = 128          # TPU vreg lane width
DEFAULT_TM = 4096   # rows per grid step (multiple of 8); ~4 MiB traffic/step


def _linear_leakyrelu_kernel(x_ref, w_ref, b_ref, o_ref, *, precision):
    # x_ref : (TM, Dp)   w_ref : (Dp, Dp) block-diagonal, pre-transposed
    # b_ref : (1, Dp)    o_ref : (TM, Dp)
    y = jnp.dot(x_ref[...], w_ref[...],
                preferred_element_type=jnp.float32, precision=precision)
    y = y + b_ref[...]
    o_ref[...] = jnp.where(y > 0, y, y * NEGATIVE_SLOPE).astype(o_ref.dtype)


def pack_params(weight, bias):
    """One-time (parameter-load-time) transform of PyTorch Linear params.

    weight: (D_out, D_in) PyTorch layout, bias: (D_out,).
    Returns (w_packed, b_packed, pack) where
      w_packed = blockdiag(weight.T, ..., weight.T)  of shape (pack*D, pack*D)
      b_packed = [bias, ..., bias]                   of shape (1, pack*D)
    so `pack` independent logical rows are processed as one lane-dense
    128-wide row inside the kernel (unmasked vld/vst, full 128x128 MXU tile).
    """
    d_out, d_in = weight.shape
    if d_out == d_in and d_in < LANE and LANE % d_in == 0:
        pack = LANE // d_in
    else:
        pack = 1
    wt = weight.T                                        # (D_in, D_out), hoisted
    w_packed = jnp.kron(jnp.eye(pack, dtype=weight.dtype), wt)
    b_packed = jnp.tile(bias, pack).reshape(1, pack * d_out)
    return w_packed, b_packed, pack


def _default_precision():
    """HIGHEST on v6e/v7x (extra MXU passes hidden behind HBM); HIGH on v5e
    so the doubled (block-diagonal) MXU work doesn't become the bottleneck."""
    try:
        kind = jax.devices()[0].device_kind.lower()
    except Exception:
        kind = ""
    if "v5" in kind and ("lite" in kind or "5e" in kind):
        return jax.lax.Precision.HIGH
    return jax.lax.Precision.HIGHEST


@functools.partial(jax.jit, static_argnames=("pack", "tm", "precision"))
def linear_leakyrelu(x, w_packed, b_packed, *, pack, tm=DEFAULT_TM,
                     precision=jax.lax.Precision.HIGHEST):
    """x: (..., D) float32; w_packed/b_packed come from pack_params()."""
    orig_shape = x.shape
    d = orig_shape[-1]
    m = math.prod(orig_shape[:-1])
    dp = d * pack

    x2 = x.reshape(m, d)
    m_pad = pl.cdiv(m, pack) * pack
    if m_pad != m:                                       # pad odd row counts
        x2 = jnp.pad(x2, ((0, m_pad - m), (0, 0)))
    mp = m_pad // pack
    xp = x2.reshape(mp, dp)                              # free: contiguous reshape

    tm_eff = max(8, min(tm, ((mp + 7) // 8) * 8))
    tm_eff = ((tm_eff + 7) // 8) * 8                     # sublane-aligned tile
    grid = (pl.cdiv(mp, tm_eff),)

    # VMEM budget: 2x(x tile) + 2x(out tile) double-buffers + resident
    # weight/bias (possibly double-buffered by the compiler) + slack.
    itemsize = jnp.dtype(x.dtype).itemsize
    vmem_bytes = (4 * tm_eff * dp + 2 * dp * dp + 2 * dp) * itemsize + (4 << 20)
    vmem_bytes = int(min(max(vmem_bytes, 16 << 20), 100 << 20))

    cost = pl.CostEstimate(
        flops=2 * mp * dp * dp,
        transcendentals=0,
        bytes_accessed=(2 * mp * dp + dp * dp + dp) * itemsize,
    )

    out = pl.pallas_call(
        functools.partial(_linear_leakyrelu_kernel, precision=precision),
        out_shape=jax.ShapeDtypeStruct((mp, dp), x.dtype),
        grid=grid,
        in_specs=[
            pl.BlockSpec((tm_eff, dp), lambda i: (i, 0)),
            pl.BlockSpec((dp, dp), lambda i: (0, 0)),     # resident across grid
            pl.BlockSpec((1, dp), lambda i: (0, 0)),
        ],
        out_specs=pl.BlockSpec((tm_eff, dp), lambda i: (i, 0)),
        compiler_params=pltpu.CompilerParams(
            dimension_semantics=("parallel",),            # shard rows on v7x's 2 TCs
            vmem_limit_bytes=vmem_bytes,
        ),
        cost_estimate=cost,
    )(xp, w_packed, b_packed)

    out = out.reshape(m_pad, d)
    if m_pad != m:
        out = out[:m]
    return out.reshape(orig_shape)


def _reference(x, weight, bias):
    y = jnp.einsum("...i,oi->...o", x, weight,
                   precision=jax.lax.Precision.HIGHEST) + bias
    return jnp.where(y > 0, y, y * NEGATIVE_SLOPE)


if __name__ == "__main__":
    key = jax.random.PRNGKey(0)
    k_x, k_w, k_b = jax.random.split(key, 3)

    # Small version of the module's x1 = randn(1000, 3, 64, 64); __output_size__ = 64.
    D = 64
    x = jax.random.normal(k_x, (8, 3, 64, D), dtype=jnp.float32)
    # PyTorch Linear init: weight (out, in), bias (out,) ~ U(-1/sqrt(in), 1/sqrt(in))
    bound = 1.0 / (D ** 0.5)
    weight = jax.random.uniform(k_w, (D, D), jnp.float32, -bound, bound)
    bias = jax.random.uniform(k_b, (D,), jnp.float32, -bound, bound)

    # One-time parameter packing (parameter-load time, not per forward call).
    w_packed, b_packed, pack = pack_params(weight, bias)

    out = linear_leakyrelu(x, w_packed, b_packed, pack=pack,
                           precision=_default_precision())
    out = jax.block_until_ready(out)

    ref = _reference(x, weight, bias)
    assert out.shape == ref.shape
    assert jnp.allclose(out, ref, atol=1e-4, rtol=1e-4), "mismatch vs reference"

    print("KERNEL_OK")
</pallas_src>

<mosaic_0001>
module attributes {stable_mosaic.version = 11 : i64} {
  func.func @_linear_leakyrelu_kernel(%arg0: i32, %arg1: memref<768x128xf32, #tpu.memory_space<vmem>>, %arg2: memref<128x128xf32, #tpu.memory_space<vmem>>, %arg3: memref<1x128xf32, #tpu.memory_space<vmem>>, %arg4: memref<768x128xf32, #tpu.memory_space<vmem>>) attributes {dimension_semantics = [#tpu.dimension_semantics<parallel>], iteration_bounds = array<i64: 1>, scalar_prefetch = 0 : i64, scratch_operands = 0 : i64, tpu.core_type = #tpu.core_type<tc>, window_params = [{transform_indices = @transform_0, window_bounds = array<i64: 768, 128>}, {pipeline_mode = #tpu.pipeline_mode<synchronous>, transform_indices = @transform_1, window_bounds = array<i64: 128, 128>}, {pipeline_mode = #tpu.pipeline_mode<synchronous>, transform_indices = @transform_2, window_bounds = array<i64: 1, 128>}, {transform_indices = @transform_3, window_bounds = array<i64: 768, 128>}]} {
    %c0 = arith.constant 0 : index
    %c0_0 = arith.constant 0 : index
    %0 = vector.load %arg1[%c0, %c0_0] : memref<768x128xf32, #tpu.memory_space<vmem>>, vector<768x128xf32>
    %c0_1 = arith.constant 0 : index
    %c0_2 = arith.constant 0 : index
    %1 = vector.load %arg2[%c0_1, %c0_2] : memref<128x128xf32, #tpu.memory_space<vmem>>, vector<128x128xf32>
    %cst = arith.constant dense<0.000000e+00> : vector<768x128xf32>
    %2 = tpu.matmul %0, %1, %cst {dimension_numbers = #tpu.dot_dimension_numbers<[1], [0], [0], [1], [0, 0, 1, 1], [], []>, precision = #tpu.contract_precision<fp32>} : vector<768x128xf32>, vector<128x128xf32>, vector<768x128xf32> -> vector<768x128xf32>
    %c0_3 = arith.constant 0 : index
    %c0_4 = arith.constant 0 : index
    %3 = vector.load %arg3[%c0_3, %c0_4] : memref<1x128xf32, #tpu.memory_space<vmem>>, vector<1x128xf32>
    %4 = vector.broadcast %3 : vector<1x128xf32> to vector<768x128xf32>
    %5 = arith.addf %2, %4 : vector<768x128xf32>
    %cst_5 = arith.constant 0.000000e+00 : f32
    %6 = vector.broadcast %cst_5 : f32 to vector<768x128xf32>
    %7 = arith.cmpf ogt, %5, %6 : vector<768x128xf32>
    %cst_6 = arith.constant 1.000000e-01 : f32
    %8 = vector.broadcast %cst_6 : f32 to vector<768x128xf32>
    %9 = arith.mulf %5, %8 : vector<768x128xf32>
    %10 = arith.select %7, %5, %9 : vector<768x128xi1>, vector<768x128xf32>
    %c0_7 = arith.constant 0 : index
    %c0_8 = arith.constant 0 : index
    %11 = vector.load %arg4[%c0_7, %c0_8] : memref<768x128xf32, #tpu.memory_space<vmem>>, vector<768x128xf32>
    tpu.vector_store %arg4[%c0_7, %c0_8], %10 {strides = array<i32>} : memref<768x128xf32, #tpu.memory_space<vmem>>, vector<768x128xf32>,
    return
  }
  func.func @transform_0(%arg0: i32) -> (i32, i32) {
    %c0_i32 = arith.constant 0 : i32
    %c0_i32_0 = arith.constant 0 : i32
    return %arg0, %c0_i32 : i32, i32
  }
  func.func @transform_1(%arg0: i32) -> (i32, i32) {
    %c0_i32 = arith.constant 0 : i32
    %c0_i32_0 = arith.constant 0 : i32
    %c0_i32_1 = arith.constant 0 : i32
    return %c0_i32, %c0_i32_0 : i32, i32
  }
  func.func @transform_2(%arg0: i32) -> (i32, i32) {
    %c0_i32 = arith.constant 0 : i32
    %c0_i32_0 = arith.constant 0 : i32
    %c0_i32_1 = arith.constant 0 : i32
    return %c0_i32, %c0_i32_0 : i32, i32
  }
  func.func @transform_3(%arg0: i32) -> (i32, i32) {
    %c0_i32 = arith.constant 0 : i32
    %c0_i32_0 = arith.constant 0 : i32
    return %arg0, %c0_i32 : i32, i32
  }
}

</mosaic_0001>

<llo_original>
// kernel: linear_leakyrelu.1
$region0: #{linear_leakyrelu.1}
  #allocation0 [shape = 'u32[]', space=smem, size = 0x4, offset = 0x4, fixed_abs, tag = 'smem constant byte address 0x4 - core index']
  #allocation1 [shape = 'u32[144,128]{1,0:T(1,128)}', space=vmem, size = 0x12000, scoped, tag = 'internal scratch']
  %s0 = inlined_call_operand.vmem [shape: f32[768,128], index: 0, kind: input, shape index: {}]
  %s1 = inlined_call_operand.vmem [shape: f32[128,128], index: 1, kind: input, shape index: {}]
  %s2 = inlined_call_operand.vmem [shape: f32[1,128], index: 2, kind: input, shape index: {}]
  %s3 = inlined_call_operand.vmem [shape: f32[768,128], index: 3, kind: output, shape index: {}]
  %s4 = sld [smem:[#allocation0]]
  $region22: #{linear_leakyrelu.1} parent=0
    _
  %s6 = ssub.s32 1, %s4
  %s7 = scalar_select 0, %s6, %s4
  // Predicated region
  $region2: #{linear_leakyrelu.1} parent=0 // pred_check
    _
  $region3: #{linear_leakyrelu.1} parent=0 // pred_check_branch
    %9 = sbr.rel (0) target = $region5
  $region4: #{linear_leakyrelu.1} parent=0 // pred_region
    _
  $region5: #{linear_leakyrelu.1} parent=0 // pred_fallthru
    _
  // Predicated region
  $region6: #{linear_leakyrelu.1} parent=0 // pred_check
    _
  $region7: #{linear_leakyrelu.1} parent=0 // pred_check_branch
    %11 = sbr.rel (0) target = $region9
  $region8: #{linear_leakyrelu.1} parent=0 // pred_region
    _
  $region9: #{linear_leakyrelu.1} parent=0 // pred_fallthru
    _
  // Predicated region
  $region10: #{linear_leakyrelu.1} parent=0 // pred_check
    _
  $region11: #{linear_leakyrelu.1} parent=0 // pred_check_branch
    %13 = sbr.rel (0) target = $region13
  $region12: #{linear_leakyrelu.1} parent=0 // pred_region
    _
  $region13: #{linear_leakyrelu.1} parent=0 // pred_fallthru
    _
  %v14 = vld [vmem:[%s0] sm:$0xff]
  %v15 = vld [vmem:[%s0 + $0x8] sm:$0xff]
  %v16 = vld [vmem:[%s0 + $0x10] sm:$0xff]
  %v17 = vld [vmem:[%s0 + $0x18] sm:$0xff]
  %v18 = vld [vmem:[%s0 + $0x20] sm:$0xff]
  %v19 = vld [vmem:[%s0 + $0x28] sm:$0xff]
  %v20 = vld [vmem:[%s0 + $0x30] sm:$0xff]
  %v21 = vld [vmem:[%s0 + $0x38] sm:$0xff]
  %v22 = vld [vmem:[%s0 + $0x40] sm:$0xff]
  %v23 = vld [vmem:[%s0 + $0x48] sm:$0xff]
  %v24 = vld [vmem:[%s0 + $0x50] sm:$0xff]
  %v25 = vld [vmem:[%s0 + $0x58] sm:$0xff]
  %v26 = vld [vmem:[%s0 + $0x60] sm:$0xff]
  %v27 = vld [vmem:[%s0 + $0x68] sm:$0xff]
  %v28 = vld [vmem:[%s0 + $0x70] sm:$0xff]
  %v29 = vld [vmem:[%s0 + $0x78] sm:$0xff]
  %v30 = vld [vmem:[%s0 + $0x80] sm:$0xff]
  %v31 = vld [vmem:[%s0 + $0x88] sm:$0xff]
  %v32 = vld [vmem:[%s0 + $0x90] sm:$0xff]
  %v33 = vld [vmem:[%s0 + $0x98] sm:$0xff]
  %v34 = vld [vmem:[%s0 + $0xa0] sm:$0xff]
  %v35 = vld [vmem:[%s0 + $0xa8] sm:$0xff]
  %v36 = vld [vmem:[%s0 + $0xb0] sm:$0xff]
  %v37 = vld [vmem:[%s0 + $0xb8] sm:$0xff]
  %v38 = vld [vmem:[%s0 + $0xc0] sm:$0xff]
  %v39 = vld [vmem:[%s0 + $0xc8] sm:$0xff]
  %v40 = vld [vmem:[%s0 + $0xd0] sm:$0xff]
  %v41 = vld [vmem:[%s0 + $0xd8] sm:$0xff]
  %v42 = vld [vmem:[%s0 + $0xe0] sm:$0xff]
  %v43 = vld [vmem:[%s0 + $0xe8] sm:$0xff]
  %v44 = vld [vmem:[%s0 + $0xf0] sm:$0xff]
  %v45 = vld [vmem:[%s0 + $0xf8] sm:$0xff]
  %v46 = vld [vmem:[%s0 + $0x100] sm:$0xff]
  %v47 = vld [vmem:[%s0 + $0x108] sm:$0xff]
  %v48 = vld [vmem:[%s0 + $0x110] sm:$0xff]
  %v49 = vld [vmem:[%s0 + $0x118] sm:$0xff]
  %v50 = vld [vmem:[%s0 + $0x120] sm:$0xff]
  %v51 = vld [vmem:[%s0 + $0x128] sm:$0xff]
  %v52 = vld [vmem:[%s0 + $0x130] sm:$0xff]
  %v53 = vld [vmem:[%s0 + $0x138] sm:$0xff]
  %v54 = vld [vmem:[%s0 + $0x140] sm:$0xff]
  %v55 = vld [vmem:[%s0 + $0x148] sm:$0xff]
  %v56 = vld [vmem:[%s0 + $0x150] sm:$0xff]
  %v57 = vld [vmem:[%s0 + $0x158] sm:$0xff]
  %v58 = vld [vmem:[%s0 + $0x160] sm:$0xff]
  %v59 = vld [vmem:[%s0 + $0x168] sm:$0xff]
  %v60 = vld [vmem:[%s0 + $0x170] sm:$0xff]
  %v61 = vld [vmem:[%s0 + $0x178] sm:$0xff]
  %v62 = vld [vmem:[%s0 + $0x180] sm:$0xff]
  %v63 = vld [vmem:[%s0 + $0x188] sm:$0xff]
  %v64 = vld [vmem:[%s0 + $0x190] sm:$0xff]
  %v65 = vld [vmem:[%s0 + $0x198] sm:$0xff]
  %v66 = vld [vmem:[%s0 + $0x1a0] sm:$0xff]
  %v67 = vld [vmem:[%s0 + $0x1a8] sm:$0xff]
  %v68 = vld [vmem:[%s0 + $0x1b0] sm:$0xff]
  %v69 = vld [vmem:[%s0 + $0x1b8] sm:$0xff]
  %v70 = vld [vmem:[%s0 + $0x1c0] sm:$0xff]
  %v71 = vld [vmem:[%s0 + $0x1c8] sm:$0xff]
  %v72 = vld [vmem:[%s0 + $0x1d0] sm:$0xff]
  %v73 = vld [vmem:[%s0 + $0x1d8] sm:$0xff]
  %v74 = vld [vmem:[%s0 + $0x1e0] sm:$0xff]
  %v75 = vld [vmem:[%s0 + $0x1e8] sm:$0xff]
  %v76 = vld [vmem:[%s0 + $0x1f0] sm:$0xff]
  %v77 = vld [vmem:[%s0 + $0x1f8] sm:$0xff]
  %v78 = vld [vmem:[%s0 + $0x200] sm:$0xff]
  %v79 = vld [vmem:[%s0 + $0x208] sm:$0xff]
  %v80 = vld [vmem:[%s0 + $0x210] sm:$0xff]
  %v81 = vld [vmem:[%s0 + $0x218] sm:$0xff]
  %v82 = vld [vmem:[%s0 + $0x220] sm:$0xff]
  %v83 = vld [vmem:[%s0 + $0x228] sm:$0xff]
  %v84 = vld [vmem:[%s0 + $0x230] sm:$0xff]
  %v85 = vld [vmem:[%s0 + $0x238] sm:$0xff]
  %v86 = vld [vmem:[%s0 + $0x240] sm:$0xff]
  %v87 = vld [vmem:[%s0 + $0x248] sm:$0xff]
  %v88 = vld [vmem:[%s0 + $0x250] sm:$0xff]
  %v89 = vld [vmem:[%s0 + $0x258] sm:$0xff]
  %v90 = vld [vmem:[%s0 + $0x260] sm:$0xff]
  %v91 = vld [vmem:[%s0 + $0x268] sm:$0xff]
  %v92 = vld [vmem:[%s0 + $0x270] sm:$0xff]
  %v93 = vld [vmem:[%s0 + $0x278] sm:$0xff]
  %v94 = vld [vmem:[%s0 + $0x280] sm:$0xff]
  %v95 = vld [vmem:[%s0 + $0x288] sm:$0xff]
  %v96 = vld [vmem:[%s0 + $0x290] sm:$0xff]
  %v97 = vld [vmem:[%s0 + $0x298] sm:$0xff]
  %v98 = vld [vmem:[%s0 + $0x2a0] sm:$0xff]
  %v99 = vld [vmem:[%s0 + $0x2a8] sm:$0xff]
  %v100 = vld [vmem:[%s0 + $0x2b0] sm:$0xff]
  %v101 = vld [vmem:[%s0 + $0x2b8] sm:$0xff]
  %v102 = vld [vmem:[%s0 + $0x2c0] sm:$0xff]
  %v103 = vld [vmem:[%s0 + $0x2c8] sm:$0xff]
  %v104 = vld [vmem:[%s0 + $0x2d0] sm:$0xff]
  %v105 = vld [vmem:[%s0 + $0x2d8] sm:$0xff]
  %v106 = vld [vmem:[%s0 + $0x2e0] sm:$0xff]
  %v107 = vld [vmem:[%s0 + $0x2e8] sm:$0xff]
  %v108 = vld [vmem:[%s0 + $0x2f0] sm:$0xff]
  %v109 = vld [vmem:[%s0 + $0x2f8] sm:$0xff]
  %v110 = vld [vmem:[%s1] sm:$0xff]
  %v111 = vld [vmem:[%s1 + $0x8] sm:$0xff]
  %v112 = vld [vmem:[%s1 + $0x10] sm:$0xff]
  %v113 = vld [vmem:[%s1 + $0x18] sm:$0xff]
  %v114 = vld [vmem:[%s1 + $0x20] sm:$0xff]
  %v115 = vld [vmem:[%s1 + $0x28] sm:$0xff]
  %v116 = vld [vmem:[%s1 + $0x30] sm:$0xff]
  %v117 = vld [vmem:[%s1 + $0x38] sm:$0xff]
  %v118 = vld [vmem:[%s1 + $0x40] sm:$0xff]
  %v119 = vld [vmem:[%s1 + $0x48] sm:$0xff]
  %v120 = vld [vmem:[%s1 + $0x50] sm:$0xff]
  %v121 = vld [vmem:[%s1 + $0x58] sm:$0xff]
  %v122 = vld [vmem:[%s1 + $0x60] sm:$0xff]
  %v123 = vld [vmem:[%s1 + $0x68] sm:$0xff]
  %v124 = vld [vmem:[%s1 + $0x70] sm:$0xff]
  %v125 = vld [vmem:[%s1 + $0x78] sm:$0xff]
  %v126 = vld [vmem:[%s2] sm:$0x1]
  %v128 = vlaneseq
  %v129 = vshrl.u32 %v128, 7
  %v130 = vsub.s32 0, %v129
  %v131 = vrot.slane %v126, %v130
  %133 = vmatprep.subr.mxu0 0.0
  %v134 = vand.u32 %v110, 4294901760
  %135 = vmatpush1.msra.mxu0 %v134
  %136 = vmatprep.subr.mxu0 0.0
  %v137 = vand.u32 %v111, 4294901760
  %138 = vmatpush1.msra.mxu0 %v137
  %139 = vmatprep.subr.mxu0 0.0
  %v140 = vand.u32 %v112, 4294901760
  %141 = vmatpush1.msra.mxu0 %v140
  %142 = vmatprep.subr.mxu0 0.0
  %v143 = vand.u32 %v113, 4294901760
  %144 = vmatpush1.msra.mxu0 %v143
  %145 = vmatprep.subr.mxu0 0.0
  %v146 = vand.u32 %v114, 4294901760
  %147 = vmatpush1.msra.mxu0 %v146
  %148 = vmatprep.subr.mxu0 0.0
  %v149 = vand.u32 %v115, 4294901760
  %150 = vmatpush1.msra.mxu0 %v149
  %151 = vmatprep.subr.mxu0 0.0
  %v152 = vand.u32 %v116, 4294901760
  %153 = vmatpush1.msra.mxu0 %v152
  %154 = vmatprep.subr.mxu0 0.0
  %v155 = vand.u32 %v117, 4294901760
  %156 = vmatpush1.msra.mxu0 %v155
  %157 = vmatprep.subr.mxu0 0.0
  %v158 = vand.u32 %v118, 4294901760
  %159 = vmatpush1.msra.mxu0 %v158
  %160 = vmatprep.subr.mxu0 0.0
  %v161 = vand.u32 %v119, 4294901760
  %162 = vmatpush1.msra.mxu0 %v161
  %163 = vmatprep.subr.mxu0 0.0
  %v164 = vand.u32 %v120, 4294901760
  %165 = vmatpush1.msra.mxu0 %v164
  %166 = vmatprep.subr.mxu0 0.0
  %v167 = vand.u32 %v121, 4294901760
  %168 = vmatpush1.msra.mxu0 %v167
  %169 = vmatprep.subr.mxu0 0.0
  %v170 = vand.u32 %v122, 4294901760
  %171 = vmatpush1.msra.mxu0 %v170
  %172 = vmatprep.subr.mxu0 0.0
  %v173 = vand.u32 %v123, 4294901760
  %174 = vmatpush1.msra.mxu0 %v173
  %175 = vmatprep.subr.mxu0 0.0
  %v176 = vand.u32 %v124, 4294901760
  %177 = vmatpush1.msra.mxu0 %v176
  %178 = vmatprep.subr.mxu0 0.0
  %v179 = vand.u32 %v125, 4294901760
  %180 = vmatpush1.msra.mxu0 %v179
  %181 = vmatprep.subr.mxu0 0.0
  %182 = vmatpush1.msra.mxu0 0.0
  %183 = vmatprep.subr.mxu0 0.0
  %184 = vmatpush1.msra.mxu0 0.0
  %185 = vmatprep.subr.mxu0 0.0
  %186 = vmatpush1.msra.mxu0 0.0
  %187 = vmatprep.subr.mxu0 0.0
  %188 = vmatpush1.msra.mxu0 0.0
  %189 = vmatprep.subr.mxu0 0.0
  %190 = vmatpush1.msra.mxu0 0.0
  %191 = vmatprep.subr.mxu0 0.0
  %192 = vmatpush1.msra.mxu0 0.0
  %193 = vmatprep.subr.mxu0 0.0
  %194 = vmatpush1.msra.mxu0 0.0
  %195 = vmatprep.subr.mxu0 0.0
  %196 = vmatpush1.msra.mxu0 0.0
  %197 = vmatprep.subr.mxu0 0.0
  %198 = vmatpush1.msra.mxu0 0.0
  %199 = vmatprep.subr.mxu0 0.0
  %200 = vmatpush1.msra.mxu0 0.0
  %201 = vmatprep.subr.mxu0 0.0
  %202 = vmatpush1.msra.mxu0 0.0
  %203 = vmatprep.subr.mxu0 0.0
  %204 = vmatpush1.msra.mxu0 0.0
  %205 = vmatprep.subr.mxu0 0.0
  %206 = vmatpush1.msra.mxu0 0.0
  %207 = vmatprep.subr.mxu0 0.0
  %208 = vmatpush1.msra.mxu0 0.0
  %209 = vmatprep.subr.mxu0 0.0
  %210 = vmatpush1.msra.mxu0 0.0
  %211 = vmatprep.subr.mxu0 0.0
  %212 = vmatpush1.msra.mxu0 0.0
  %213 = vmatprep.mubr.f32.mxu0 0.0
  %v214 = vand.u32 %v14, 4294901760
  %v215 = vsub.f32 %v14, %v214
  %v216 = vand.u32 %v215, 4294901760
  %v217 = vsub.f32 %v215, %v216
  %v218 = vand.u32 %v217, 4294901760
  %219 = vmatmul.mubr.f32.gmra.mrb[0].mxu0 %v218
  %v220 = vpop.f32.mrb[0].mxu0
  %v221 = vadd.f32 %v131, %v220
  %v222 = vpop.f32.mrb[0].mxu0
  %223 = vmatprep.mubr.f32.mxu0 0.0
  %v224 = vand.u32 %v15, 4294901760
  %v225 = vsub.f32 %v15, %v224
  %v226 = vand.u32 %v225, 4294901760
  %v227 = vsub.f32 %v225, %v226
  %v228 = vand.u32 %v227, 4294901760
  %229 = vmatmul.mubr.f32.gmra.mrb[0].mxu0 %v228
  %v230 = vpop.f32.mrb[0].mxu0
  %v231 = vadd.f32 %v131, %v230
  %v232 = vpop.f32.mrb[0].mxu0
  %233 = vmatprep.mubr.f32.mxu0 0.0
  %v234 = vand.u32 %v16, 4294901760
  %v235 = vsub.f32 %v16, %v234
  %v236 = vand.u32 %v235, 4294901760
  %v237 = vsub.f32 %v235, %v236
  %v238 = vand.u32 %v237, 4294901760
  %239 = vmatmul.mubr.f32.gmra.mrb[0].mxu0 %v238
  %v240 = vpop.f32.mrb[0].mxu0
  %v241 = vadd.f32 %v131, %v240
  %v242 = vpop.f32.mrb[0].mxu0
  %243 = vmatprep.mubr.f32.mxu0 0.0
  %v244 = vand.u32 %v17, 4294901760
  %v245 = vsub.f32 %v17, %v244
  %v246 = vand.u32 %v245, 4294901760
  %v247 = vsub.f32 %v245, %v246
  %v248 = vand.u32 %v247, 4294901760
  %249 = vmatmul.mubr.f32.gmra.mrb[0].mxu0 %v248
  %v250 = vpop.f32.mrb[0].mxu0
  %v251 = vadd.f32 %v131, %v250
  %v252 = vpop.f32.mrb[0].mxu0
  %253 = vmatprep.mubr.f32.mxu0 0.0
  %v254 = vand.u32 %v18, 4294901760
  %v255 = vsub.f32 %v18, %v254
  %v256 = vand.u32 %v255, 4294901760
  %v257 = vsub.f32 %v255, %v256
  %v258 = vand.u32 %v257, 4294901760
  %259 = vmatmul.mubr.f32.gmra.mrb[0].mxu0 %v258
  %v260 = vpop.f32.mrb[0].mxu0
  %v261 = vadd.f32 %v131, %v260
  %v262 = vpop.f32.mrb[0].mxu0
  %263 = vmatprep.mubr.f32.mxu0 0.0
  %v264 = vand.u32 %v19, 4294901760
  %v265 = vsub.f32 %v19, %v264
  %v266 = vand.u32 %v265, 4294901760
  %v267 = vsub.f32 %v265, %v266
  %v268 = vand.u32 %v267, 4294901760
  %269 = vmatmul.mubr.f32.gmra.mrb[0].mxu0 %v268
  %v270 = vpop.f32.mrb[0].mxu0
  %v271 = vadd.f32 %v131, %v270
  %v272 = vpop.f32.mrb[0].mxu0
  %273 = vmatprep.mubr.f32.mxu0 0.0
  %v274 = vand.u32 %v20, 4294901760
  %v275 = vsub.f32 %v20, %v274
  %v276 = vand.u32 %v275, 4294901760
  %v277 = vsub.f32 %v275, %v276
  %v278 = vand.u32 %v277, 4294901760
  %279 = vmatmul.mubr.f32.gmra.mrb[0].mxu0 %v278
  %v280 = vpop.f32.mrb[0].mxu0
  %v281 = vadd.f32 %v131, %v280
  %v282 = vpop.f32.mrb[0].mxu0
  %283 = vmatprep.mubr.f32.mxu0 0.0
  %v284 = vand.u32 %v21, 4294901760
  %v285 = vsub.f32 %v21, %v284
  %v286 = vand.u32 %v285, 4294901760
  %v287 = vsub.f32 %v285, %v286
  %v288 = vand.u32 %v287, 4294901760
  %289 = vmatmul.mubr.f32.gmra.mrb[0].mxu0 %v288
  %v290 = vpop.f32.mrb[0].mxu0
  %v291 = vadd.f32 %v131, %v290
  %v292 = vpop.f32.mrb[0].mxu0
  %293 = vmatprep.mubr.f32.mxu0 0.0
  %v294 = vand.u32 %v22, 4294901760
  %v295 = vsub.f32 %v22, %v294
  %v296 = vand.u32 %v295, 4294901760
  %v297 = vsub.f32 %v295, %v296
  %v298 = vand.u32 %v297, 4294901760
  %299 = vmatmul.mubr.f32.gmra.mrb[0].mxu0 %v298
  %v300 = vpop.f32.mrb[0].mxu0
  %v301 = vadd.f32 %v131, %v300
  %v302 = vpop.f32.mrb[0].mxu0
  %303 = vmatprep.mubr.f32.mxu0 0.0
  %v304 = vand.u32 %v23, 4294901760
  %v305 = vsub.f32 %v23, %v304
  %v306 = vand.u32 %v305, 4294901760
  %v307 = vsub.f32 %v305, %v306
  %v308 = vand.u32 %v307, 4294901760
  %309 = vmatmul.mubr.f32.gmra.mrb[0].mxu0 %v308
  %v310 = vpop.f32.mrb[0].mxu0
  %v311 = vadd.f32 %v131, %v310
  %v312 = vpop.f32.mrb[0].mxu0
  %313 = vmatprep.mubr.f32.mxu0 0.0
  %v314 = vand.u32 %v24, 4294901760
  %v315 = vsub.f32 %v24, %v314
  %v316 = vand.u32 %v315, 4294901760
  %v317 = vsub.f32 %v315, %v316
  %v318 = vand.u32 %v317, 4294901760
  %319 = vmatmul.mubr.f32.gmra.mrb[0].mxu0 %v318
  %v320 = vpop.f32.mrb[0].mxu0
  %v321 = vadd.f32 %v131, %v320
  %v322 = vpop.f32.mrb[0].mxu0
  %323 = vmatprep.mubr.f32.mxu0 0.0
  %v324 = vand.u32 %v25, 4294901760
  %v325 = vsub.f32 %v25, %v324
  %v326 = vand.u32 %v325, 4294901760
  %v327 = vsub.f32 %v325, %v326
  %v328 = vand.u32 %v327, 4294901760
  %329 = vmatmul.mubr.f32.gmra.mrb[0].mxu0 %v328
  %v330 = vpop.f32.mrb[0].mxu0
  %v331 = vadd.f32 %v131, %v330
  %v332 = vpop.f32.mrb[0].mxu0
  %333 = vmatprep.mubr.f32.mxu0 0.0
  %v334 = vand.u32 %v26, 4294901760
  %v335 = vsub.f32 %v26, %v334
  %v336 = vand.u32 %v335, 4294901760
  %v337 = vsub.f32 %v335, %v336
  %v338 = vand.u32 %v337, 4294901760
  %339 = vmatmul.mubr.f32.gmra.mrb[0].mxu0 %v338
  %v340 = vpop.f32.mrb[0].mxu0
  %v341 = vadd.f32 %v131, %v340
  %v342 = vpop.f32.mrb[0].mxu0
  %343 = vmatprep.mubr.f32.mxu0 0.0
  %v344 = vand.u32 %v27, 4294901760
  %v345 = vsub.f32 %v27, %v344
  %v346 = vand.u32 %v345, 4294901760
  %v347 = vsub.f32 %v345, %v346
  %v348 = vand.u32 %v347, 4294901760
  %349 = vmatmul.mubr.f32.gmra.mrb[0].mxu0 %v348
  %v350 = vpop.f32.mrb[0].mxu0
  %v351 = vadd.f32 %v131, %v350
  %v352 = vpop.f32.mrb[0].mxu0
  %353 = vmatprep.mubr.f32.mxu0 0.0
  %v354 = vand.u32 %v28, 4294901760
  %v355 = vsub.f32 %v28, %v354
  %v356 = vand.u32 %v355, 4294901760
  %v357 = vsub.f32 %v355, %v356
  %v358 = vand.u32 %v357, 4294901760
  %359 = vmatmul.mubr.f32.gmra.mrb[0].mxu0 %v358
  %v360 = vpop.f32.mrb[0].mxu0
  %v361 = vadd.f32 %v131, %v360
  %v362 = vpop.f32.mrb[0].mxu0
  %363 = vmatprep.mubr.f32.mxu0 0.0
  %v364 = vand.u32 %v29, 4294901760
  %v365 = vsub.f32 %v29, %v364
  %v366 = vand.u32 %v365, 4294901760
  %v367 = vsub.f32 %v365, %v366
  %v368 = vand.u32 %v367, 4294901760
  %369 = vmatmul.mubr.f32.gmra.mrb[0].mxu0 %v368
  %v370 = vpop.f32.mrb[0].mxu0
  %v371 = vadd.f32 %v131, %v370
  %v372 = vpop.f32.mrb[0].mxu0
  %373 = vmatprep.mubr.f32.mxu0 0.0
  %v374 = vand.u32 %v30, 4294901760
  %v375 = vsub.f32 %v30, %v374
  %v376 = vand.u32 %v375, 4294901760
  %v377 = vsub.f32 %v375, %v376
  %v378 = vand.u32 %v377, 4294901760
  %379 = vmatmul.mubr.f32.gmra.mrb[0].mxu0 %v378
  %v380 = vpop.f32.mrb[0].mxu0
  %v381 = vadd.f32 %v131, %v380
  %v382 = vpop.f32.mrb[0].mxu0
  %383 = vmatprep.mubr.f32.mxu0 0.0
  %v384 = vand.u32 %v31, 4294901760
  %v385 = vsub.f32 %v31, %v384
  %v386 = vand.u32 %v385, 4294901760
  %v387 = vsub.f32 %v385, %v386
  %v388 = vand.u32 %v387, 4294901760
  %389 = vmatmul.mubr.f32.gmra.mrb[0].mxu0 %v388
  %v390 = vpop.f32.mrb[0].mxu0
  %v391 = vadd.f32 %v131, %v390
  %v392 = vpop.f32.mrb[0].mxu0
  %393 = vmatprep.mubr.f32.mxu0 0.0
  %v394 = vand.u32 %v32, 4294901760
  %v395 = vsub.f32 %v32, %v394
  %v396 = vand.u32 %v395, 4294901760
  %v397 = vsub.f32 %v395, %v396
  %v398 = vand.u32 %v397, 4294901760
  %399 = vmatmul.mubr.f32.gmra.mrb[0].mxu0 %v398
  %v400 = vpop.f32.mrb[0].mxu0
  %v401 = vadd.f32 %v131, %v400
  %v402 = vpop.f32.mrb[0].mxu0
  %403 = vmatprep.mubr.f32.mxu0 0.0
  %v404 = vand.u32 %v33, 4294901760
  %v405 = vsub.f32 %v33, %v404
  %v406 = vand.u32 %v405, 4294901760
  %v407 = vsub.f32 %v405, %v406
  %v408 = vand.u32 %v407, 4294901760
  %409 = vmatmul.mubr.f32.gmra.mrb[0].mxu0 %v408
  %v410 = vpop.f32.mrb[0].mxu0
  %v411 = vadd.f32 %v131, %v410
  %v412 = vpop.f32.mrb[0].mxu0
  %413 = vmatprep.mubr.f32.mxu0 0.0
  %v414 = vand.u32 %v34, 4294901760
  %v415 = vsub.f32 %v34, %v414
  %v416 = vand.u32 %v415, 4294901760
  %v417 = vsub.f32 %v415, %v416
  %v418 = vand.u32 %v417, 4294901760
  %419 = vmatmul.mubr.f32.gmra.mrb[0].mxu0 %v418
  %v420 = vpop.f32.mrb[0].mxu0
  %v421 = vadd.f32 %v131, %v420
  %v422 = vpop.f32.mrb[0].mxu0
  %423 = vmatprep.mubr.f32.mxu0 0.0
  %v424 = vand.u32 %v35, 4294901760
  %v425 = vsub.f32 %v35, %v424
  %v426 = vand.u32 %v425, 4294901760
  %v427 = vsub.f32 %v425, %v426
  %v428 = vand.u32 %v427, 4294901760
  %429 = vmatmul.mubr.f32.gmra.mrb[0].mxu0 %v428
  %v430 = vpop.f32.mrb[0].mxu0
  %v431 = vadd.f32 %v131, %v430
  %v432 = vpop.f32.mrb[0].mxu0
  %433 = vmatprep.mubr.f32.mxu0 0.0
  %v434 = vand.u32 %v36, 4294901760
  %v435 = vsub.f32 %v36, %v434
  %v436 = vand.u32 %v435, 4294901760
  %v437 = vsub.f32 %v435, %v436
  %v438 = vand.u32 %v437, 4294901760
  %439 = vmatmul.mubr.f32.gmra.mrb[0].mxu0 %v438
  %v440 = vpop.f32.mrb[0].mxu0
  %v441 = vadd.f32 %v131, %v440
  %v442 = vpop.f32.mrb[0].mxu0
  %443 = vmatprep.mubr.f32.mxu0 0.0
  %v444 = vand.u32 %v37, 4294901760
  %v445 = vsub.f32 %v37, %v444
  %v446 = vand.u32 %v445, 4294901760
  %v447 = vsub.f32 %v445, %v446
  %v448 = vand.u32 %v447, 4294901760
  %449 = vmatmul.mubr.f32.gmra.mrb[0].mxu0 %v448
  %v450 = vpop.f32.mrb[0].mxu0
  %v451 = vadd.f32 %v131, %v450
  %v452 = vpop.f32.mrb[0].mxu0
  %453 = vmatprep.mubr.f32.mxu0 0.0
  %v454 = vand.u32 %v38, 4294901760
  %v455 = vsub.f32 %v38, %v454
  %v456 = vand.u32 %v455, 4294901760
  %v457 = vsub.f32 %v455, %v456
  %v458 = vand.u32 %v457, 4294901760
  %459 = vmatmul.mubr.f32.gmra.mrb[0].mxu0 %v458
  %v460 = vpop.f32.mrb[0].mxu0
  %v461 = vadd.f32 %v131, %v460
  %v462 = vpop.f32.mrb[0].mxu0
  %463 = vmatprep.mubr.f32.mxu0 0.0
  %v464 = vand.u32 %v39, 4294901760
  %v465 = vsub.f32 %v39, %v464
  %v466 = vand.u32 %v465, 4294901760
  %v467 = vsub.f32 %v465, %v466
  %v468 = vand.u32 %v467, 4294901760
  %469 = vmatmul.mubr.f32.gmra.mrb[0].mxu0 %v468
  %v470 = vpop.f32.mrb[0].mxu0
  %v471 = vadd.f32 %v131, %v470
  %v472 = vpop.f32.mrb[0].mxu0
  %473 = vmatprep.mubr.f32.mxu0 0.0
  %v474 = vand.u32 %v40, 4294901760
  %v475 = vsub.f32 %v40, %v474
  %v476 = vand.u32 %v475, 4294901760
  %v477 = vsub.f32 %v475, %v476
  %v478 = vand.u32 %v477, 4294901760
  %479 = vmatmul.mubr.f32.gmra.mrb[0].mxu0 %v478
  %v480 = vpop.f32.mrb[0].mxu0
  %v481 = vadd.f32 %v131, %v480
  %v482 = vpop.f32.mrb[0].mxu0
  %483 = vmatprep.mubr.f32.mxu0 0.0
  %v484 = vand.u32 %v41, 4294901760
  %v485 = vsub.f32 %v41, %v484
  %v486 = vand.u32 %v485, 4294901760
  %v487 = vsub.f32 %v485, %v486
  %v488 = vand.u32 %v487, 4294901760
  %489 = vmatmul.mubr.f32.gmra.mrb[0].mxu0 %v488
  %v490 = vpop.f32.mrb[0].mxu0
  %v491 = vadd.f32 %v131, %v490
  %v492 = vpop.f32.mrb[0].mxu0
  %493 = vmatprep.mubr.f32.mxu0 0.0
  %v494 = vand.u32 %v42, 4294901760
  %v495 = vsub.f32 %v42, %v494
  %v496 = vand.u32 %v495, 4294901760
  %v497 = vsub.f32 %v495, %v496
  %v498 = vand.u32 %v497, 4294901760
  %499 = vmatmul.mubr.f32.gmra.mrb[0].mxu0 %v498
  %v500 = vpop.f32.mrb[0].mxu0
  %v501 = vadd.f32 %v131, %v500
  %v502 = vpop.f32.mrb[0].mxu0
  %503 = vmatprep.mubr.f32.mxu0 0.0
  %v504 = vand.u32 %v43, 4294901760
  %v505 = vsub.f32 %v43, %v504
  %v506 = vand.u32 %v505, 4294901760
  %v507 = vsub.f32 %v505, %v506
  %v508 = vand.u32 %v507, 4294901760
  %509 = vmatmul.mubr.f32.gmra.mrb[0].mxu0 %v508
  %v510 = vpop.f32.mrb[0].mxu0
  %v511 = vadd.f32 %v131, %v510
  %v512 = vpop.f32.mrb[0].mxu0
  %513 = vmatprep.mubr.f32.mxu0 0.0
  %v514 = vand.u32 %v44, 4294901760
  %v515 = vsub.f32 %v44, %v514
  %v516 = vand.u32 %v515, 4294901760
  %v517 = vsub.f32 %v515, %v516
  %v518 = vand.u32 %v517, 4294901760
  %519 = vmatmul.mubr.f32.gmra.mrb[0].mxu0 %v518
  %v520 = vpop.f32.mrb[0].mxu0
  %v521 = vadd.f32 %v131, %v520
  %v522 = vpop.f32.mrb[0].mxu0
  %523 = vmatprep.mubr.f32.mxu0 0.0
  %v524 = vand.u32 %v45, 4294901760
  %v525 = vsub.f32 %v45, %v524
  %v526 = vand.u32 %v525, 4294901760
  %v527 = vsub.f32 %v525, %v526
  %v528 = vand.u32 %v527, 4294901760
  %529 = vmatmul.mubr.f32.gmra.mrb[0].mxu0 %v528
  %v530 = vpop.f32.mrb[0].mxu0
  %v531 = vadd.f32 %v131, %v530
  %v532 = vpop.f32.mrb[0].mxu0
  %533 = vmatprep.mubr.f32.mxu0 0.0
  %v534 = vand.u32 %v46, 4294901760
  %v535 = vsub.f32 %v46, %v534
  %v536 = vand.u32 %v535, 4294901760
  %v537 = vsub.f32 %v535, %v536
  %v538 = vand.u32 %v537, 4294901760
  %539 = vmatmul.mubr.f32.gmra.mrb[0].mxu0 %v538
  %v540 = vpop.f32.mrb[0].mxu0
  %v541 = vadd.f32 %v131, %v540
  %v542 = vpop.f32.mrb[0].mxu0
  %543 = vmatprep.mubr.f32.mxu0 0.0
  %v544 = vand.u32 %v47, 4294901760
  %v545 = vsub.f32 %v47, %v544
  %v546 = vand.u32 %v545, 4294901760
  %v547 = vsub.f32 %v545, %v546
  %v548 = vand.u32 %v547, 4294901760
  %549 = vmatmul.mubr.f32.gmra.mrb[0].mxu0 %v548
  %v550 = vpop.f32.mrb[0].mxu0
  %v551 = vadd.f32 %v131, %v550
  %v552 = vpop.f32.mrb[0].mxu0
  %553 = vmatprep.mubr.f32.mxu0 0.0
  %v554 = vand.u32 %v48, 4294901760
  %v555 = vsub.f32 %v48, %v554
  %v556 = vand.u32 %v555, 4294901760
  %v557 = vsub.f32 %v555, %v556
  %v558 = vand.u32 %v557, 4294901760
  %559 = vmatmul.mubr.f32.gmra.mrb[0].mxu0 %v558
  %v560 = vpop.f32.mrb[0].mxu0
  %v561 = vadd.f32 %v131, %v560
  %v562 = vpop.f32.mrb[0].mxu0
  %563 = vmatprep.mubr.f32.mxu0 0.0
  %v564 = vand.u32 %v49, 4294901760
  %v565 = vsub.f32 %v49, %v564
  %v566 = vand.u32 %v565, 4294901760
  %v567 = vsub.f32 %v565, %v566
  %v568 = vand.u32 %v567, 4294901760
  %569 = vmatmul.mubr.f32.gmra.mrb[0].mxu0 %v568
  %v570 = vpop.f32.mrb[0].mxu0
  %v571 = vadd.f32 %v131, %v570
  %v572 = vpop.f32.mrb[0].mxu0
  %573 = vmatprep.mubr.f32.mxu0 0.0
  %v574 = vand.u32 %v50, 4294901760
  %v575 = vsub.f32 %v50, %v574
  %v576 = vand.u32 %v575, 4294901760
  %v577 = vsub.f32 %v575, %v576
  %v578 = vand.u32 %v577, 4294901760
  %579 = vmatmul.mubr.f32.gmra.mrb[0].mxu0 %v578
  %v580 = vpop.f32.mrb[0].mxu0
  %v581 = vadd.f32 %v131, %v580
  %v582 = vpop.f32.mrb[0].mxu0
  %583 = vmatprep.mubr.f32.mxu0 0.0
  %v584 = vand.u32 %v51, 4294901760
  %v585 = vsub.f32 %v51, %v584
  %v586 = vand.u32 %v585, 4294901760
  %v587 = vsub.f32 %v585, %v586
  %v588 = vand.u32 %v587, 4294901760
  %589 = vmatmul.mubr.f32.gmra.mrb[0].mxu0 %v588
  %v590 = vpop.f32.mrb[0].mxu0
  %v591 = vadd.f32 %v131, %v590
  %v592 = vpop.f32.mrb[0].mxu0
  %593 = vmatprep.mubr.f32.mxu0 0.0
  %v594 = vand.u32 %v52, 4294901760
  %v595 = vsub.f32 %v52, %v594
  %v596 = vand.u32 %v595, 4294901760
  %v597 = vsub.f32 %v595, %v596
  %v598 = vand.u32 %v597, 4294901760
  %599 = vmatmul.mubr.f32.gmra.mrb[0].mxu0 %v598
  %v600 = vpop.f32.mrb[0].mxu0
  %v601 = vadd.f32 %v131, %v600
  %v602 = vpop.f32.mrb[0].mxu0
  %603 = vmatprep.mubr.f32.mxu0 0.0
  %v604 = vand.u32 %v53, 4294901760
  %v605 = vsub.f32 %v53, %v604
  %v606 = vand.u32 %v605, 4294901760
  %v607 = vsub.f32 %v605, %v606
  %v608 = vand.u32 %v607, 4294901760
  %609 = vmatmul.mubr.f32.gmra.mrb[0].mxu0 %v608
  %v610 = vpop.f32.mrb[0].mxu0
  %v611 = vadd.f32 %v131, %v610
  %v612 = vpop.f32.mrb[0].mxu0
  %613 = vmatprep.mubr.f32.mxu0 0.0
  %v614 = vand.u32 %v54, 4294901760
  %v615 = vsub.f32 %v54, %v614
  %v616 = vand.u32 %v615, 4294901760
  %v617 = vsub.f32 %v615, %v616
  %v618 = vand.u32 %v617, 4294901760
  %619 = vmatmul.mubr.f32.gmra.mrb[0].mxu0 %v618
  %v620 = vpop.f32.mrb[0].mxu0
  %v621 = vadd.f32 %v131, %v620
  %v622 = vpop.f32.mrb[0].mxu0
  %623 = vmatprep.mubr.f32.mxu0 0.0
  %v624 = vand.u32 %v55, 4294901760
  %v625 = vsub.f32 %v55, %v624
  %v626 = vand.u32 %v625, 4294901760
  %v627 = vsub.f32 %v625, %v626
  %v628 = vand.u32 %v627, 4294901760
  %629 = vmatmul.mubr.f32.gmra.mrb[0].mxu0 %v628
  %v630 = vpop.f32.mrb[0].mxu0
  %v631 = vadd.f32 %v131, %v630
  %v632 = vpop.f32.mrb[0].mxu0
  %633 = vmatprep.mubr.f32.mxu0 0.0
  %v634 = vand.u32 %v56, 4294901760
  %v635 = vsub.f32 %v56, %v634
  %v636 = vand.u32 %v635, 4294901760
  %v637 = vsub.f32 %v635, %v636
  %v638 = vand.u32 %v637, 4294901760
  %639 = vmatmul.mubr.f32.gmra.mrb[0].mxu0 %v638
  %v640 = vpop.f32.mrb[0].mxu0
  %v641 = vadd.f32 %v131, %v640
  %v642 = vpop.f32.mrb[0].mxu0
  %643 = vmatprep.mubr.f32.mxu0 0.0
  %v644 = vand.u32 %v57, 4294901760
  %v645 = vsub.f32 %v57, %v644
  %v646 = vand.u32 %v645, 4294901760
  %v647 = vsub.f32 %v645, %v646
  %v648 = vand.u32 %v647, 4294901760
  %649 = vmatmul.mubr.f32.gmra.mrb[0].mxu0 %v648
  %v650 = vpop.f32.mrb[0].mxu0
  %v651 = vadd.f32 %v131, %v650
  %v652 = vpop.f32.mrb[0].mxu0
  %653 = vmatprep.mubr.f32.mxu0 0.0
  %v654 = vand.u32 %v58, 4294901760
  %v655 = vsub.f32 %v58, %v654
  %v656 = vand.u32 %v655, 4294901760
  %v657 = vsub.f32 %v655, %v656
  %v658 = vand.u32 %v657, 4294901760
  %659 = vmatmul.mubr.f32.gmra.mrb[0].mxu0 %v658
  %v660 = vpop.f32.mrb[0].mxu0
  %v661 = vadd.f32 %v131, %v660
  %v662 = vpop.f32.mrb[0].mxu0
  %663 = vmatprep.mubr.f32.mxu0 0.0
  %v664 = vand.u32 %v59, 4294901760
  %v665 = vsub.f32 %v59, %v664
  %v666 = vand.u32 %v665, 4294901760
  %v667 = vsub.f32 %v665, %v666
  %v668 = vand.u32 %v667, 4294901760
  %669 = vmatmul.mubr.f32.gmra.mrb[0].mxu0 %v668
  %v670 = vpop.f32.mrb[0].mxu0
  %v671 = vadd.f32 %v131, %v670
  %v672 = vpop.f32.mrb[0].mxu0
  %673 = vmatprep.mubr.f32.mxu0 0.0
  %v674 = vand.u32 %v60, 4294901760
  %v675 = vsub.f32 %v60, %v674
  %v676 = vand.u32 %v675, 4294901760
  %v677 = vsub.f32 %v675, %v676
  %v678 = vand.u32 %v677, 4294901760
  %679 = vmatmul.mubr.f32.gmra.mrb[0].mxu0 %v678
  %v680 = vpop.f32.mrb[0].mxu0
  %v681 = vadd.f32 %v131, %v680
  %v682 = vpop.f32.mrb[0].mxu0
  %683 = vmatprep.mubr.f32.mxu0 0.0
  %v684 = vand.u32 %v61, 4294901760
  %v685 = vsub.f32 %v61, %v684
  %v686 = vand.u32 %v685, 4294901760
  %v687 = vsub.f32 %v685, %v686
  %v688 = vand.u32 %v687, 4294901760
  %689 = vmatmul.mubr.f32.gmra.mrb[0].mxu0 %v688
  %v690 = vpop.f32.mrb[0].mxu0
  %v691 = vadd.f32 %v131, %v690
  %v692 = vpop.f32.mrb[0].mxu0
  %693 = vmatprep.mubr.f32.mxu0 0.0
  %v694 = vand.u32 %v62, 4294901760
  %v695 = vsub.f32 %v62, %v694
  %v696 = vand.u32 %v695, 4294901760
  %v697 = vsub.f32 %v695, %v696
  %v698 = vand.u32 %v697, 4294901760
  %699 = vmatmul.mubr.f32.gmra.mrb[0].mxu0 %v698
  %v700 = vpop.f32.mrb[0].mxu0
  %v701 = vadd.f32 %v131, %v700
  %v702 = vpop.f32.mrb[0].mxu0
  %703 = vmatprep.mubr.f32.mxu0 0.0
  %v704 = vand.u32 %v63, 4294901760
  %v705 = vsub.f32 %v63, %v704
  %v706 = vand.u32 %v705, 4294901760
  %v707 = vsub.f32 %v705, %v706
  %v708 = vand.u32 %v707, 4294901760
  %709 = vmatmul.mubr.f32.gmra.mrb[0].mxu0 %v708
  %v710 = vpop.f32.mrb[0].mxu0
  %v711 = vadd.f32 %v131, %v710
  %v712 = vpop.f32.mrb[0].mxu0
  %713 = vmatprep.mubr.f32.mxu0 0.0
  %v714 = vand.u32 %v64, 4294901760
  %v715 = vsub.f32 %v64, %v714
  %v716 = vand.u32 %v715, 4294901760
  %v717 = vsub.f32 %v715, %v716
  %v718 = vand.u32 %v717, 4294901760
  %719 = vmatmul.mubr.f32.gmra.mrb[0].mxu0 %v718
  %v720 = vpop.f32.mrb[0].mxu0
  %v721 = vadd.f32 %v131, %v720
  %v722 = vpop.f32.mrb[0].mxu0
  %723 = vmatprep.mubr.f32.mxu0 0.0
  %v724 = vand.u32 %v65, 4294901760
  %v725 = vsub.f32 %v65, %v724
  %v726 = vand.u32 %v725, 4294901760
  %v727 = vsub.f32 %v725, %v726
  %v728 = vand.u32 %v727, 4294901760
  %729 = vmatmul.mubr.f32.gmra.mrb[0].mxu0 %v728
  %v730 = vpop.f32.mrb[0].mxu0
  %v731 = vadd.f32 %v131, %v730
  %v732 = vpop.f32.mrb[0].mxu0
  %733 = vmatprep.mubr.f32.mxu0 0.0
  %v734 = vand.u32 %v66, 4294901760
  %v735 = vsub.f32 %v66, %v734
  %v736 = vand.u32 %v735, 4294901760
  %v737 = vsub.f32 %v735, %v736
  %v738 = vand.u32 %v737, 4294901760
  %739 = vmatmul.mubr.f32.gmra.mrb[0].mxu0 %v738
  %v740 = vpop.f32.mrb[0].mxu0
  %v741 = vadd.f32 %v131, %v740
  %v742 = vpop.f32.mrb[0].mxu0
  %743 = vmatprep.mubr.f32.mxu0 0.0
  %v744 = vand.u32 %v67, 4294901760
  %v745 = vsub.f32 %v67, %v744
  %v746 = vand.u32 %v745, 4294901760
  %v747 = vsub.f32 %v745, %v746
  %v748 = vand.u32 %v747, 4294901760
  %749 = vmatmul.mubr.f32.gmra.mrb[0].mxu0 %v748
  %v750 = vpop.f32.mrb[0].mxu0
  %v751 = vadd.f32 %v131, %v750
  %v752 = vpop.f32.mrb[0].mxu0
  %753 = vmatprep.mubr.f32.mxu0 0.0
  %v754 = vand.u32 %v68, 4294901760
  %v755 = vsub.f32 %v68, %v754
  %v756 = vand.u32 %v755, 4294901760
  %v757 = vsub.f32 %v755, %v756
  %v758 = vand.u32 %v757, 4294901760
  %759 = vmatmul.mubr.f32.gmra.mrb[0].mxu0 %v758
  %v760 = vpop.f32.mrb[0].mxu0
  %v761 = vadd.f32 %v131, %v760
  %v762 = vpop.f32.mrb[0].mxu0
  %763 = vmatprep.mubr.f32.mxu0 0.0
  %v764 = vand.u32 %v69, 4294901760
  %v765 = vsub.f32 %v69, %v764
  %v766 = vand.u32 %v765, 4294901760
  %v767 = vsub.f32 %v765, %v766
  %v768 = vand.u32 %v767, 4294901760
  %769 = vmatmul.mubr.f32.gmra.mrb[0].mxu0 %v768
  %v770 = vpop.f32.mrb[0].mxu0
  %v771 = vadd.f32 %v131, %v770
  %v772 = vpop.f32.mrb[0].mxu0
  %773 = vmatprep.mubr.f32.mxu0 0.0
  %v774 = vand.u32 %v70, 4294901760
  %v775 = vsub.f32 %v70, %v774
  %v776 = vand.u32 %v775, 4294901760
  %v777 = vsub.f32 %v775, %v776
  %v778 = vand.u32 %v777, 4294901760
  %779 = vmatmul.mubr.f32.gmra.mrb[0].mxu0 %v778
  %v780 = vpop.f32.mrb[0].mxu0
  %v781 = vadd.f32 %v131, %v780
  %v782 = vpop.f32.mrb[0].mxu0
  %783 = vmatprep.mubr.f32.mxu0 0.0
  %v784 = vand.u32 %v71, 4294901760
  %v785 = vsub.f32 %v71, %v784
  %v786 = vand.u32 %v785, 4294901760
  %v787 = vsub.f32 %v785, %v786
  %v788 = vand.u32 %v787, 4294901760
  %789 = vmatmul.mubr.f32.gmra.mrb[0].mxu0 %v788
  %v790 = vpop.f32.mrb[0].mxu0
  %v791 = vadd.f32 %v131, %v790
  %v792 = vpop.f32.mrb[0].mxu0
  %793 = vmatprep.mubr.f32.mxu0 0.0
  %v794 = vand.u32 %v72, 4294901760
  %v795 = vsub.f32 %v72, %v794
  %v796 = vand.u32 %v795, 4294901760
  %v797 = vsub.f32 %v795, %v796
  %v798 = vand.u32 %v797, 4294901760
  %799 = vmatmul.mubr.f32.gmra.mrb[0].mxu0 %v798
  %v800 = vpop.f32.mrb[0].mxu0
  %v801 = vadd.f32 %v131, %v800
  %v802 = vpop.f32.mrb[0].mxu0
  %803 = vmatprep.mubr.f32.mxu0 0.0
  %v804 = vand.u32 %v73, 4294901760
  %v805 = vsub.f32 %v73, %v804
  %v806 = vand.u32 %v805, 4294901760
  %v807 = vsub.f32 %v805, %v806
  %v808 = vand.u32 %v807, 4294901760
  %809 = vmatmul.mubr.f32.gmra.mrb[0].mxu0 %v808
  %v810 = vpop.f32.mrb[0].mxu0
  %v811 = vadd.f32 %v131, %v810
  %v812 = vpop.f32.mrb[0].mxu0
  %813 = vmatprep.mubr.f32.mxu0 0.0
  %v814 = vand.u32 %v74, 4294901760
  %v815 = vsub.f32 %v74, %v814
  %v816 = vand.u32 %v815, 4294901760
  %v817 = vsub.f32 %v815, %v816
  %v818 = vand.u32 %v817, 4294901760
  %819 = vmatmul.mubr.f32.gmra.mrb[0].mxu0 %v818
  %v820 = vpop.f32.mrb[0].mxu0
  %v821 = vadd.f32 %v131, %v820
  %v822 = vpop.f32.mrb[0].mxu0
  %823 = vmatprep.mubr.f32.mxu0 0.0
  %v824 = vand.u32 %v75, 4294901760
  %v825 = vsub.f32 %v75, %v824
  %v826 = vand.u32 %v825, 4294901760
  %v827 = vsub.f32 %v825, %v826
  %v828 = vand.u32 %v827, 4294901760
  %829 = vmatmul.mubr.f32.gmra.mrb[0].mxu0 %v828
  %v830 = vpop.f32.mrb[0].mxu0
  %v831 = vadd.f32 %v131, %v830
  %v832 = vpop.f32.mrb[0].mxu0
  %833 = vmatprep.mubr.f32.mxu0 0.0
  %v834 = vand.u32 %v76, 4294901760
  %v835 = vsub.f32 %v76, %v834
  %v836 = vand.u32 %v835, 4294901760
  %v837 = vsub.f32 %v835, %v836
  %v838 = vand.u32 %v837, 4294901760
  %839 = vmatmul.mubr.f32.gmra.mrb[0].mxu0 %v838
  %v840 = vpop.f32.mrb[0].mxu0
  %v841 = vadd.f32 %v131, %v840
  %v842 = vpop.f32.mrb[0].mxu0
  %843 = vmatprep.mubr.f32.mxu0 0.0
  %v844 = vand.u32 %v77, 4294901760
  %v845 = vsub.f32 %v77, %v844
  %v846 = vand.u32 %v845, 4294901760
  %v847 = vsub.f32 %v845, %v846
  %v848 = vand.u32 %v847, 4294901760
  %849 = vmatmul.mubr.f32.gmra.mrb[0].mxu0 %v848
  %v850 = vpop.f32.mrb[0].mxu0
  %v851 = vadd.f32 %v131, %v850
  %v852 = vpop.f32.mrb[0].mxu0
  %853 = vmatprep.mubr.f32.mxu0 0.0
  %v854 = vand.u32 %v78, 4294901760
  %v855 = vsub.f32 %v78, %v854
  %v856 = vand.u32 %v855, 4294901760
  %v857 = vsub.f32 %v855, %v856
  %v858 = vand.u32 %v857, 4294901760
  %859 = vmatmul.mubr.f32.gmra.mrb[0].mxu0 %v858
  %v860 = vpop.f32.mrb[0].mxu0
  %v861 = vadd.f32 %v131, %v860
  %v862 = vpop.f32.mrb[0].mxu0
  %863 = vmatprep.mubr.f32.mxu0 0.0
  %v864 = vand.u32 %v79, 4294901760
  %v865 = vsub.f32 %v79, %v864
  %v866 = vand.u32 %v865, 4294901760
  %v867 = vsub.f32 %v865, %v866
  %v868 = vand.u32 %v867, 4294901760
  %869 = vmatmul.mubr.f32.gmra.mrb[0].mxu0 %v868
  %v870 = vpop.f32.mrb[0].mxu0
  %v871 = vadd.f32 %v131, %v870
  %v872 = vpop.f32.mrb[0].mxu0
  %873 = vmatprep.mubr.f32.mxu0 0.0
  %v874 = vand.u32 %v80, 4294901760
  %v875 = vsub.f32 %v80, %v874
  %v876 = vand.u32 %v875, 4294901760
  %v877 = vsub.f32 %v875, %v876
  %v878 = vand.u32 %v877, 4294901760
  %879 = vmatmul.mubr.f32.gmra.mrb[0].mxu0 %v878
  %v880 = vpop.f32.mrb[0].mxu0
  %v881 = vadd.f32 %v131, %v880
  %v882 = vpop.f32.mrb[0].mxu0
  %883 = vmatprep.mubr.f32.mxu0 0.0
  %v884 = vand.u32 %v81, 4294901760
  %v885 = vsub.f32 %v81, %v884
  %v886 = vand.u32 %v885, 4294901760
  %v887 = vsub.f32 %v885, %v886
  %v888 = vand.u32 %v887, 4294901760
  %889 = vmatmul.mubr.f32.gmra.mrb[0].mxu0 %v888
  %v890 = vpop.f32.mrb[0].mxu0
  %v891 = vadd.f32 %v131, %v890
  %v892 = vpop.f32.mrb[0].mxu0
  %893 = vmatprep.mubr.f32.mxu0 0.0
  %v894 = vand.u32 %v82, 4294901760
  %v895 = vsub.f32 %v82, %v894
  %v896 = vand.u32 %v895, 4294901760
  %v897 = vsub.f32 %v895, %v896
  %v898 = vand.u32 %v897, 4294901760
  %899 = vmatmul.mubr.f32.gmra.mrb[0].mxu0 %v898
  %v900 = vpop.f32.mrb[0].mxu0
  %v901 = vadd.f32 %v131, %v900
  %v902 = vpop.f32.mrb[0].mxu0
  %903 = vmatprep.mubr.f32.mxu0 0.0
  %v904 = vand.u32 %v83, 4294901760
  %v905 = vsub.f32 %v83, %v904
  %v906 = vand.u32 %v905, 4294901760
  %v907 = vsub.f32 %v905, %v906
  %v908 = vand.u32 %v907, 4294901760
  %909 = vmatmul.mubr.f32.gmra.mrb[0].mxu0 %v908
  %v910 = vpop.f32.mrb[0].mxu0
  %v911 = vadd.f32 %v131, %v910
  %v912 = vpop.f32.mrb[0].mxu0
  %913 = vmatprep.mubr.f32.mxu0 0.0
  %v914 = vand.u32 %v84, 4294901760
  %v915 = vsub.f32 %v84, %v914
  %v916 = vand.u32 %v915, 4294901760
  %v917 = vsub.f32 %v915, %v916
  %v918 = vand.u32 %v917, 4294901760
  %919 = vmatmul.mubr.f32.gmra.mrb[0].mxu0 %v918
  %v920 = vpop.f32.mrb[0].mxu0
  %v921 = vadd.f32 %v131, %v920
  %v922 = vpop.f32.mrb[0].mxu0
  %923 = vmatprep.mubr.f32.mxu0 0.0
  %v924 = vand.u32 %v85, 4294901760
  %v925 = vsub.f32 %v85, %v924
  %v926 = vand.u32 %v925, 4294901760
  %v927 = vsub.f32 %v925, %v926
  %v928 = vand.u32 %v927, 4294901760
  %929 = vmatmul.mubr.f32.gmra.mrb[0].mxu0 %v928
  %v930 = vpop.f32.mrb[0].mxu0
  %v931 = vadd.f32 %v131, %v930
  %v932 = vpop.f32.mrb[0].mxu0
  %933 = vmatprep.mubr.f32.mxu0 0.0
  %v934 = vand.u32 %v86, 4294901760
  %v935 = vsub.f32 %v86, %v934
  %v936 = vand.u32 %v935, 4294901760
  %v937 = vsub.f32 %v935, %v936
  %v938 = vand.u32 %v937, 4294901760
  %939 = vmatmul.mubr.f32.gmra.mrb[0].mxu0 %v938
  %v940 = vpop.f32.mrb[0].mxu0
  %v941 = vadd.f32 %v131, %v940
  %v942 = vpop.f32.mrb[0].mxu0
  %943 = vmatprep.mubr.f32.mxu0 0.0
  %v944 = vand.u32 %v87, 4294901760
  %v945 = vsub.f32 %v87, %v944
  %v946 = vand.u32 %v945, 4294901760
  %v947 = vsub.f32 %v945, %v946
  %v948 = vand.u32 %v947, 4294901760
  %949 = vmatmul.mubr.f32.gmra.mrb[0].mxu0 %v948
  %v950 = vpop.f32.mrb[0].mxu0
  %v951 = vadd.f32 %v131, %v950
  %v952 = vpop.f32.mrb[0].mxu0
  %953 = vmatprep.mubr.f32.mxu0 0.0
  %v954 = vand.u32 %v88, 4294901760
  %v955 = vsub.f32 %v88, %v954
  %v956 = vand.u32 %v955, 4294901760
  %v957 = vsub.f32 %v955, %v956
  %v958 = vand.u32 %v957, 4294901760
  %959 = vmatmul.mubr.f32.gmra.mrb[0].mxu0 %v958
  %v960 = vpop.f32.mrb[0].mxu0
  %v961 = vadd.f32 %v131, %v960
  %v962 = vpop.f32.mrb[0].mxu0
  %963 = vmatprep.mubr.f32.mxu0 0.0
  %v964 = vand.u32 %v89, 4294901760
  %v965 = vsub.f32 %v89, %v964
  %v966 = vand.u32 %v965, 4294901760
  %v967 = vsub.f32 %v965, %v966
  %v968 = vand.u32 %v967, 4294901760
  %969 = vmatmul.mubr.f32.gmra.mrb[0].mxu0 %v968
  %v970 = vpop.f32.mrb[0].mxu0
  %v971 = vadd.f32 %v131, %v970
  %v972 = vpop.f32.mrb[0].mxu0
  %973 = vmatprep.mubr.f32.mxu0 0.0
  %v974 = vand.u32 %v90, 4294901760
  %v975 = vsub.f32 %v90, %v974
  %v976 = vand.u32 %v975, 4294901760
  %v977 = vsub.f32 %v975, %v976
  %v978 = vand.u32 %v977, 4294901760
  %979 = vmatmul.mubr.f32.gmra.mrb[0].mxu0 %v978
  %v980 = vpop.f32.mrb[0].mxu0
  %v981 = vadd.f32 %v131, %v980
  %v982 = vpop.f32.mrb[0].mxu0
  %983 = vmatprep.mubr.f32.mxu0 0.0
  %v984 = vand.u32 %v91, 4294901760
  %v985 = vsub.f32 %v91, %v984
  %v986 = vand.u32 %v985, 4294901760
  %v987 = vsub.f32 %v985, %v986
  %v988 = vand.u32 %v987, 4294901760
  %989 = vmatmul.mubr.f32.gmra.mrb[0].mxu0 %v988
  %v990 = vpop.f32.mrb[0].mxu0
  %v991 = vadd.f32 %v131, %v990
  %v992 = vpop.f32.mrb[0].mxu0
  %993 = vmatprep.mubr.f32.mxu0 0.0
  %v994 = vand.u32 %v92, 4294901760
  %v995 = vsub.f32 %v92, %v994
  %v996 = vand.u32 %v995, 4294901760
  %v997 = vsub.f32 %v995, %v996
  %v998 = vand.u32 %v997, 4294901760
  %999 = vmatmul.mubr.f32.gmra.mrb[0].mxu0 %v998
  %v1000 = vpop.f32.mrb[0].mxu0
  %v1001 = vadd.f32 %v131, %v1000
  %v1002 = vpop.f32.mrb[0].mxu0
  %1003 = vmatprep.mubr.f32.mxu0 0.0
  %v1004 = vand.u32 %v93, 4294901760
  %v1005 = vsub.f32 %v93, %v1004
  %v1006 = vand.u32 %v1005, 4294901760
  %v1007 = vsub.f32 %v1005, %v1006
  %v1008 = vand.u32 %v1007, 4294901760
  %1009 = vmatmul.mubr.f32.gmra.mrb[0].mxu0 %v1008
  %v1010 = vpop.f32.mrb[0].mxu0
  %v1011 = vadd.f32 %v131, %v1010
  %v1012 = vpop.f32.mrb[0].mxu0
  %1013 = vmatprep.mubr.f32.mxu0 0.0
  %v1014 = vand.u32 %v94, 4294901760
  %v1015 = vsub.f32 %v94, %v1014
  %v1016 = vand.u32 %v1015, 4294901760
  %v1017 = vsub.f32 %v1015, %v1016
  %v1018 = vand.u32 %v1017, 4294901760
  %1019 = vmatmul.mubr.f32.gmra.mrb[0].mxu0 %v1018
  %v1020 = vpop.f32.mrb[0].mxu0
  %v1021 = vadd.f32 %v131, %v1020
  %v1022 = vpop.f32.mrb[0].mxu0
  %1023 = vmatprep.mubr.f32.mxu0 0.0
  %v1024 = vand.u32 %v95, 4294901760
  %v1025 = vsub.f32 %v95, %v1024
  %v1026 = vand.u32 %v1025, 4294901760
  %v1027 = vsub.f32 %v1025, %v1026
  %v1028 = vand.u32 %v1027, 4294901760
  %1029 = vmatmul.mubr.f32.gmra.mrb[0].mxu0 %v1028
  %v1030 = vpop.f32.mrb[0].mxu0
  %v1031 = vadd.f32 %v131, %v1030
  %v1032 = vpop.f32.mrb[0].mxu0
  %1033 = vmatprep.mubr.f32.mxu0 0.0
  %v1034 = vand.u32 %v96, 4294901760
  %v1035 = vsub.f32 %v96, %v1034
  %v1036 = vand.u32 %v1035, 4294901760
  %v1037 = vsub.f32 %v1035, %v1036
  %v1038 = vand.u32 %v1037, 4294901760
  %1039 = vmatmul.mubr.f32.gmra.mrb[0].mxu0 %v1038
  %v1040 = vpop.f32.mrb[0].mxu0
  %v1041 = vadd.f32 %v131, %v1040
  %v1042 = vpop.f32.mrb[0].mxu0
  %1043 = vmatprep.mubr.f32.mxu0 0.0
  %v1044 = vand.u32 %v97, 4294901760
  %v1045 = vsub.f32 %v97, %v1044
  %v1046 = vand.u32 %v1045, 4294901760
  %v1047 = vsub.f32 %v1045, %v1046
  %v1048 = vand.u32 %v1047, 4294901760
  %1049 = vmatmul.mubr.f32.gmra.mrb[0].mxu0 %v1048
  %v1050 = vpop.f32.mrb[0].mxu0
  %v1051 = vadd.f32 %v131, %v1050
  %v1052 = vpop.f32.mrb[0].mxu0
  %1053 = vmatprep.mubr.f32.mxu0 0.0
  %v1054 = vand.u32 %v98, 4294901760
  %v1055 = vsub.f32 %v98, %v1054
  %v1056 = vand.u32 %v1055, 4294901760
  %v1057 = vsub.f32 %v1055, %v1056
  %v1058 = vand.u32 %v1057, 4294901760
  %1059 = vmatmul.mubr.f32.gmra.mrb[0].mxu0 %v1058
  %v1060 = vpop.f32.mrb[0].mxu0
  %v1061 = vadd.f32 %v131, %v1060
  %v1062 = vpop.f32.mrb[0].mxu0
  %1063 = vmatprep.mubr.f32.mxu0 0.0
  %v1064 = vand.u32 %v99, 4294901760
  %v1065 = vsub.f32 %v99, %v1064
  %v1066 = vand.u32 %v1065, 4294901760
  %v1067 = vsub.f32 %v1065, %v1066
  %v1068 = vand.u32 %v1067, 4294901760
  %1069 = vmatmul.mubr.f32.gmra.mrb[0].mxu0 %v1068
  %v1070 = vpop.f32.mrb[0].mxu0
  %v1071 = vadd.f32 %v131, %v1070
  %v1072 = vpop.f32.mrb[0].mxu0
  %1073 = vmatprep.mubr.f32.mxu0 0.0
  %v1074 = vand.u32 %v100, 4294901760
  %v1075 = vsub.f32 %v100, %v1074
  %v1076 = vand.u32 %v1075, 4294901760
  %v1077 = vsub.f32 %v1075, %v1076
  %v1078 = vand.u32 %v1077, 4294901760
  %1079 = vmatmul.mubr.f32.gmra.mrb[0].mxu0 %v1078
  %v1080 = vpop.f32.mrb[0].mxu0
  %v1081 = vadd.f32 %v131, %v1080
  %v1082 = vpop.f32.mrb[0].mxu0
  %1083 = vmatprep.mubr.f32.mxu0 0.0
  %v1084 = vand.u32 %v101, 4294901760
  %v1085 = vsub.f32 %v101, %v1084
  %v1086 = vand.u32 %v1085, 4294901760
  %v1087 = vsub.f32 %v1085, %v1086
  %v1088 = vand.u32 %v1087, 4294901760
  %1089 = vmatmul.mubr.f32.gmra.mrb[0].mxu0 %v1088
  %v1090 = vpop.f32.mrb[0].mxu0
  %v1091 = vadd.f32 %v131, %v1090
  %v1092 = vpop.f32.mrb[0].mxu0
  %1093 = vmatprep.mubr.f32.mxu0 0.0
  %v1094 = vand.u32 %v102, 4294901760
  %v1095 = vsub.f32 %v102, %v1094
  %v1096 = vand.u32 %v1095, 4294901760
  %v1097 = vsub.f32 %v1095, %v1096
  %v1098 = vand.u32 %v1097, 4294901760
  %1099 = vmatmul.mubr.f32.gmra.mrb[0].mxu0 %v1098
  %v1100 = vpop.f32.mrb[0].mxu0
  %v1101 = vadd.f32 %v131, %v1100
  %v1102 = vpop.f32.mrb[0].mxu0
  %1103 = vmatprep.mubr.f32.mxu0 0.0
  %v1104 = vand.u32 %v103, 4294901760
  %v1105 = vsub.f32 %v103, %v1104
  %v1106 = vand.u32 %v1105, 4294901760
  %v1107 = vsub.f32 %v1105, %v1106
  %v1108 = vand.u32 %v1107, 4294901760
  %1109 = vmatmul.mubr.f32.gmra.mrb[0].mxu0 %v1108
  %v1110 = vpop.f32.mrb[0].mxu0
  %v1111 = vadd.f32 %v131, %v1110
  %v1112 = vpop.f32.mrb[0].mxu0
  %1113 = vmatprep.mubr.f32.mxu0 0.0
  %v1114 = vand.u32 %v104, 4294901760
  %v1115 = vsub.f32 %v104, %v1114
  %v1116 = vand.u32 %v1115, 4294901760
  %v1117 = vsub.f32 %v1115, %v1116
  %v1118 = vand.u32 %v1117, 4294901760
  %1119 = vmatmul.mubr.f32.gmra.mrb[0].mxu0 %v1118
  %v1120 = vpop.f32.mrb[0].mxu0
  %v1121 = vadd.f32 %v131, %v1120
  %v1122 = vpop.f32.mrb[0].mxu0
  %1123 = vmatprep.mubr.f32.mxu0 0.0
  %v1124 = vand.u32 %v105, 4294901760
  %v1125 = vsub.f32 %v105, %v1124
  %v1126 = vand.u32 %v1125, 4294901760
  %v1127 = vsub.f32 %v1125, %v1126
  %v1128 = vand.u32 %v1127, 4294901760
  %1129 = vmatmul.mubr.f32.gmra.mrb[0].mxu0 %v1128
  %v1130 = vpop.f32.mrb[0].mxu0
  %v1131 = vadd.f32 %v131, %v1130
  %v1132 = vpop.f32.mrb[0].mxu0
  %1133 = vmatprep.mubr.f32.mxu0 0.0
  %v1134 = vand.u32 %v106, 4294901760
  %v1135 = vsub.f32 %v106, %v1134
  %v1136 = vand.u32 %v1135, 4294901760
  %v1137 = vsub.f32 %v1135, %v1136
  %v1138 = vand.u32 %v1137, 4294901760
  %1139 = vmatmul.mubr.f32.gmra.mrb[0].mxu0 %v1138
  %v1140 = vpop.f32.mrb[0].mxu0
  %v1141 = vadd.f32 %v131, %v1140
  %v1142 = vpop.f32.mrb[0].mxu0
  %1143 = vmatprep.mubr.f32.mxu0 0.0
  %v1144 = vand.u32 %v107, 4294901760
  %v1145 = vsub.f32 %v107, %v1144
  %v1146 = vand.u32 %v1145, 4294901760
  %v1147 = vsub.f32 %v1145, %v1146
  %v1148 = vand.u32 %v1147, 4294901760
  %1149 = vmatmul.mubr.f32.gmra.mrb[0].mxu0 %v1148
  %v1150 = vpop.f32.mrb[0].mxu0
  %v1151 = vadd.f32 %v131, %v1150
  %v1152 = vpop.f32.mrb[0].mxu0
  %1153 = vmatprep.mubr.f32.mxu0 0.0
  %v1154 = vand.u32 %v108, 4294901760
  %v1155 = vsub.f32 %v108, %v1154
  %v1156 = vand.u32 %v1155, 4294901760
  %v1157 = vsub.f32 %v1155, %v1156
  %v1158 = vand.u32 %v1157, 4294901760
  %1159 = vmatmul.mubr.f32.gmra.mrb[0].mxu0 %v1158
  %v1160 = vpop.f32.mrb[0].mxu0
  %v1161 = vadd.f32 %v131, %v1160
  %v1162 = vpop.f32.mrb[0].mxu0
  %1163 = vmatprep.mubr.f32.mxu0 0.0
  %v1164 = vand.u32 %v109, 4294901760
  %v1165 = vsub.f32 %v109, %v1164
  %v1166 = vand.u32 %v1165, 4294901760
  %v1167 = vsub.f32 %v1165, %v1166
  %v1168 = vand.u32 %v1167, 4294901760
  %1169 = vmatmul.mubr.f32.gmra.mrb[0].mxu0 %v1168
  %v1170 = vpop.f32.mrb[0].mxu0
  %v1171 = vadd.f32 %v131, %v1170
  %v1172 = vpop.f32.mrb[0].mxu0
  %1173 = vdwg.mxu0
  %1174 = vmatprep.subr.mxu0 0.0
  %v1175 = vand.u32 %v110, 4294901760
  %v1176 = vsub.f32 %v110, %v1175
  %v1177 = vand.u32 %v1176, 4294901760
  %v1178 = vsub.f32 %v1176, %v1177
  %v1179 = vand.u32 %v1178, 4294901760
  %1180 = vmatpush1.msra.mxu0 %v1179
  %1181 = vmatprep.subr.mxu0 0.0
  %v1182 = vand.u32 %v111, 4294901760
  %v1183 = vsub.f32 %v111, %v1182
  %v1184 = vand.u32 %v1183, 4294901760
  %v1185 = vsub.f32 %v1183, %v1184
  %v1186 = vand.u32 %v1185, 4294901760
  %1187 = vmatpush1.msra.mxu0 %v1186
  %1188 = vmatprep.subr.mxu0 0.0
  %v1189 = vand.u32 %v112, 4294901760
  %v1190 = vsub.f32 %v112, %v1189
  %v1191 = vand.u32 %v1190, 4294901760
  %v1192 = vsub.f32 %v1190, %v1191
  %v1193 = vand.u32 %v1192, 4294901760
  %1194 = vmatpush1.msra.mxu0 %v1193
  %1195 = vmatprep.subr.mxu0 0.0
  %v1196 = vand.u32 %v113, 4294901760
  %v1197 = vsub.f32 %v113, %v1196
  %v1198 = vand.u32 %v1197, 4294901760
  %v1199 = vsub.f32 %v1197, %v1198
  %v1200 = vand.u32 %v1199, 4294901760
  %1201 = vmatpush1.msra.mxu0 %v1200
  %1202 = vmatprep.subr.mxu0 0.0
  %v1203 = vand.u32 %v114, 4294901760
  %v1204 = vsub.f32 %v114, %v1203
  %v1205 = vand.u32 %v1204, 4294901760
  %v1206 = vsub.f32 %v1204, %v1205
  %v1207 = vand.u32 %v1206, 4294901760
  %1208 = vmatpush1.msra.mxu0 %v1207
  %1209 = vmatprep.subr.mxu0 0.0
  %v1210 = vand.u32 %v115, 4294901760
  %v1211 = vsub.f32 %v115, %v1210
  %v1212 = vand.u32 %v1211, 4294901760
  %v1213 = vsub.f32 %v1211, %v1212
  %v1214 = vand.u32 %v1213, 4294901760
  %1215 = vmatpush1.msra.mxu0 %v1214
  %1216 = vmatprep.subr.mxu0 0.0
  %v1217 = vand.u32 %v116, 4294901760
  %v1218 = vsub.f32 %v116, %v1217
  %v1219 = vand.u32 %v1218, 4294901760
  %v1220 = vsub.f32 %v1218, %v1219
  %v1221 = vand.u32 %v1220, 4294901760
  %1222 = vmatpush1.msra.mxu0 %v1221
  %1223 = vmatprep.subr.mxu0 0.0
  %v1224 = vand.u32 %v117, 4294901760
  %v1225 = vsub.f32 %v117, %v1224
  %v1226 = vand.u32 %v1225, 4294901760
  %v1227 = vsub.f32 %v1225, %v1226
  %v1228 = vand.u32 %v1227, 4294901760
  %1229 = vmatpush1.msra.mxu0 %v1228
  %1230 = vmatprep.subr.mxu0 0.0
  %v1231 = vand.u32 %v118, 4294901760
  %v1232 = vsub.f32 %v118, %v1231
  %v1233 = vand.u32 %v1232, 4294901760
  %v1234 = vsub.f32 %v1232, %v1233
  %v1235 = vand.u32 %v1234, 4294901760
  %1236 = vmatpush1.msra.mxu0 %v1235
  %1237 = vmatprep.subr.mxu0 0.0
  %v1238 = vand.u32 %v119, 4294901760
  %v1239 = vsub.f32 %v119, %v1238
  %v1240 = vand.u32 %v1239, 4294901760
  %v1241 = vsub.f32 %v1239, %v1240
  %v1242 = vand.u32 %v1241, 4294901760
  %1243 = vmatpush1.msra.mxu0 %v1242
  %1244 = vmatprep.subr.mxu0 0.0
  %v1245 = vand.u32 %v120, 4294901760
  %v1246 = vsub.f32 %v120, %v1245
  %v1247 = vand.u32 %v1246, 4294901760
  %v1248 = vsub.f32 %v1246, %v1247
  %v1249 = vand.u32 %v1248, 4294901760
  %1250 = vmatpush1.msra.mxu0 %v1249
  %1251 = vmatprep.subr.mxu0 0.0
  %v1252 = vand.u32 %v121, 4294901760
  %v1253 = vsub.f32 %v121, %v1252
  %v1254 = vand.u32 %v1253, 4294901760
  %v1255 = vsub.f32 %v1253, %v1254
  %v1256 = vand.u32 %v1255, 4294901760
  %1257 = vmatpush1.msra.mxu0 %v1256
  %1258 = vmatprep.subr.mxu0 0.0
  %v1259 = vand.u32 %v122, 4294901760
  %v1260 = vsub.f32 %v122, %v1259
  %v1261 = vand.u32 %v1260, 4294901760
  %v1262 = vsub.f32 %v1260, %v1261
  %v1263 = vand.u32 %v1262, 4294901760
  %1264 = vmatpush1.msra.mxu0 %v1263
  %1265 = vmatprep.subr.mxu0 0.0
  %v1266 = vand.u32 %v123, 4294901760
  %v1267 = vsub.f32 %v123, %v1266
  %v1268 = vand.u32 %v1267, 4294901760
  %v1269 = vsub.f32 %v1267, %v1268
  %v1270 = vand.u32 %v1269, 4294901760
  %1271 = vmatpush1.msra.mxu0 %v1270
  %1272 = vmatprep.subr.mxu0 0.0
  %v1273 = vand.u32 %v124, 4294901760
  %v1274 = vsub.f32 %v124, %v1273
  %v1275 = vand.u32 %v1274, 4294901760
  %v1276 = vsub.f32 %v1274, %v1275
  %v1277 = vand.u32 %v1276, 4294901760
  %1278 = vmatpush1.msra.mxu0 %v1277
  %1279 = vmatprep.subr.mxu0 0.0
  %v1280 = vand.u32 %v125, 4294901760
  %v1281 = vsub.f32 %v125, %v1280
  %v1282 = vand.u32 %v1281, 4294901760
  %v1283 = vsub.f32 %v1281, %v1282
  %v1284 = vand.u32 %v1283, 4294901760
  %1285 = vmatpush1.msra.mxu0 %v1284
  %1286 = vmatprep.subr.mxu0 0.0
  %1287 = vmatpush1.msra.mxu0 0.0
  %1288 = vmatprep.subr.mxu0 0.0
  %1289 = vmatpush1.msra.mxu0 0.0
  %1290 = vmatprep.subr.mxu0 0.0
  %1291 = vmatpush1.msra.mxu0 0.0
  %1292 = vmatprep.subr.mxu0 0.0
  %1293 = vmatpush1.msra.mxu0 0.0
  %1294 = vmatprep.subr.mxu0 0.0
  %1295 = vmatpush1.msra.mxu0 0.0
  %1296 = vmatprep.subr.mxu0 0.0
  %1297 = vmatpush1.msra.mxu0 0.0
  %1298 = vmatprep.subr.mxu0 0.0
  %1299 = vmatpush1.msra.mxu0 0.0
  %1300 = vmatprep.subr.mxu0 0.0
  %1301 = vmatpush1.msra.mxu0 0.0
  %1302 = vmatprep.subr.mxu0 0.0
  %1303 = vmatpush1.msra.mxu0 0.0
  %1304 = vmatprep.subr.mxu0 0.0
  %1305 = vmatpush1.msra.mxu0 0.0
  %1306 = vmatprep.subr.mxu0 0.0
  %1307 = vmatpush1.msra.mxu0 0.0
  %1308 = vmatprep.subr.mxu0 0.0
  %1309 = vmatpush1.msra.mxu0 0.0
  %1310 = vmatprep.subr.mxu0 0.0
  %1311 = vmatpush1.msra.mxu0 0.0
  %1312 = vmatprep.subr.mxu0 0.0
  %1313 = vmatpush1.msra.mxu0 0.0
  %1314 = vmatprep.subr.mxu0 0.0
  %1315 = vmatpush1.msra.mxu0 0.0
  %1316 = vmatprep.subr.mxu0 0.0
  %1317 = vmatpush1.msra.mxu0 0.0
  %1318 = vmatprep.mubr.f32.mxu0 0.0
  %v1319 = vand.u32 %v14, 4294901760
  %1320 = vmatmul.mubr.f32.gmra.mrb[0].mxu0 %v1319
  %v1321 = vpop.f32.mrb[0].mxu0
  %v1322 = vadd.f32 %v221, %v1321
  %v1323 = vpop.f32.mrb[0].mxu0
  %1324 = vmatprep.mubr.f32.mxu0 0.0
  %v1325 = vand.u32 %v15, 4294901760
  %1326 = vmatmul.mubr.f32.gmra.mrb[0].mxu0 %v1325
  %v1327 = vpop.f32.mrb[0].mxu0
  %v1328 = vadd.f32 %v231, %v1327
  %v1329 = vpop.f32.mrb[0].mxu0
  %1330 = vmatprep.mubr.f32.mxu0 0.0
  %v1331 = vand.u32 %v16, 4294901760
  %1332 = vmatmul.mubr.f32.gmra.mrb[0].mxu0 %v1331
  %v1333 = vpop.f32.mrb[0].mxu0
  %v1334 = vadd.f32 %v241, %v1333
  %v1335 = vpop.f32.mrb[0].mxu0
  %1336 = vmatprep.mubr.f32.mxu0 0.0
  %v1337 = vand.u32 %v17, 4294901760
  %1338 = vmatmul.mubr.f32.gmra.mrb[0].mxu0 %v1337
  %v1339 = vpop.f32.mrb[0].mxu0
  %v1340 = vadd.f32 %v251, %v1339
  %v1341 = vpop.f32.mrb[0].mxu0
  %1342 = vmatprep.mubr.f32.mxu0 0.0
  %v1343 = vand.u32 %v18, 4294901760
  %1344 = vmatmul.mubr.f32.gmra.mrb[0].mxu0 %v1343
  %v1345 = vpop.f32.mrb[0].mxu0
  %v1346 = vadd.f32 %v261, %v1345
  %v1347 = vpop.f32.mrb[0].mxu0
  %1348 = vmatprep.mubr.f32.mxu0 0.0
  %v1349 = vand.u32 %v19, 4294901760
  %1350 = vmatmul.mubr.f32.gmra.mrb[0].mxu0 %v1349
  %v1351 = vpop.f32.mrb[0].mxu0
  %v1352 = vadd.f32 %v271, %v1351
  %v1353 = vpop.f32.mrb[0].mxu0
  %1354 = vmatprep.mubr.f32.mxu0 0.0
  %v1355 = vand.u32 %v20, 4294901760
  %1356 = vmatmul.mubr.f32.gmra.mrb[0].mxu0 %v1355
  %v1357 = vpop.f32.mrb[0].mxu0
  %v1358 = vadd.f32 %v281, %v1357
  %v1359 = vpop.f32.mrb[0].mxu0
  %1360 = vmatprep.mubr.f32.mxu0 0.0
  %v1361 = vand.u32 %v21, 4294901760
  %1362 = vmatmul.mubr.f32.gmra.mrb[0].mxu0 %v1361
  %v1363 = vpop.f32.mrb[0].mxu0
  %v1364 = vadd.f32 %v291, %v1363
  %v1365 = vpop.f32.mrb[0].mxu0
  %1366 = vmatprep.mubr.f32.mxu0 0.0
  %v1367 = vand.u32 %v22, 4294901760
  %1368 = vmatmul.mubr.f32.gmra.mrb[0].mxu0 %v1367
  %v1369 = vpop.f32.mrb[0].mxu0
  %v1370 = vadd.f32 %v301, %v1369
  %v1371 = vpop.f32.mrb[0].mxu0
  %1372 = vmatprep.mubr.f32.mxu0 0.0
  %v1373 = vand.u32 %v23, 4294901760
  %1374 = vmatmul.mubr.f32.gmra.mrb[0].mxu0 %v1373
  %v1375 = vpop.f32.mrb[0].mxu0
  %v1376 = vadd.f32 %v311, %v1375
  %v1377 = vpop.f32.mrb[0].mxu0
  %1378 = vmatprep.mubr.f32.mxu0 0.0
  %v1379 = vand.u32 %v24, 4294901760
  %1380 = vmatmul.mubr.f32.gmra.mrb[0].mxu0 %v1379
  %v1381 = vpop.f32.mrb[0].mxu0
  %v1382 = vadd.f32 %v321, %v1381
  %v1383 = vpop.f32.mrb[0].mxu0
  %1384 = vmatprep.mubr.f32.mxu0 0.0
  %v1385 = vand.u32 %v25, 4294901760
  %1386 = vmatmul.mubr.f32.gmra.mrb[0].mxu0 %v1385
  %v1387 = vpop.f32.mrb[0].mxu0
  %v1388 = vadd.f32 %v331, %v1387
  %v1389 = vpop.f32.mrb[0].mxu0
  %1390 = vmatprep.mubr.f32.mxu0 0.0
  %v1391 = vand.u32 %v26, 4294901760
  %1392 = vmatmul.mubr.f32.gmra.mrb[0].mxu0 %v1391
  %v1393 = vpop.f32.mrb[0].mxu0
  %v1394 = vadd.f32 %v341, %v1393
  %v1395 = vpop.f32.mrb[0].mxu0
  %1396 = vmatprep.mubr.f32.mxu0 0.0
  %v1397 = vand.u32 %v27, 4294901760
  %1398 = vmatmul.mubr.f32.gmra.mrb[0].mxu0 %v1397
  %v1399 = vpop.f32.mrb[0].mxu0
  %v1400 = vadd.f32 %v351, %v1399
  %v1401 = vpop.f32.mrb[0].mxu0
  %1402 = vmatprep.mubr.f32.mxu0 0.0
  %v1403 = vand.u32 %v28, 4294901760
  %1404 = vmatmul.mubr.f32.gmra.mrb[0].mxu0 %v1403
  %v1405 = vpop.f32.mrb[0].mxu0
  %v1406 = vadd.f32 %v361, %v1405
  %v1407 = vpop.f32.mrb[0].mxu0
  %1408 = vmatprep.mubr.f32.mxu0 0.0
  %v1409 = vand.u32 %v29, 4294901760
  %1410 = vmatmul.mubr.f32.gmra.mrb[0].mxu0 %v1409
  %v1411 = vpop.f32.mrb[0].mxu0
  %v1412 = vadd.f32 %v371, %v1411
  %v1413 = vpop.f32.mrb[0].mxu0
  %1414 = vmatprep.mubr.f32.mxu0 0.0
  %v1415 = vand.u32 %v30, 4294901760
  %1416 = vmatmul.mubr.f32.gmra.mrb[0].mxu0 %v1415
  %v1417 = vpop.f32.mrb[0].mxu0
  %v1418 = vadd.f32 %v381, %v1417
  %v1419 = vpop.f32.mrb[0].mxu0
  %1420 = vmatprep.mubr.f32.mxu0 0.0
  %v1421 = vand.u32 %v31, 4294901760
  %1422 = vmatmul.mubr.f32.gmra.mrb[0].mxu0 %v1421
  %v1423 = vpop.f32.mrb[0].mxu0
  %v1424 = vadd.f32 %v391, %v1423
  %v1425 = vpop.f32.mrb[0].mxu0
  %1426 = vmatprep.mubr.f32.mxu0 0.0
  %v1427 = vand.u32 %v32, 4294901760
  %1428 = vmatmul.mubr.f32.gmra.mrb[0].mxu0 %v1427
  %v1429 = vpop.f32.mrb[0].mxu0
  %v1430 = vadd.f32 %v401, %v1429
  %v1431 = vpop.f32.mrb[0].mxu0
  %1432 = vmatprep.mubr.f32.mxu0 0.0
  %v1433 = vand.u32 %v33, 4294901760
  %1434 = vmatmul.mubr.f32.gmra.mrb[0].mxu0 %v1433
  %v1435 = vpop.f32.mrb[0].mxu0
  %v1436 = vadd.f32 %v411, %v1435
  %v1437 = vpop.f32.mrb[0].mxu0
  %1438 = vmatprep.mubr.f32.mxu0 0.0
  %v1439 = vand.u32 %v34, 4294901760
  %1440 = vmatmul.mubr.f32.gmra.mrb[0].mxu0 %v1439
  %v1441 = vpop.f32.mrb[0].mxu0
  %v1442 = vadd.f32 %v421, %v1441
  %v1443 = vpop.f32.mrb[0].mxu0
  %1444 = vmatprep.mubr.f32.mxu0 0.0
  %v1445 = vand.u32 %v35, 4294901760
  %1446 = vmatmul.mubr.f32.gmra.mrb[0].mxu0 %v1445
  %v1447 = vpop.f32.mrb[0].mxu0
  %v1448 = vadd.f32 %v431, %v1447
  %v1449 = vpop.f32.mrb[0].mxu0
  %1450 = vmatprep.mubr.f32.mxu0 0.0
  %v1451 = vand.u32 %v36, 4294901760
  %1452 = vmatmul.mubr.f32.gmra.mrb[0].mxu0 %v1451
  %v1453 = vpop.f32.mrb[0].mxu0
  %v1454 = vadd.f32 %v441, %v1453
  %v1455 = vpop.f32.mrb[0].mxu0
  %1456 = vmatprep.mubr.f32.mxu0 0.0
  %v1457 = vand.u32 %v37, 4294901760
  %1458 = vmatmul.mubr.f32.gmra.mrb[0].mxu0 %v1457
  %v1459 = vpop.f32.mrb[0].mxu0
  %v1460 = vadd.f32 %v451, %v1459
  %v1461 = vpop.f32.mrb[0].mxu0
  %1462 = vmatprep.mubr.f32.mxu0 0.0
  %v1463 = vand.u32 %v38, 4294901760
  %1464 = vmatmul.mubr.f32.gmra.mrb[0].mxu0 %v1463
  %v1465 = vpop.f32.mrb[0].mxu0
  %v1466 = vadd.f32 %v461, %v1465
  %v1467 = vpop.f32.mrb[0].mxu0
  %1468 = vmatprep.mubr.f32.mxu0 0.0
  %v1469 = vand.u32 %v39, 4294901760
  %1470 = vmatmul.mubr.f32.gmra.mrb[0].mxu0 %v1469
  %v1471 = vpop.f32.mrb[0].mxu0
  %v1472 = vadd.f32 %v471, %v1471
  %v1473 = vpop.f32.mrb[0].mxu0
  %1474 = vmatprep.mubr.f32.mxu0 0.0
  %v1475 = vand.u32 %v40, 4294901760
  %1476 = vmatmul.mubr.f32.gmra.mrb[0].mxu0 %v1475
  %v1477 = vpop.f32.mrb[0].mxu0
  %v1478 = vadd.f32 %v481, %v1477
  %v1479 = vpop.f32.mrb[0].mxu0
  %1480 = vmatprep.mubr.f32.mxu0 0.0
  %v1481 = vand.u32 %v41, 4294901760
  %1482 = vmatmul.mubr.f32.gmra.mrb[0].mxu0 %v1481
  %v1483 = vpop.f32.mrb[0].mxu0
  %v1484 = vadd.f32 %v491, %v1483
  %v1485 = vpop.f32.mrb[0].mxu0
  %1486 = vmatprep.mubr.f32.mxu0 0.0
  %v1487 = vand.u32 %v42, 4294901760
  %1488 = vmatmul.mubr.f32.gmra.mrb[0].mxu0 %v1487
  %v1489 = vpop.f32.mrb[0].mxu0
  %v1490 = vadd.f32 %v501, %v1489
  %v1491 = vpop.f32.mrb[0].mxu0
  %1492 = vmatprep.mubr.f32.mxu0 0.0
  %v1493 = vand.u32 %v43, 4294901760
  %1494 = vmatmul.mubr.f32.gmra.mrb[0].mxu0 %v1493
  %v1495 = vpop.f32.mrb[0].mxu0
  %v1496 = vadd.f32 %v511, %v1495
  %v1497 = vpop.f32.mrb[0].mxu0
  %1498 = vmatprep.mubr.f32.mxu0 0.0
  %v1499 = vand.u32 %v44, 4294901760
  %1500 = vmatmul.mubr.f32.gmra.mrb[0].mxu0 %v1499
  %v1501 = vpop.f32.mrb[0].mxu0
  %v1502 = vadd.f32 %v521, %v1501
  %v1503 = vpop.f32.mrb[0].mxu0
  %1504 = vmatprep.mubr.f32.mxu0 0.0
  %v1505 = vand.u32 %v45, 4294901760
  %1506 = vmatmul.mubr.f32.gmra.mrb[0].mxu0 %v1505
  %v1507 = vpop.f32.mrb[0].mxu0
  %v1508 = vadd.f32 %v531, %v1507
  %v1509 = vpop.f32.mrb[0].mxu0
  %1510 = vmatprep.mubr.f32.mxu0 0.0
  %v1511 = vand.u32 %v46, 4294901760
  %1512 = vmatmul.mubr.f32.gmra.mrb[0].mxu0 %v1511
  %v1513 = vpop.f32.mrb[0].mxu0
  %v1514 = vadd.f32 %v541, %v1513
  %v1515 = vpop.f32.mrb[0].mxu0
  %1516 = vmatprep.mubr.f32.mxu0 0.0
  %v1517 = vand.u32 %v47, 4294901760
  %1518 = vmatmul.mubr.f32.gmra.mrb[0].mxu0 %v1517
  %v1519 = vpop.f32.mrb[0].mxu0
  %v1520 = vadd.f32 %v551, %v1519
  %v1521 = vpop.f32.mrb[0].mxu0
  %1522 = vmatprep.mubr.f32.mxu0 0.0
  %v1523 = vand.u32 %v48, 4294901760
  %1524 = vmatmul.mubr.f32.gmra.mrb[0].mxu0 %v1523
  %v1525 = vpop.f32.mrb[0].mxu0
  %v1526 = vadd.f32 %v561, %v1525
  %v1527 = vpop.f32.mrb[0].mxu0
  %1528 = vmatprep.mubr.f32.mxu0 0.0
  %v1529 = vand.u32 %v49, 4294901760
  %1530 = vmatmul.mubr.f32.gmra.mrb[0].mxu0 %v1529
  %v1531 = vpop.f32.mrb[0].mxu0
  %v1532 = vadd.f32 %v571, %v1531
  %v1533 = vpop.f32.mrb[0].mxu0
  %1534 = vmatprep.mubr.f32.mxu0 0.0
  %v1535 = vand.u32 %v50, 4294901760
  %1536 = vmatmul.mubr.f32.gmra.mrb[0].mxu0 %v1535
  %v1537 = vpop.f32.mrb[0].mxu0
  %v1538 = vadd.f32 %v581, %v1537
  %v1539 = vpop.f32.mrb[0].mxu0
  %1540 = vmatprep.mubr.f32.mxu0 0.0
  %v1541 = vand.u32 %v51, 4294901760
  %1542 = vmatmul.mubr.f32.gmra.mrb[0].mxu0 %v1541
  %v1543 = vpop.f32.mrb[0].mxu0
  %v1544 = vadd.f32 %v591, %v1543
  %v1545 = vpop.f32.mrb[0].mxu0
  %1546 = vmatprep.mubr.f32.mxu0 0.0
  %v1547 = vand.u32 %v52, 4294901760
  %1548 = vmatmul.mubr.f32.gmra.mrb[0].mxu0 %v1547
  %v1549 = vpop.f32.mrb[0].mxu0
  %v1550 = vadd.f32 %v601, %v1549
  %v1551 = vpop.f32.mrb[0].mxu0
  %1552 = vmatprep.mubr.f32.mxu0 0.0
  %v1553 = vand.u32 %v53, 4294901760
  %1554 = vmatmul.mubr.f32.gmra.mrb[0].mxu0 %v1553
  %v1555 = vpop.f32.mrb[0].mxu0
  %v1556 = vadd.f32 %v611, %v1555
  %v1557 = vpop.f32.mrb[0].mxu0
  %1558 = vmatprep.mubr.f32.mxu0 0.0
  %v1559 = vand.u32 %v54, 4294901760
  %1560 = vmatmul.mubr.f32.gmra.mrb[0].mxu0 %v1559
  %v1561 = vpop.f32.mrb[0].mxu0
  %v1562 = vadd.f32 %v621, %v1561
  %v1563 = vpop.f32.mrb[0].mxu0
  %1564 = vmatprep.mubr.f32.mxu0 0.0
  %v1565 = vand.u32 %v55, 4294901760
  %1566 = vmatmul.mubr.f32.gmra.mrb[0].mxu0 %v1565
  %v1567 = vpop.f32.mrb[0].mxu0
  %v1568 = vadd.f32 %v631, %v1567
  %v1569 = vpop.f32.mrb[0].mxu0
  %1570 = vmatprep.mubr.f32.mxu0 0.0
  %v1571 = vand.u32 %v56, 4294901760
  %1572 = vmatmul.mubr.f32.gmra.mrb[0].mxu0 %v1571
  %v1573 = vpop.f32.mrb[0].mxu0
  %v1574 = vadd.f32 %v641, %v1573
  %v1575 = vpop.f32.mrb[0].mxu0
  %1576 = vmatprep.mubr.f32.mxu0 0.0
  %v1577 = vand.u32 %v57, 4294901760
  %1578 = vmatmul.mubr.f32.gmra.mrb[0].mxu0 %v1577
  %v1579 = vpop.f32.mrb[0].mxu0
  %v1580 = vadd.f32 %v651, %v1579
  %v1581 = vpop.f32.mrb[0].mxu0
  %1582 = vmatprep.mubr.f32.mxu0 0.0
  %v1583 = vand.u32 %v58, 4294901760
  %1584 = vmatmul.mubr.f32.gmra.mrb[0].mxu0 %v1583
  %v1585 = vpop.f32.mrb[0].mxu0
  %v1586 = vadd.f32 %v661, %v1585
  %v1587 = vpop.f32.mrb[0].mxu0
  %1588 = vmatprep.mubr.f32.mxu0 0.0
  %v1589 = vand.u32 %v59, 4294901760
  %1590 = vmatmul.mubr.f32.gmra.mrb[0].mxu0 %v1589
  %v1591 = vpop.f32.mrb[0].mxu0
  %v1592 = vadd.f32 %v671, %v1591
  %v1593 = vpop.f32.mrb[0].mxu0
  %1594 = vmatprep.mubr.f32.mxu0 0.0
  %v1595 = vand.u32 %v60, 4294901760
  %1596 = vmatmul.mubr.f32.gmra.mrb[0].mxu0 %v1595
  %v1597 = vpop.f32.mrb[0].mxu0
  %v1598 = vadd.f32 %v681, %v1597
  %v1599 = vpop.f32.mrb[0].mxu0
  %1600 = vmatprep.mubr.f32.mxu0 0.0
  %v1601 = vand.u32 %v61, 4294901760
  %1602 = vmatmul.mubr.f32.gmra.mrb[0].mxu0 %v1601
  %v1603 = vpop.f32.mrb[0].mxu0
  %v1604 = vadd.f32 %v691, %v1603
  %v1605 = vpop.f32.mrb[0].mxu0
  %1606 = vmatprep.mubr.f32.mxu0 0.0
  %v1607 = vand.u32 %v62, 4294901760
  %1608 = vmatmul.mubr.f32.gmra.mrb[0].mxu0 %v1607
  %v1609 = vpop.f32.mrb[0].mxu0
  %v1610 = vadd.f32 %v701, %v1609
  %v1611 = vpop.f32.mrb[0].mxu0
  %1612 = vmatprep.mubr.f32.mxu0 0.0
  %v1613 = vand.u32 %v63, 4294901760
  %1614 = vmatmul.mubr.f32.gmra.mrb[0].mxu0 %v1613
  %v1615 = vpop.f32.mrb[0].mxu0
  %v1616 = vadd.f32 %v711, %v1615
  %v1617 = vpop.f32.mrb[0].mxu0
  %1618 = vmatprep.mubr.f32.mxu0 0.0
  %v1619 = vand.u32 %v64, 4294901760
  %1620 = vmatmul.mubr.f32.gmra.mrb[0].mxu0 %v1619
  %v1621 = vpop.f32.mrb[0].mxu0
  %v1622 = vadd.f32 %v721, %v1621
  %v1623 = vpop.f32.mrb[0].mxu0
  %1624 = vmatprep.mubr.f32.mxu0 0.0
  %v1625 = vand.u32 %v65, 4294901760
  %1626 = vmatmul.mubr.f32.gmra.mrb[0].mxu0 %v1625
  %v1627 = vpop.f32.mrb[0].mxu0
  %v1628 = vadd.f32 %v731, %v1627
  %v1629 = vpop.f32.mrb[0].mxu0
  %1630 = vmatprep.mubr.f32.mxu0 0.0
  %v1631 = vand.u32 %v66, 4294901760
  %1632 = vmatmul.mubr.f32.gmra.mrb[0].mxu0 %v1631
  %v1633 = vpop.f32.mrb[0].mxu0
  %v1634 = vadd.f32 %v741, %v1633
  %v1635 = vpop.f32.mrb[0].mxu0
  %1636 = vmatprep.mubr.f32.mxu0 0.0
  %v1637 = vand.u32 %v67, 4294901760
  %1638 = vmatmul.mubr.f32.gmra.mrb[0].mxu0 %v1637
  %v1639 = vpop.f32.mrb[0].mxu0
  %v1640 = vadd.f32 %v751, %v1639
  %v1641 = vpop.f32.mrb[0].mxu0
  %1642 = vmatprep.mubr.f32.mxu0 0.0
  %v1643 = vand.u32 %v68, 4294901760
  %1644 = vmatmul.mubr.f32.gmra.mrb[0].mxu0 %v1643
  %v1645 = vpop.f32.mrb[0].mxu0
  %v1646 = vadd.f32 %v761, %v1645
  %v1647 = vpop.f32.mrb[0].mxu0
  %1648 = vmatprep.mubr.f32.mxu0 0.0
  %v1649 = vand.u32 %v69, 4294901760
  %1650 = vmatmul.mubr.f32.gmra.mrb[0].mxu0 %v1649
  %v1651 = vpop.f32.mrb[0].mxu0
  %v1652 = vadd.f32 %v771, %v1651
  %v1653 = vpop.f32.mrb[0].mxu0
  %1654 = vmatprep.mubr.f32.mxu0 0.0
  %v1655 = vand.u32 %v70, 4294901760
  %1656 = vmatmul.mubr.f32.gmra.mrb[0].mxu0 %v1655
  %v1657 = vpop.f32.mrb[0].mxu0
  %v1658 = vadd.f32 %v781, %v1657
  %v1659 = vpop.f32.mrb[0].mxu0
  %1660 = vmatprep.mubr.f32.mxu0 0.0
  %v1661 = vand.u32 %v71, 4294901760
  %1662 = vmatmul.mubr.f32.gmra.mrb[0].mxu0 %v1661
  %v1663 = vpop.f32.mrb[0].mxu0
  %v1664 = vadd.f32 %v791, %v1663
  %v1665 = vpop.f32.mrb[0].mxu0
  %1666 = vmatprep.mubr.f32.mxu0 0.0
  %v1667 = vand.u32 %v72, 4294901760
  %1668 = vmatmul.mubr.f32.gmra.mrb[0].mxu0 %v1667
  %v1669 = vpop.f32.mrb[0].mxu0
  %v1670 = vadd.f32 %v801, %v1669
  %v1671 = vpop.f32.mrb[0].mxu0
  %1672 = vmatprep.mubr.f32.mxu0 0.0
  %v1673 = vand.u32 %v73, 4294901760
  %1674 = vmatmul.mubr.f32.gmra.mrb[0].mxu0 %v1673
  %v1675 = vpop.f32.mrb[0].mxu0
  %v1676 = vadd.f32 %v811, %v1675
  %v1677 = vpop.f32.mrb[0].mxu0
  %1678 = vmatprep.mubr.f32.mxu0 0.0
  %v1679 = vand.u32 %v74, 4294901760
  %1680 = vmatmul.mubr.f32.gmra.mrb[0].mxu0 %v1679
  %v1681 = vpop.f32.mrb[0].mxu0
  %v1682 = vadd.f32 %v821, %v1681
  %v1683 = vpop.f32.mrb[0].mxu0
  %1684 = vmatprep.mubr.f32.mxu0 0.0
  %v1685 = vand.u32 %v75, 4294901760
  %1686 = vmatmul.mubr.f32.gmra.mrb[0].mxu0 %v1685
  %v1687 = vpop.f32.mrb[0].mxu0
  %v1688 = vadd.f32 %v831, %v1687
  %v1689 = vpop.f32.mrb[0].mxu0
  %1690 = vmatprep.mubr.f32.mxu0 0.0
  %v1691 = vand.u32 %v76, 4294901760
  %1692 = vmatmul.mubr.f32.gmra.mrb[0].mxu0 %v1691
  %v1693 = vpop.f32.mrb[0].mxu0
  %v1694 = vadd.f32 %v841, %v1693
  %v1695 = vpop.f32.mrb[0].mxu0
  %1696 = vmatprep.mubr.f32.mxu0 0.0
  %v1697 = vand.u32 %v77, 4294901760
  %1698 = vmatmul.mubr.f32.gmra.mrb[0].mxu0 %v1697
  %v1699 = vpop.f32.mrb[0].mxu0
  %v1700 = vadd.f32 %v851, %v1699
  %v1701 = vpop.f32.mrb[0].mxu0
  %1702 = vmatprep.mubr.f32.mxu0 0.0
  %v1703 = vand.u32 %v78, 4294901760
  %1704 = vmatmul.mubr.f32.gmra.mrb[0].mxu0 %v1703
  %v1705 = vpop.f32.mrb[0].mxu0
  %v1706 = vadd.f32 %v861, %v1705
  %v1707 = vpop.f32.mrb[0].mxu0
  %1708 = vmatprep.mubr.f32.mxu0 0.0
  %v1709 = vand.u32 %v79, 4294901760
  %1710 = vmatmul.mubr.f32.gmra.mrb[0].mxu0 %v1709
  %v1711 = vpop.f32.mrb[0].mxu0
  %v1712 = vadd.f32 %v871, %v1711
  %v1713 = vpop.f32.mrb[0].mxu0
  %1714 = vmatprep.mubr.f32.mxu0 0.0
  %v1715 = vand.u32 %v80, 4294901760
  %1716 = vmatmul.mubr.f32.gmra.mrb[0].mxu0 %v1715
  %v1717 = vpop.f32.mrb[0].mxu0
  %v1718 = vadd.f32 %v881, %v1717
  %v1719 = vpop.f32.mrb[0].mxu0
  %1720 = vmatprep.mubr.f32.mxu0 0.0
  %v1721 = vand.u32 %v81, 4294901760
  %1722 = vmatmul.mubr.f32.gmra.mrb[0].mxu0 %v1721
  %v1723 = vpop.f32.mrb[0].mxu0
  %v1724 = vadd.f32 %v891, %v1723
  %v1725 = vpop.f32.mrb[0].mxu0
  %1726 = vmatprep.mubr.f32.mxu0 0.0
  %v1727 = vand.u32 %v82, 4294901760
  %1728 = vmatmul.mubr.f32.gmra.mrb[0].mxu0 %v1727
  %v1729 = vpop.f32.mrb[0].mxu0
  %v1730 = vadd.f32 %v901, %v1729
  %v1731 = vpop.f32.mrb[0].mxu0
  %1732 = vmatprep.mubr.f32.mxu0 0.0
  %v1733 = vand.u32 %v83, 4294901760
  %1734 = vmatmul.mubr.f32.gmra.mrb[0].mxu0 %v1733
  %v1735 = vpop.f32.mrb[0].mxu0
  %v1736 = vadd.f32 %v911, %v1735
  %v1737 = vpop.f32.mrb[0].mxu0
  %1738 = vmatprep.mubr.f32.mxu0 0.0
  %v1739 = vand.u32 %v84, 4294901760
  %1740 = vmatmul.mubr.f32.gmra.mrb[0].mxu0 %v1739
  %v1741 = vpop.f32.mrb[0].mxu0
  %v1742 = vadd.f32 %v921, %v1741
  %v1743 = vpop.f32.mrb[0].mxu0
  %1744 = vmatprep.mubr.f32.mxu0 0.0
  %v1745 = vand.u32 %v85, 4294901760
  %1746 = vmatmul.mubr.f32.gmra.mrb[0].mxu0 %v1745
  %v1747 = vpop.f32.mrb[0].mxu0
  %v1748 = vadd.f32 %v931, %v1747
  %v1749 = vpop.f32.mrb[0].mxu0
  %1750 = vmatprep.mubr.f32.mxu0 0.0
  %v1751 = vand.u32 %v86, 4294901760
  %1752 = vmatmul.mubr.f32.gmra.mrb[0].mxu0 %v1751
  %v1753 = vpop.f32.mrb[0].mxu0
  %v1754 = vadd.f32 %v941, %v1753
  %v1755 = vpop.f32.mrb[0].mxu0
  %1756 = vmatprep.mubr.f32.mxu0 0.0
  %v1757 = vand.u32 %v87, 4294901760
  %1758 = vmatmul.mubr.f32.gmra.mrb[0].mxu0 %v1757
  %v1759 = vpop.f32.mrb[0].mxu0
  %v1760 = vadd.f32 %v951, %v1759
  %v1761 = vpop.f32.mrb[0].mxu0
  %1762 = vmatprep.mubr.f32.mxu0 0.0
  %v1763 = vand.u32 %v88, 4294901760
  %1764 = vmatmul.mubr.f32.gmra.mrb[0].mxu0 %v1763
  %v1765 = vpop.f32.mrb[0].mxu0
  %v1766 = vadd.f32 %v961, %v1765
  %v1767 = vpop.f32.mrb[0].mxu0
  %1768 = vmatprep.mubr.f32.mxu0 0.0
  %v1769 = vand.u32 %v89, 4294901760
  %1770 = vmatmul.mubr.f32.gmra.mrb[0].mxu0 %v1769
  %v1771 = vpop.f32.mrb[0].mxu0
  %v1772 = vadd.f32 %v971, %v1771
  %v1773 = vpop.f32.mrb[0].mxu0
  %1774 = vmatprep.mubr.f32.mxu0 0.0
  %v1775 = vand.u32 %v90, 4294901760
  %1776 = vmatmul.mubr.f32.gmra.mrb[0].mxu0 %v1775
  %v1777 = vpop.f32.mrb[0].mxu0
  %v1778 = vadd.f32 %v981, %v1777
  %v1779 = vpop.f32.mrb[0].mxu0
  %1780 = vmatprep.mubr.f32.mxu0 0.0
  %v1781 = vand.u32 %v91, 4294901760
  %1782 = vmatmul.mubr.f32.gmra.mrb[0].mxu0 %v1781
  %v1783 = vpop.f32.mrb[0].mxu0
  %v1784 = vadd.f32 %v991, %v1783
  %v1785 = vpop.f32.mrb[0].mxu0
  %1786 = vmatprep.mubr.f32.mxu0 0.0
  %v1787 = vand.u32 %v92, 4294901760
  %1788 = vmatmul.mubr.f32.gmra.mrb[0].mxu0 %v1787
  %v1789 = vpop.f32.mrb[0].mxu0
  %v1790 = vadd.f32 %v1001, %v1789
  %v1791 = vpop.f32.mrb[0].mxu0
  %1792 = vmatprep.mubr.f32.mxu0 0.0
  %v1793 = vand.u32 %v93, 4294901760
  %1794 = vmatmul.mubr.f32.gmra.mrb[0].mxu0 %v1793
  %v1795 = vpop.f32.mrb[0].mxu0
  %v1796 = vadd.f32 %v1011, %v1795
  %v1797 = vpop.f32.mrb[0].mxu0
  %1798 = vmatprep.mubr.f32.mxu0 0.0
  %v1799 = vand.u32 %v94, 4294901760
  %1800 = vmatmul.mubr.f32.gmra.mrb[0].mxu0 %v1799
  %v1801 = vpop.f32.mrb[0].mxu0
  %v1802 = vadd.f32 %v1021, %v1801
  %v1803 = vpop.f32.mrb[0].mxu0
  %1804 = vmatprep.mubr.f32.mxu0 0.0
  %v1805 = vand.u32 %v95, 4294901760
  %1806 = vmatmul.mubr.f32.gmra.mrb[0].mxu0 %v1805
  %v1807 = vpop.f32.mrb[0].mxu0
  %v1808 = vadd.f32 %v1031, %v1807
  %v1809 = vpop.f32.mrb[0].mxu0
  %1810 = vmatprep.mubr.f32.mxu0 0.0
  %v1811 = vand.u32 %v96, 4294901760
  %1812 = vmatmul.mubr.f32.gmra.mrb[0].mxu0 %v1811
  %v1813 = vpop.f32.mrb[0].mxu0
  %v1814 = vadd.f32 %v1041, %v1813
  %v1815 = vpop.f32.mrb[0].mxu0
  %1816 = vmatprep.mubr.f32.mxu0 0.0
  %v1817 = vand.u32 %v97, 4294901760
  %1818 = vmatmul.mubr.f32.gmra.mrb[0].mxu0 %v1817
  %v1819 = vpop.f32.mrb[0].mxu0
  %v1820 = vadd.f32 %v1051, %v1819
  %v1821 = vpop.f32.mrb[0].mxu0
  %1822 = vmatprep.mubr.f32.mxu0 0.0
  %v1823 = vand.u32 %v98, 4294901760
  %1824 = vmatmul.mubr.f32.gmra.mrb[0].mxu0 %v1823
  %v1825 = vpop.f32.mrb[0].mxu0
  %v1826 = vadd.f32 %v1061, %v1825
  %v1827 = vpop.f32.mrb[0].mxu0
  %1828 = vmatprep.mubr.f32.mxu0 0.0
  %v1829 = vand.u32 %v99, 4294901760
  %1830 = vmatmul.mubr.f32.gmra.mrb[0].mxu0 %v1829
  %v1831 = vpop.f32.mrb[0].mxu0
  %v1832 = vadd.f32 %v1071, %v1831
  %v1833 = vpop.f32.mrb[0].mxu0
  %1834 = vmatprep.mubr.f32.mxu0 0.0
  %v1835 = vand.u32 %v100, 4294901760
  %1836 = vmatmul.mubr.f32.gmra.mrb[0].mxu0 %v1835
  %v1837 = vpop.f32.mrb[0].mxu0
  %v1838 = vadd.f32 %v1081, %v1837
  %v1839 = vpop.f32.mrb[0].mxu0
  %1840 = vmatprep.mubr.f32.mxu0 0.0
  %v1841 = vand.u32 %v101, 4294901760
  %1842 = vmatmul.mubr.f32.gmra.mrb[0].mxu0 %v1841
  %v1843 = vpop.f32.mrb[0].mxu0
  %v1844 = vadd.f32 %v1091, %v1843
  %v1845 = vpop.f32.mrb[0].mxu0
  %1846 = vmatprep.mubr.f32.mxu0 0.0
  %v1847 = vand.u32 %v102, 4294901760
  %1848 = vmatmul.mubr.f32.gmra.mrb[0].mxu0 %v1847
  %v1849 = vpop.f32.mrb[0].mxu0
  %v1850 = vadd.f32 %v1101, %v1849
  %v1851 = vpop.f32.mrb[0].mxu0
  %1852 = vmatprep.mubr.f32.mxu0 0.0
  %v1853 = vand.u32 %v103, 4294901760
  %1854 = vmatmul.mubr.f32.gmra.mrb[0].mxu0 %v1853
  %v1855 = vpop.f32.mrb[0].mxu0
  %v1856 = vadd.f32 %v1111, %v1855
  %v1857 = vpop.f32.mrb[0].mxu0
  %1858 = vmatprep.mubr.f32.mxu0 0.0
  %v1859 = vand.u32 %v104, 4294901760
  %1860 = vmatmul.mubr.f32.gmra.mrb[0].mxu0 %v1859
  %v1861 = vpop.f32.mrb[0].mxu0
  %v1862 = vadd.f32 %v1121, %v1861
  %v1863 = vpop.f32.mrb[0].mxu0
  %1864 = vmatprep.mubr.f32.mxu0 0.0
  %v1865 = vand.u32 %v105, 4294901760
  %1866 = vmatmul.mubr.f32.gmra.mrb[0].mxu0 %v1865
  %v1867 = vpop.f32.mrb[0].mxu0
  %v1868 = vadd.f32 %v1131, %v1867
  %v1869 = vpop.f32.mrb[0].mxu0
  %1870 = vmatprep.mubr.f32.mxu0 0.0
  %v1871 = vand.u32 %v106, 4294901760
  %1872 = vmatmul.mubr.f32.gmra.mrb[0].mxu0 %v1871
  %v1873 = vpop.f32.mrb[0].mxu0
  %v1874 = vadd.f32 %v1141, %v1873
  %v1875 = vpop.f32.mrb[0].mxu0
  %1876 = vmatprep.mubr.f32.mxu0 0.0
  %v1877 = vand.u32 %v107, 4294901760
  %1878 = vmatmul.mubr.f32.gmra.mrb[0].mxu0 %v1877
  %v1879 = vpop.f32.mrb[0].mxu0
  %v1880 = vadd.f32 %v1151, %v1879
  %v1881 = vpop.f32.mrb[0].mxu0
  %1882 = vmatprep.mubr.f32.mxu0 0.0
  %v1883 = vand.u32 %v108, 4294901760
  %1884 = vmatmul.mubr.f32.gmra.mrb[0].mxu0 %v1883
  %v1885 = vpop.f32.mrb[0].mxu0
  %v1886 = vadd.f32 %v1161, %v1885
  %v1887 = vpop.f32.mrb[0].mxu0
  %1888 = vmatprep.mubr.f32.mxu0 0.0
  %v1889 = vand.u32 %v109, 4294901760
  %1890 = vmatmul.mubr.f32.gmra.mrb[0].mxu0 %v1889
  %v1891 = vpop.f32.mrb[0].mxu0
  %v1892 = vadd.f32 %v1171, %v1891
  %v1893 = vpop.f32.mrb[0].mxu0
  %1894 = vdwg.mxu0
  %1895 = vmatprep.subr.mxu0 0.0
  %v1896 = vand.u32 %v110, 4294901760
  %v1897 = vsub.f32 %v110, %v1896
  %1898 = vmatpush1.msra.mxu0 %v1897
  %1899 = vmatprep.subr.mxu0 0.0
  %v1900 = vand.u32 %v111, 4294901760
  %v1901 = vsub.f32 %v111, %v1900
  %1902 = vmatpush1.msra.mxu0 %v1901
  %1903 = vmatprep.subr.mxu0 0.0
  %v1904 = vand.u32 %v112, 4294901760
  %v1905 = vsub.f32 %v112, %v1904
  %1906 = vmatpush1.msra.mxu0 %v1905
  %1907 = vmatprep.subr.mxu0 0.0
  %v1908 = vand.u32 %v113, 4294901760
  %v1909 = vsub.f32 %v113, %v1908
  %1910 = vmatpush1.msra.mxu0 %v1909
  %1911 = vmatprep.subr.mxu0 0.0
  %v1912 = vand.u32 %v114, 4294901760
  %v1913 = vsub.f32 %v114, %v1912
  %1914 = vmatpush1.msra.mxu0 %v1913
  %1915 = vmatprep.subr.mxu0 0.0
  %v1916 = vand.u32 %v115, 4294901760
  %v1917 = vsub.f32 %v115, %v1916
  %1918 = vmatpush1.msra.mxu0 %v1917
  %1919 = vmatprep.subr.mxu0 0.0
  %v1920 = vand.u32 %v116, 4294901760
  %v1921 = vsub.f32 %v116, %v1920
  %1922 = vmatpush1.msra.mxu0 %v1921
  %1923 = vmatprep.subr.mxu0 0.0
  %v1924 = vand.u32 %v117, 4294901760
  %v1925 = vsub.f32 %v117, %v1924
  %1926 = vmatpush1.msra.mxu0 %v1925
  %1927 = vmatprep.subr.mxu0 0.0
  %v1928 = vand.u32 %v118, 4294901760
  %v1929 = vsub.f32 %v118, %v1928
  %1930 = vmatpush1.msra.mxu0 %v1929
  %1931 = vmatprep.subr.mxu0 0.0
  %v1932 = vand.u32 %v119, 4294901760
  %v1933 = vsub.f32 %v119, %v1932
  %1934 = vmatpush1.msra.mxu0 %v1933
  %1935 = vmatprep.subr.mxu0 0.0
  %v1936 = vand.u32 %v120, 4294901760
  %v1937 = vsub.f32 %v120, %v1936
  %1938 = vmatpush1.msra.mxu0 %v1937
  %1939 = vmatprep.subr.mxu0 0.0
  %v1940 = vand.u32 %v121, 4294901760
  %v1941 = vsub.f32 %v121, %v1940
  %1942 = vmatpush1.msra.mxu0 %v1941
  %1943 = vmatprep.subr.mxu0 0.0
  %v1944 = vand.u32 %v122, 4294901760
  %v1945 = vsub.f32 %v122, %v1944
  %1946 = vmatpush1.msra.mxu0 %v1945
  %1947 = vmatprep.subr.mxu0 0.0
  %v1948 = vand.u32 %v123, 4294901760
  %v1949 = vsub.f32 %v123, %v1948
  %1950 = vmatpush1.msra.mxu0 %v1949
  %1951 = vmatprep.subr.mxu0 0.0
  %v1952 = vand.u32 %v124, 4294901760
  %v1953 = vsub.f32 %v124, %v1952
  %1954 = vmatpush1.msra.mxu0 %v1953
  %1955 = vmatprep.subr.mxu0 0.0
  %v1956 = vand.u32 %v125, 4294901760
  %v1957 = vsub.f32 %v125, %v1956
  %1958 = vmatpush1.msra.mxu0 %v1957
  %1959 = vmatprep.subr.mxu0 0.0
  %1960 = vmatpush1.msra.mxu0 0.0
  %1961 = vmatprep.subr.mxu0 0.0
  %1962 = vmatpush1.msra.mxu0 0.0
  %1963 = vmatprep.subr.mxu0 0.0
  %1964 = vmatpush1.msra.mxu0 0.0
  %1965 = vmatprep.subr.mxu0 0.0
  %1966 = vmatpush1.msra.mxu0 0.0
  %1967 = vmatprep.subr.mxu0 0.0
  %1968 = vmatpush1.msra.mxu0 0.0
  %1969 = vmatprep.subr.mxu0 0.0
  %1970 = vmatpush1.msra.mxu0 0.0
  %1971 = vmatprep.subr.mxu0 0.0
  %1972 = vmatpush1.msra.mxu0 0.0
  %1973 = vmatprep.subr.mxu0 0.0
  %1974 = vmatpush1.msra.mxu0 0.0
  %1975 = vmatprep.subr.mxu0 0.0
  %1976 = vmatpush1.msra.mxu0 0.0
  %1977 = vmatprep.subr.mxu0 0.0
  %1978 = vmatpush1.msra.mxu0 0.0
  %1979 = vmatprep.subr.mxu0 0.0
  %1980 = vmatpush1.msra.mxu0 0.0
  %1981 = vmatprep.subr.mxu0 0.0
  %1982 = vmatpush1.msra.mxu0 0.0
  %1983 = vmatprep.subr.mxu0 0.0
  %1984 = vmatpush1.msra.mxu0 0.0
  %1985 = vmatprep.subr.mxu0 0.0
  %1986 = vmatpush1.msra.mxu0 0.0
  %1987 = vmatprep.subr.mxu0 0.0
  %1988 = vmatpush1.msra.mxu0 0.0
  %1989 = vmatprep.subr.mxu0 0.0
  %1990 = vmatpush1.msra.mxu0 0.0
  %1991 = vmatprep.mubr.f32.mxu0 0.0
  %v1992 = vand.u32 %v14, 4294901760
  %v1993 = vsub.f32 %v14, %v1992
  %1994 = vmatmul.mubr.f32.gmra.mrb[0].mxu0 %v1993
  %v1995 = vpop.f32.mrb[0].mxu0
  %v1996 = vadd.f32 %v1322, %v1995
  %v1997 = vpop.f32.mrb[0].mxu0
  %1998 = vmatprep.mubr.f32.mxu0 0.0
  %v1999 = vand.u32 %v15, 4294901760
  %v2000 = vsub.f32 %v15, %v1999
  %2001 = vmatmul.mubr.f32.gmra.mrb[0].mxu0 %v2000
  %v2002 = vpop.f32.mrb[0].mxu0
  %v2003 = vadd.f32 %v1328, %v2002
  %v2004 = vpop.f32.mrb[0].mxu0
  %2005 = vmatprep.mubr.f32.mxu0 0.0
  %v2006 = vand.u32 %v16, 4294901760
  %v2007 = vsub.f32 %v16, %v2006
  %2008 = vmatmul.mubr.f32.gmra.mrb[0].mxu0 %v2007
  %v2009 = vpop.f32.mrb[0].mxu0
  %v2010 = vadd.f32 %v1334, %v2009
  %v2011 = vpop.f32.mrb[0].mxu0
  %2012 = vmatprep.mubr.f32.mxu0 0.0
  %v2013 = vand.u32 %v17, 4294901760
  %v2014 = vsub.f32 %v17, %v2013
  %2015 = vmatmul.mubr.f32.gmra.mrb[0].mxu0 %v2014
  %v2016 = vpop.f32.mrb[0].mxu0
  %v2017 = vadd.f32 %v1340, %v2016
  %v2018 = vpop.f32.mrb[0].mxu0
  %2019 = vmatprep.mubr.f32.mxu0 0.0
  %v2020 = vand.u32 %v18, 4294901760
  %v2021 = vsub.f32 %v18, %v2020
  %2022 = vmatmul.mubr.f32.gmra.mrb[0].mxu0 %v2021
  %v2023 = vpop.f32.mrb[0].mxu0
  %v2024 = vadd.f32 %v1346, %v2023
  %v2025 = vpop.f32.mrb[0].mxu0
  %2026 = vmatprep.mubr.f32.mxu0 0.0
  %v2027 = vand.u32 %v19, 4294901760
  %v2028 = vsub.f32 %v19, %v2027
  %2029 = vmatmul.mubr.f32.gmra.mrb[0].mxu0 %v2028
  %v2030 = vpop.f32.mrb[0].mxu0
  %v2031 = vadd.f32 %v1352, %v2030
  %v2032 = vpop.f32.mrb[0].mxu0
  %2033 = vmatprep.mubr.f32.mxu0 0.0
  %v2034 = vand.u32 %v20, 4294901760
  %v2035 = vsub.f32 %v20, %v2034
  %2036 = vmatmul.mubr.f32.gmra.mrb[0].mxu0 %v2035
  %v2037 = vpop.f32.mrb[0].mxu0
  %v2038 = vadd.f32 %v1358, %v2037
  %v2039 = vpop.f32.mrb[0].mxu0
  %2040 = vmatprep.mubr.f32.mxu0 0.0
  %v2041 = vand.u32 %v21, 4294901760
  %v2042 = vsub.f32 %v21, %v2041
  %2043 = vmatmul.mubr.f32.gmra.mrb[0].mxu0 %v2042
  %v2044 = vpop.f32.mrb[0].mxu0
  %v2045 = vadd.f32 %v1364, %v2044
  %v2046 = vpop.f32.mrb[0].mxu0
  %2047 = vmatprep.mubr.f32.mxu0 0.0
  %v2048 = vand.u32 %v22, 4294901760
  %v2049 = vsub.f32 %v22, %v2048
  %2050 = vmatmul.mubr.f32.gmra.mrb[0].mxu0 %v2049
  %v2051 = vpop.f32.mrb[0].mxu0
  %v2052 = vadd.f32 %v1370, %v2051
  %v2053 = vpop.f32.mrb[0].mxu0
  %2054 = vmatprep.mubr.f32.mxu0 0.0
  %v2055 = vand.u32 %v23, 4294901760
  %v2056 = vsub.f32 %v23, %v2055
  %2057 = vmatmul.mubr.f32.gmra.mrb[0].mxu0 %v2056
  %v2058 = vpop.f32.mrb[0].mxu0
  %v2059 = vadd.f32 %v1376, %v2058
  %v2060 = vpop.f32.mrb[0].mxu0
  %2061 = vmatprep.mubr.f32.mxu0 0.0
  %v2062 = vand.u32 %v24, 4294901760
  %v2063 = vsub.f32 %v24, %v2062
  %2064 = vmatmul.mubr.f32.gmra.mrb[0].mxu0 %v2063
  %v2065 = vpop.f32.mrb[0].mxu0
  %v2066 = vadd.f32 %v1382, %v2065
  %v2067 = vpop.f32.mrb[0].mxu0
  %2068 = vmatprep.mubr.f32.mxu0 0.0
  %v2069 = vand.u32 %v25, 4294901760
  %v2070 = vsub.f32 %v25, %v2069
  %2071 = vmatmul.mubr.f32.gmra.mrb[0].mxu0 %v2070
  %v2072 = vpop.f32.mrb[0].mxu0
  %v2073 = vadd.f32 %v1388, %v2072
  %v2074 = vpop.f32.mrb[0].mxu0
  %2075 = vmatprep.mubr.f32.mxu0 0.0
  %v2076 = vand.u32 %v26, 4294901760
  %v2077 = vsub.f32 %v26, %v2076
  %2078 = vmatmul.mubr.f32.gmra.mrb[0].mxu0 %v2077
  %v2079 = vpop.f32.mrb[0].mxu0
  %v2080 = vadd.f32 %v1394, %v2079
  %v2081 = vpop.f32.mrb[0].mxu0
  %2082 = vmatprep.mubr.f32.mxu0 0.0
  %v2083 = vand.u32 %v27, 4294901760
  %v2084 = vsub.f32 %v27, %v2083
  %2085 = vmatmul.mubr.f32.gmra.mrb[0].mxu0 %v2084
  %v2086 = vpop.f32.mrb[0].mxu0
  %v2087 = vadd.f32 %v1400, %v2086
  %v2088 = vpop.f32.mrb[0].mxu0
  %2089 = vmatprep.mubr.f32.mxu0 0.0
  %v2090 = vand.u32 %v28, 4294901760
  %v2091 = vsub.f32 %v28, %v2090
  %2092 = vmatmul.mubr.f32.gmra.mrb[0].mxu0 %v2091
  %v2093 = vpop.f32.mrb[0].mxu0
  %v2094 = vadd.f32 %v1406, %v2093
  %v2095 = vpop.f32.mrb[0].mxu0
  %2096 = vmatprep.mubr.f32.mxu0 0.0
  %v2097 = vand.u32 %v29, 4294901760
  %v2098 = vsub.f32 %v29, %v2097
  %2099 = vmatmul.mubr.f32.gmra.mrb[0].mxu0 %v2098
  %v2100 = vpop.f32.mrb[0].mxu0
  %v2101 = vadd.f32 %v1412, %v2100
  %v2102 = vpop.f32.mrb[0].mxu0
  %2103 = vmatprep.mubr.f32.mxu0 0.0
  %v2104 = vand.u32 %v30, 4294901760
  %v2105 = vsub.f32 %v30, %v2104
  %2106 = vmatmul.mubr.f32.gmra.mrb[0].mxu0 %v2105
  %v2107 = vpop.f32.mrb[0].mxu0
  %v2108 = vadd.f32 %v1418, %v2107
  %v2109 = vpop.f32.mrb[0].mxu0
  %2110 = vmatprep.mubr.f32.mxu0 0.0
  %v2111 = vand.u32 %v31, 4294901760
  %v2112 = vsub.f32 %v31, %v2111
  %2113 = vmatmul.mubr.f32.gmra.mrb[0].mxu0 %v2112
  %v2114 = vpop.f32.mrb[0].mxu0
  %v2115 = vadd.f32 %v1424, %v2114
  %v2116 = vpop.f32.mrb[0].mxu0
  %2117 = vmatprep.mubr.f32.mxu0 0.0
  %v2118 = vand.u32 %v32, 4294901760
  %v2119 = vsub.f32 %v32, %v2118
  %2120 = vmatmul.mubr.f32.gmra.mrb[0].mxu0 %v2119
  %v2121 = vpop.f32.mrb[0].mxu0
  %v2122 = vadd.f32 %v1430, %v2121
  %v2123 = vpop.f32.mrb[0].mxu0
  %2124 = vmatprep.mubr.f32.mxu0 0.0
  %v2125 = vand.u32 %v33, 4294901760
  %v2126 = vsub.f32 %v33, %v2125
  %2127 = vmatmul.mubr.f32.gmra.mrb[0].mxu0 %v2126
  %v2128 = vpop.f32.mrb[0].mxu0
  %v2129 = vadd.f32 %v1436, %v2128
  %v2130 = vpop.f32.mrb[0].mxu0
  %2131 = vmatprep.mubr.f32.mxu0 0.0
  %v2132 = vand.u32 %v34, 4294901760
  %v2133 = vsub.f32 %v34, %v2132
  %2134 = vmatmul.mubr.f32.gmra.mrb[0].mxu0 %v2133
  %v2135 = vpop.f32.mrb[0].mxu0
  %v2136 = vadd.f32 %v1442, %v2135
  %v2137 = vpop.f32.mrb[0].mxu0
  %2138 = vmatprep.mubr.f32.mxu0 0.0
  %v2139 = vand.u32 %v35, 4294901760
  %v2140 = vsub.f32 %v35, %v2139
  %2141 = vmatmul.mubr.f32.gmra.mrb[0].mxu0 %v2140
  %v2142 = vpop.f32.mrb[0].mxu0
  %v2143 = vadd.f32 %v1448, %v2142
  %v2144 = vpop.f32.mrb[0].mxu0
  %2145 = vmatprep.mubr.f32.mxu0 0.0
  %v2146 = vand.u32 %v36, 4294901760
  %v2147 = vsub.f32 %v36, %v2146
  %2148 = vmatmul.mubr.f32.gmra.mrb[0].mxu0 %v2147
  %v2149 = vpop.f32.mrb[0].mxu0
  %v2150 = vadd.f32 %v1454, %v2149
  %v2151 = vpop.f32.mrb[0].mxu0
  %2152 = vmatprep.mubr.f32.mxu0 0.0
  %v2153 = vand.u32 %v37, 4294901760
  %v2154 = vsub.f32 %v37, %v2153
  %2155 = vmatmul.mubr.f32.gmra.mrb[0].mxu0 %v2154
  %v2156 = vpop.f32.mrb[0].mxu0
  %v2157 = vadd.f32 %v1460, %v2156
  %v2158 = vpop.f32.mrb[0].mxu0
  %2159 = vmatprep.mubr.f32.mxu0 0.0
  %v2160 = vand.u32 %v38, 4294901760
  %v2161 = vsub.f32 %v38, %v2160
  %2162 = vmatmul.mubr.f32.gmra.mrb[0].mxu0 %v2161
  %v2163 = vpop.f32.mrb[0].mxu0
  %v2164 = vadd.f32 %v1466, %v2163
  %v2165 = vpop.f32.mrb[0].mxu0
  %2166 = vmatprep.mubr.f32.mxu0 0.0
  %v2167 = vand.u32 %v39, 4294901760
  %v2168 = vsub.f32 %v39, %v2167
  %2169 = vmatmul.mubr.f32.gmra.mrb[0].mxu0 %v2168
  %v2170 = vpop.f32.mrb[0].mxu0
  %v2171 = vadd.f32 %v1472, %v2170
  %v2172 = vpop.f32.mrb[0].mxu0
  %2173 = vmatprep.mubr.f32.mxu0 0.0
  %v2174 = vand.u32 %v40, 4294901760
  %v2175 = vsub.f32 %v40, %v2174
  %2176 = vmatmul.mubr.f32.gmra.mrb[0].mxu0 %v2175
  %v2177 = vpop.f32.mrb[0].mxu0
  %v2178 = vadd.f32 %v1478, %v2177
  %v2179 = vpop.f32.mrb[0].mxu0
  %2180 = vmatprep.mubr.f32.mxu0 0.0
  %v2181 = vand.u32 %v41, 4294901760
  %v2182 = vsub.f32 %v41, %v2181
  %2183 = vmatmul.mubr.f32.gmra.mrb[0].mxu0 %v2182
  %v2184 = vpop.f32.mrb[0].mxu0
  %v2185 = vadd.f32 %v1484, %v2184
  %v2186 = vpop.f32.mrb[0].mxu0
  %2187 = vmatprep.mubr.f32.mxu0 0.0
  %v2188 = vand.u32 %v42, 4294901760
  %v2189 = vsub.f32 %v42, %v2188
  %2190 = vmatmul.mubr.f32.gmra.mrb[0].mxu0 %v2189
  %v2191 = vpop.f32.mrb[0].mxu0
  %v2192 = vadd.f32 %v1490, %v2191
  %v2193 = vpop.f32.mrb[0].mxu0
  %2194 = vmatprep.mubr.f32.mxu0 0.0
  %v2195 = vand.u32 %v43, 4294901760
  %v2196 = vsub.f32 %v43, %v2195
  %2197 = vmatmul.mubr.f32.gmra.mrb[0].mxu0 %v2196
  %v2198 = vpop.f32.mrb[0].mxu0
  %v2199 = vadd.f32 %v1496, %v2198
  %v2200 = vpop.f32.mrb[0].mxu0
  %2201 = vmatprep.mubr.f32.mxu0 0.0
  %v2202 = vand.u32 %v44, 4294901760
  %v2203 = vsub.f32 %v44, %v2202
  %2204 = vmatmul.mubr.f32.gmra.mrb[0].mxu0 %v2203
  %v2205 = vpop.f32.mrb[0].mxu0
  %v2206 = vadd.f32 %v1502, %v2205
  %v2207 = vpop.f32.mrb[0].mxu0
  %2208 = vmatprep.mubr.f32.mxu0 0.0
  %v2209 = vand.u32 %v45, 4294901760
  %v2210 = vsub.f32 %v45, %v2209
  %2211 = vmatmul.mubr.f32.gmra.mrb[0].mxu0 %v2210
  %v2212 = vpop.f32.mrb[0].mxu0
  %v2213 = vadd.f32 %v1508, %v2212
  %v2214 = vpop.f32.mrb[0].mxu0
  %2215 = vmatprep.mubr.f32.mxu0 0.0
  %v2216 = vand.u32 %v46, 4294901760
  %v2217 = vsub.f32 %v46, %v2216
  %2218 = vmatmul.mubr.f32.gmra.mrb[0].mxu0 %v2217
  %v2219 = vpop.f32.mrb[0].mxu0
  %v2220 = vadd.f32 %v1514, %v2219
  %v2221 = vpop.f32.mrb[0].mxu0
  %2222 = vmatprep.mubr.f32.mxu0 0.0
  %v2223 = vand.u32 %v47, 4294901760
  %v2224 = vsub.f32 %v47, %v2223
  %2225 = vmatmul.mubr.f32.gmra.mrb[0].mxu0 %v2224
  %v2226 = vpop.f32.mrb[0].mxu0
  %v2227 = vadd.f32 %v1520, %v2226
  %v2228 = vpop.f32.mrb[0].mxu0
  %2229 = vmatprep.mubr.f32.mxu0 0.0
  %v2230 = vand.u32 %v48, 4294901760
  %v2231 = vsub.f32 %v48, %v2230
  %2232 = vmatmul.mubr.f32.gmra.mrb[0].mxu0 %v2231
  %v2233 = vpop.f32.mrb[0].mxu0
  %v2234 = vadd.f32 %v1526, %v2233
  %v2235 = vpop.f32.mrb[0].mxu0
  %2236 = vmatprep.mubr.f32.mxu0 0.0
  %v2237 = vand.u32 %v49, 4294901760
  %v2238 = vsub.f32 %v49, %v2237
  %2239 = vmatmul.mubr.f32.gmra.mrb[0].mxu0 %v2238
  %v2240 = vpop.f32.mrb[0].mxu0
  %v2241 = vadd.f32 %v1532, %v2240
  %v2242 = vpop.f32.mrb[0].mxu0
  %2243 = vmatprep.mubr.f32.mxu0 0.0
  %v2244 = vand.u32 %v50, 4294901760
  %v2245 = vsub.f32 %v50, %v2244
  %2246 = vmatmul.mubr.f32.gmra.mrb[0].mxu0 %v2245
  %v2247 = vpop.f32.mrb[0].mxu0
  %v2248 = vadd.f32 %v1538, %v2247
  %v2249 = vpop.f32.mrb[0].mxu0
  %2250 = vmatprep.mubr.f32.mxu0 0.0
  %v2251 = vand.u32 %v51, 4294901760
  %v2252 = vsub.f32 %v51, %v2251
  %2253 = vmatmul.mubr.f32.gmra.mrb[0].mxu0 %v2252
  %v2254 = vpop.f32.mrb[0].mxu0
  %v2255 = vadd.f32 %v1544, %v2254
  %v2256 = vpop.f32.mrb[0].mxu0
  %2257 = vmatprep.mubr.f32.mxu0 0.0
  %v2258 = vand.u32 %v52, 4294901760
  %v2259 = vsub.f32 %v52, %v2258
  %2260 = vmatmul.mubr.f32.gmra.mrb[0].mxu0 %v2259
  %v2261 = vpop.f32.mrb[0].mxu0
  %v2262 = vadd.f32 %v1550, %v2261
  %v2263 = vpop.f32.mrb[0].mxu0
  %2264 = vmatprep.mubr.f32.mxu0 0.0
  %v2265 = vand.u32 %v53, 4294901760
  %v2266 = vsub.f32 %v53, %v2265
  %2267 = vmatmul.mubr.f32.gmra.mrb[0].mxu0 %v2266
  %v2268 = vpop.f32.mrb[0].mxu0
  %v2269 = vadd.f32 %v1556, %v2268
  %v2270 = vpop.f32.mrb[0].mxu0
  %2271 = vmatprep.mubr.f32.mxu0 0.0
  %v2272 = vand.u32 %v54, 4294901760
  %v2273 = vsub.f32 %v54, %v2272
  %2274 = vmatmul.mubr.f32.gmra.mrb[0].mxu0 %v2273
  %v2275 = vpop.f32.mrb[0].mxu0
  %v2276 = vadd.f32 %v1562, %v2275
  %v2277 = vpop.f32.mrb[0].mxu0
  %2278 = vmatprep.mubr.f32.mxu0 0.0
  %v2279 = vand.u32 %v55, 4294901760
  %v2280 = vsub.f32 %v55, %v2279
  %2281 = vmatmul.mubr.f32.gmra.mrb[0].mxu0 %v2280
  %v2282 = vpop.f32.mrb[0].mxu0
  %v2283 = vadd.f32 %v1568, %v2282
  %v2284 = vpop.f32.mrb[0].mxu0
  %2285 = vmatprep.mubr.f32.mxu0 0.0
  %v2286 = vand.u32 %v56, 4294901760
  %v2287 = vsub.f32 %v56, %v2286
  %2288 = vmatmul.mubr.f32.gmra.mrb[0].mxu0 %v2287
  %v2289 = vpop.f32.mrb[0].mxu0
  %v2290 = vadd.f32 %v1574, %v2289
  %v2291 = vpop.f32.mrb[0].mxu0
  %2292 = vmatprep.mubr.f32.mxu0 0.0
  %v2293 = vand.u32 %v57, 4294901760
  %v2294 = vsub.f32 %v57, %v2293
  %2295 = vmatmul.mubr.f32.gmra.mrb[0].mxu0 %v2294
  %v2296 = vpop.f32.mrb[0].mxu0
  %v2297 = vadd.f32 %v1580, %v2296
  %v2298 = vpop.f32.mrb[0].mxu0
  %2299 = vmatprep.mubr.f32.mxu0 0.0
  %v2300 = vand.u32 %v58, 4294901760
  %v2301 = vsub.f32 %v58, %v2300
  %2302 = vmatmul.mubr.f32.gmra.mrb[0].mxu0 %v2301
  %v2303 = vpop.f32.mrb[0].mxu0
  %v2304 = vadd.f32 %v1586, %v2303
  %v2305 = vpop.f32.mrb[0].mxu0
  %2306 = vmatprep.mubr.f32.mxu0 0.0
  %v2307 = vand.u32 %v59, 4294901760
  %v2308 = vsub.f32 %v59, %v2307
  %2309 = vmatmul.mubr.f32.gmra.mrb[0].mxu0 %v2308
  %v2310 = vpop.f32.mrb[0].mxu0
  %v2311 = vadd.f32 %v1592, %v2310
  %v2312 = vpop.f32.mrb[0].mxu0
  %2313 = vmatprep.mubr.f32.mxu0 0.0
  %v2314 = vand.u32 %v60, 4294901760
  %v2315 = vsub.f32 %v60, %v2314
  %2316 = vmatmul.mubr.f32.gmra.mrb[0].mxu0 %v2315
  %v2317 = vpop.f32.mrb[0].mxu0
  %v2318 = vadd.f32 %v1598, %v2317
  %v2319 = vpop.f32.mrb[0].mxu0
  %2320 = vmatprep.mubr.f32.mxu0 0.0
  %v2321 = vand.u32 %v61, 4294901760
  %v2322 = vsub.f32 %v61, %v2321
  %2323 = vmatmul.mubr.f32.gmra.mrb[0].mxu0 %v2322
  %v2324 = vpop.f32.mrb[0].mxu0
  %v2325 = vadd.f32 %v1604, %v2324
  %v2326 = vpop.f32.mrb[0].mxu0
  %2327 = vmatprep.mubr.f32.mxu0 0.0
  %v2328 = vand.u32 %v62, 4294901760
  %v2329 = vsub.f32 %v62, %v2328
  %2330 = vmatmul.mubr.f32.gmra.mrb[0].mxu0 %v2329
  %v2331 = vpop.f32.mrb[0].mxu0
  %v2332 = vadd.f32 %v1610, %v2331
  %v2333 = vpop.f32.mrb[0].mxu0
  %2334 = vmatprep.mubr.f32.mxu0 0.0
  %v2335 = vand.u32 %v63, 4294901760
  %v2336 = vsub.f32 %v63, %v2335
  %2337 = vmatmul.mubr.f32.gmra.mrb[0].mxu0 %v2336
  %v2338 = vpop.f32.mrb[0].mxu0
  %v2339 = vadd.f32 %v1616, %v2338
  %v2340 = vpop.f32.mrb[0].mxu0
  %2341 = vmatprep.mubr.f32.mxu0 0.0
  %v2342 = vand.u32 %v64, 4294901760
  %v2343 = vsub.f32 %v64, %v2342
  %2344 = vmatmul.mubr.f32.gmra.mrb[0].mxu0 %v2343
  %v2345 = vpop.f32.mrb[0].mxu0
  %v2346 = vadd.f32 %v1622, %v2345
  %v2347 = vpop.f32.mrb[0].mxu0
  %2348 = vmatprep.mubr.f32.mxu0 0.0
  %v2349 = vand.u32 %v65, 4294901760
  %v2350 = vsub.f32 %v65, %v2349
  %2351 = vmatmul.mubr.f32.gmra.mrb[0].mxu0 %v2350
  %v2352 = vpop.f32.mrb[0].mxu0
  %v2353 = vadd.f32 %v1628, %v2352
  %v2354 = vpop.f32.mrb[0].mxu0
  %2355 = vmatprep.mubr.f32.mxu0 0.0
  %v2356 = vand.u32 %v66, 4294901760
  %v2357 = vsub.f32 %v66, %v2356
  %2358 = vmatmul.mubr.f32.gmra.mrb[0].mxu0 %v2357
  %v2359 = vpop.f32.mrb[0].mxu0
  %v2360 = vadd.f32 %v1634, %v2359
  %v2361 = vpop.f32.mrb[0].mxu0
  %2362 = vmatprep.mubr.f32.mxu0 0.0
  %v2363 = vand.u32 %v67, 4294901760
  %v2364 = vsub.f32 %v67, %v2363
  %2365 = vmatmul.mubr.f32.gmra.mrb[0].mxu0 %v2364
  %v2366 = vpop.f32.mrb[0].mxu0
  %v2367 = vadd.f32 %v1640, %v2366
  %v2368 = vpop.f32.mrb[0].mxu0
  %2369 = vmatprep.mubr.f32.mxu0 0.0
  %v2370 = vand.u32 %v68, 4294901760
  %v2371 = vsub.f32 %v68, %v2370
  %2372 = vmatmul.mubr.f32.gmra.mrb[0].mxu0 %v2371
  %v2373 = vpop.f32.mrb[0].mxu0
  %v2374 = vadd.f32 %v1646, %v2373
  %v2375 = vpop.f32.mrb[0].mxu0
  %2376 = vmatprep.mubr.f32.mxu0 0.0
  %v2377 = vand.u32 %v69, 4294901760
  %v2378 = vsub.f32 %v69, %v2377
  %2379 = vmatmul.mubr.f32.gmra.mrb[0].mxu0 %v2378
  %v2380 = vpop.f32.mrb[0].mxu0
  %v2381 = vadd.f32 %v1652, %v2380
  %v2382 = vpop.f32.mrb[0].mxu0
  %2383 = vmatprep.mubr.f32.mxu0 0.0
  %v2384 = vand.u32 %v70, 4294901760
  %v2385 = vsub.f32 %v70, %v2384
  %2386 = vmatmul.mubr.f32.gmra.mrb[0].mxu0 %v2385
  %v2387 = vpop.f32.mrb[0].mxu0
  %v2388 = vadd.f32 %v1658, %v2387
  %v2389 = vpop.f32.mrb[0].mxu0
  %2390 = vmatprep.mubr.f32.mxu0 0.0
  %v2391 = vand.u32 %v71, 4294901760
  %v2392 = vsub.f32 %v71, %v2391
  %2393 = vmatmul.mubr.f32.gmra.mrb[0].mxu0 %v2392
  %v2394 = vpop.f32.mrb[0].mxu0
  %v2395 = vadd.f32 %v1664, %v2394
  %v2396 = vpop.f32.mrb[0].mxu0
  %2397 = vmatprep.mubr.f32.mxu0 0.0
  %v2398 = vand.u32 %v72, 4294901760
  %v2399 = vsub.f32 %v72, %v2398
  %2400 = vmatmul.mubr.f32.gmra.mrb[0].mxu0 %v2399
  %v2401 = vpop.f32.mrb[0].mxu0
  %v2402 = vadd.f32 %v1670, %v2401
  %v2403 = vpop.f32.mrb[0].mxu0
  %2404 = vmatprep.mubr.f32.mxu0 0.0
  %v2405 = vand.u32 %v73, 4294901760
  %v2406 = vsub.f32 %v73, %v2405
  %2407 = vmatmul.mubr.f32.gmra.mrb[0].mxu0 %v2406
  %v2408 = vpop.f32.mrb[0].mxu0
  %v2409 = vadd.f32 %v1676, %v2408
  %v2410 = vpop.f32.mrb[0].mxu0
  %2411 = vmatprep.mubr.f32.mxu0 0.0
  %v2412 = vand.u32 %v74, 4294901760
  %v2413 = vsub.f32 %v74, %v2412
  %2414 = vmatmul.mubr.f32.gmra.mrb[0].mxu0 %v2413
  %v2415 = vpop.f32.mrb[0].mxu0
  %v2416 = vadd.f32 %v1682, %v2415
  %v2417 = vpop.f32.mrb[0].mxu0
  %2418 = vmatprep.mubr.f32.mxu0 0.0
  %v2419 = vand.u32 %v75, 4294901760
  %v2420 = vsub.f32 %v75, %v2419
  %2421 = vmatmul.mubr.f32.gmra.mrb[0].mxu0 %v2420
  %v2422 = vpop.f32.mrb[0].mxu0
  %v2423 = vadd.f32 %v1688, %v2422
  %v2424 = vpop.f32.mrb[0].mxu0
  %2425 = vmatprep.mubr.f32.mxu0 0.0
  %v2426 = vand.u32 %v76, 4294901760
  %v2427 = vsub.f32 %v76, %v2426
  %2428 = vmatmul.mubr.f32.gmra.mrb[0].mxu0 %v2427
  %v2429 = vpop.f32.mrb[0].mxu0
  %v2430 = vadd.f32 %v1694, %v2429
  %v2431 = vpop.f32.mrb[0].mxu0
  %2432 = vmatprep.mubr.f32.mxu0 0.0
  %v2433 = vand.u32 %v77, 4294901760
  %v2434 = vsub.f32 %v77, %v2433
  %2435 = vmatmul.mubr.f32.gmra.mrb[0].mxu0 %v2434
  %v2436 = vpop.f32.mrb[0].mxu0
  %v2437 = vadd.f32 %v1700, %v2436
  %v2438 = vpop.f32.mrb[0].mxu0
  %2439 = vmatprep.mubr.f32.mxu0 0.0
  %v2440 = vand.u32 %v78, 4294901760
  %v2441 = vsub.f32 %v78, %v2440
  %2442 = vmatmul.mubr.f32.gmra.mrb[0].mxu0 %v2441
  %v2443 = vpop.f32.mrb[0].mxu0
  %v2444 = vadd.f32 %v1706, %v2443
  %v2445 = vpop.f32.mrb[0].mxu0
  %2446 = vmatprep.mubr.f32.mxu0 0.0
  %v2447 = vand.u32 %v79, 4294901760
  %v2448 = vsub.f32 %v79, %v2447
  %2449 = vmatmul.mubr.f32.gmra.mrb[0].mxu0 %v2448
  %v2450 = vpop.f32.mrb[0].mxu0
  %v2451 = vadd.f32 %v1712, %v2450
  %v2452 = vpop.f32.mrb[0].mxu0
  %2453 = vmatprep.mubr.f32.mxu0 0.0
  %v2454 = vand.u32 %v80, 4294901760
  %v2455 = vsub.f32 %v80, %v2454
  %2456 = vmatmul.mubr.f32.gmra.mrb[0].mxu0 %v2455
  %v2457 = vpop.f32.mrb[0].mxu0
  %v2458 = vadd.f32 %v1718, %v2457
  %v2459 = vpop.f32.mrb[0].mxu0
  %2460 = vmatprep.mubr.f32.mxu0 0.0
  %v2461 = vand.u32 %v81, 4294901760
  %v2462 = vsub.f32 %v81, %v2461
  %2463 = vmatmul.mubr.f32.gmra.mrb[0].mxu0 %v2462
  %v2464 = vpop.f32.mrb[0].mxu0
  %v2465 = vadd.f32 %v1724, %v2464
  %v2466 = vpop.f32.mrb[0].mxu0
  %2467 = vmatprep.mubr.f32.mxu0 0.0
  %v2468 = vand.u32 %v82, 4294901760
  %v2469 = vsub.f32 %v82, %v2468
  %2470 = vmatmul.mubr.f32.gmra.mrb[0].mxu0 %v2469
  %v2471 = vpop.f32.mrb[0].mxu0
  %v2472 = vadd.f32 %v1730, %v2471
  %v2473 = vpop.f32.mrb[0].mxu0
  %2474 = vmatprep.mubr.f32.mxu0 0.0
  %v2475 = vand.u32 %v83, 4294901760
  %v2476 = vsub.f32 %v83, %v2475
  %2477 = vmatmul.mubr.f32.gmra.mrb[0].mxu0 %v2476
  %v2478 = vpop.f32.mrb[0].mxu0
  %v2479 = vadd.f32 %v1736, %v2478
  %v2480 = vpop.f32.mrb[0].mxu0
  %2481 = vmatprep.mubr.f32.mxu0 0.0
  %v2482 = vand.u32 %v84, 4294901760
  %v2483 = vsub.f32 %v84, %v2482
  %2484 = vmatmul.mubr.f32.gmra.mrb[0].mxu0 %v2483
  %v2485 = vpop.f32.mrb[0].mxu0
  %v2486 = vadd.f32 %v1742, %v2485
  %v2487 = vpop.f32.mrb[0].mxu0
  %2488 = vmatprep.mubr.f32.mxu0 0.0
  %v2489 = vand.u32 %v85, 4294901760
  %v2490 = vsub.f32 %v85, %v2489
  %2491 = vmatmul.mubr.f32.gmra.mrb[0].mxu0 %v2490
  %v2492 = vpop.f32.mrb[0].mxu0
  %v2493 = vadd.f32 %v1748, %v2492
  %v2494 = vpop.f32.mrb[0].mxu0
  %2495 = vmatprep.mubr.f32.mxu0 0.0
  %v2496 = vand.u32 %v86, 4294901760
  %v2497 = vsub.f32 %v86, %v2496
  %2498 = vmatmul.mubr.f32.gmra.mrb[0].mxu0 %v2497
  %v2499 = vpop.f32.mrb[0].mxu0
  %v2500 = vadd.f32 %v1754, %v2499
  %v2501 = vpop.f32.mrb[0].mxu0
  %2502 = vmatprep.mubr.f32.mxu0 0.0
  %v2503 = vand.u32 %v87, 4294901760
  %v2504 = vsub.f32 %v87, %v2503
  %2505 = vmatmul.mubr.f32.gmra.mrb[0].mxu0 %v2504
  %v2506 = vpop.f32.mrb[0].mxu0
  %v2507 = vadd.f32 %v1760, %v2506
  %v2508 = vpop.f32.mrb[0].mxu0
  %2509 = vmatprep.mubr.f32.mxu0 0.0
  %v2510 = vand.u32 %v88, 4294901760
  %v2511 = vsub.f32 %v88, %v2510
  %2512 = vmatmul.mubr.f32.gmra.mrb[0].mxu0 %v2511
  %v2513 = vpop.f32.mrb[0].mxu0
  %v2514 = vadd.f32 %v1766, %v2513
  %v2515 = vpop.f32.mrb[0].mxu0
  %2516 = vmatprep.mubr.f32.mxu0 0.0
  %v2517 = vand.u32 %v89, 4294901760
  %v2518 = vsub.f32 %v89, %v2517
  %2519 = vmatmul.mubr.f32.gmra.mrb[0].mxu0 %v2518
  %v2520 = vpop.f32.mrb[0].mxu0
  %v2521 = vadd.f32 %v1772, %v2520
  %v2522 = vpop.f32.mrb[0].mxu0
  %2523 = vmatprep.mubr.f32.mxu0 0.0
  %v2524 = vand.u32 %v90, 4294901760
  %v2525 = vsub.f32 %v90, %v2524
  %2526 = vmatmul.mubr.f32.gmra.mrb[0].mxu0 %v2525
  %v2527 = vpop.f32.mrb[0].mxu0
  %v2528 = vadd.f32 %v1778, %v2527
  %v2529 = vpop.f32.mrb[0].mxu0
  %2530 = vmatprep.mubr.f32.mxu0 0.0
  %v2531 = vand.u32 %v91, 4294901760
  %v2532 = vsub.f32 %v91, %v2531
  %2533 = vmatmul.mubr.f32.gmra.mrb[0].mxu0 %v2532
  %v2534 = vpop.f32.mrb[0].mxu0
  %v2535 = vadd.f32 %v1784, %v2534
  %v2536 = vpop.f32.mrb[0].mxu0
  %2537 = vmatprep.mubr.f32.mxu0 0.0
  %v2538 = vand.u32 %v92, 4294901760
  %v2539 = vsub.f32 %v92, %v2538
  %2540 = vmatmul.mubr.f32.gmra.mrb[0].mxu0 %v2539
  %v2541 = vpop.f32.mrb[0].mxu0
  %v2542 = vadd.f32 %v1790, %v2541
  %v2543 = vpop.f32.mrb[0].mxu0
  %2544 = vmatprep.mubr.f32.mxu0 0.0
  %v2545 = vand.u32 %v93, 4294901760
  %v2546 = vsub.f32 %v93, %v2545
  %2547 = vmatmul.mubr.f32.gmra.mrb[0].mxu0 %v2546
  %v2548 = vpop.f32.mrb[0].mxu0
  %v2549 = vadd.f32 %v1796, %v2548
  %v2550 = vpop.f32.mrb[0].mxu0
  %2551 = vmatprep.mubr.f32.mxu0 0.0
  %v2552 = vand.u32 %v94, 4294901760
  %v2553 = vsub.f32 %v94, %v2552
  %2554 = vmatmul.mubr.f32.gmra.mrb[0].mxu0 %v2553
  %v2555 = vpop.f32.mrb[0].mxu0
  %v2556 = vadd.f32 %v1802, %v2555
  %v2557 = vpop.f32.mrb[0].mxu0
  %2558 = vmatprep.mubr.f32.mxu0 0.0
  %v2559 = vand.u32 %v95, 4294901760
  %v2560 = vsub.f32 %v95, %v2559
  %2561 = vmatmul.mubr.f32.gmra.mrb[0].mxu0 %v2560
  %v2562 = vpop.f32.mrb[0].mxu0
  %v2563 = vadd.f32 %v1808, %v2562
  %v2564 = vpop.f32.mrb[0].mxu0
  %2565 = vmatprep.mubr.f32.mxu0 0.0
  %v2566 = vand.u32 %v96, 4294901760
  %v2567 = vsub.f32 %v96, %v2566
  %2568 = vmatmul.mubr.f32.gmra.mrb[0].mxu0 %v2567
  %v2569 = vpop.f32.mrb[0].mxu0
  %v2570 = vadd.f32 %v1814, %v2569
  %v2571 = vpop.f32.mrb[0].mxu0
  %2572 = vmatprep.mubr.f32.mxu0 0.0
  %v2573 = vand.u32 %v97, 4294901760
  %v2574 = vsub.f32 %v97, %v2573
  %2575 = vmatmul.mubr.f32.gmra.mrb[0].mxu0 %v2574
  %v2576 = vpop.f32.mrb[0].mxu0
  %v2577 = vadd.f32 %v1820, %v2576
  %v2578 = vpop.f32.mrb[0].mxu0
  %2579 = vmatprep.mubr.f32.mxu0 0.0
  %v2580 = vand.u32 %v98, 4294901760
  %v2581 = vsub.f32 %v98, %v2580
  %2582 = vmatmul.mubr.f32.gmra.mrb[0].mxu0 %v2581
  %v2583 = vpop.f32.mrb[0].mxu0
  %v2584 = vadd.f32 %v1826, %v2583
  %v2585 = vpop.f32.mrb[0].mxu0
  %2586 = vmatprep.mubr.f32.mxu0 0.0
  %v2587 = vand.u32 %v99, 4294901760
  %v2588 = vsub.f32 %v99, %v2587
  %2589 = vmatmul.mubr.f32.gmra.mrb[0].mxu0 %v2588
  %v2590 = vpop.f32.mrb[0].mxu0
  %v2591 = vadd.f32 %v1832, %v2590
  %v2592 = vpop.f32.mrb[0].mxu0
  %2593 = vmatprep.mubr.f32.mxu0 0.0
  %v2594 = vand.u32 %v100, 4294901760
  %v2595 = vsub.f32 %v100, %v2594
  %2596 = vmatmul.mubr.f32.gmra.mrb[0].mxu0 %v2595
  %v2597 = vpop.f32.mrb[0].mxu0
  %v2598 = vadd.f32 %v1838, %v2597
  %v2599 = vpop.f32.mrb[0].mxu0
  %2600 = vmatprep.mubr.f32.mxu0 0.0
  %v2601 = vand.u32 %v101, 4294901760
  %v2602 = vsub.f32 %v101, %v2601
  %2603 = vmatmul.mubr.f32.gmra.mrb[0].mxu0 %v2602
  %v2604 = vpop.f32.mrb[0].mxu0
  %v2605 = vadd.f32 %v1844, %v2604
  %v2606 = vpop.f32.mrb[0].mxu0
  %2607 = vmatprep.mubr.f32.mxu0 0.0
  %v2608 = vand.u32 %v102, 4294901760
  %v2609 = vsub.f32 %v102, %v2608
  %2610 = vmatmul.mubr.f32.gmra.mrb[0].mxu0 %v2609
  %v2611 = vpop.f32.mrb[0].mxu0
  %v2612 = vadd.f32 %v1850, %v2611
  %v2613 = vpop.f32.mrb[0].mxu0
  %2614 = vmatprep.mubr.f32.mxu0 0.0
  %v2615 = vand.u32 %v103, 4294901760
  %v2616 = vsub.f32 %v103, %v2615
  %2617 = vmatmul.mubr.f32.gmra.mrb[0].mxu0 %v2616
  %v2618 = vpop.f32.mrb[0].mxu0
  %v2619 = vadd.f32 %v1856, %v2618
  %v2620 = vpop.f32.mrb[0].mxu0
  %2621 = vmatprep.mubr.f32.mxu0 0.0
  %v2622 = vand.u32 %v104, 4294901760
  %v2623 = vsub.f32 %v104, %v2622
  %2624 = vmatmul.mubr.f32.gmra.mrb[0].mxu0 %v2623
  %v2625 = vpop.f32.mrb[0].mxu0
  %v2626 = vadd.f32 %v1862, %v2625
  %v2627 = vpop.f32.mrb[0].mxu0
  %2628 = vmatprep.mubr.f32.mxu0 0.0
  %v2629 = vand.u32 %v105, 4294901760
  %v2630 = vsub.f32 %v105, %v2629
  %2631 = vmatmul.mubr.f32.gmra.mrb[0].mxu0 %v2630
  %v2632 = vpop.f32.mrb[0].mxu0
  %v2633 = vadd.f32 %v1868, %v2632
  %v2634 = vpop.f32.mrb[0].mxu0
  %2635 = vmatprep.mubr.f32.mxu0 0.0
  %v2636 = vand.u32 %v106, 4294901760
  %v2637 = vsub.f32 %v106, %v2636
  %2638 = vmatmul.mubr.f32.gmra.mrb[0].mxu0 %v2637
  %v2639 = vpop.f32.mrb[0].mxu0
  %v2640 = vadd.f32 %v1874, %v2639
  %v2641 = vpop.f32.mrb[0].mxu0
  %2642 = vmatprep.mubr.f32.mxu0 0.0
  %v2643 = vand.u32 %v107, 4294901760
  %v2644 = vsub.f32 %v107, %v2643
  %2645 = vmatmul.mubr.f32.gmra.mrb[0].mxu0 %v2644
  %v2646 = vpop.f32.mrb[0].mxu0
  %v2647 = vadd.f32 %v1880, %v2646
  %v2648 = vpop.f32.mrb[0].mxu0
  %2649 = vmatprep.mubr.f32.mxu0 0.0
  %v2650 = vand.u32 %v108, 4294901760
  %v2651 = vsub.f32 %v108, %v2650
  %2652 = vmatmul.mubr.f32.gmra.mrb[0].mxu0 %v2651
  %v2653 = vpop.f32.mrb[0].mxu0
  %v2654 = vadd.f32 %v1886, %v2653
  %v2655 = vpop.f32.mrb[0].mxu0
  %2656 = vmatprep.mubr.f32.mxu0 0.0
  %v2657 = vand.u32 %v109, 4294901760
  %v2658 = vsub.f32 %v109, %v2657
  %2659 = vmatmul.mubr.f32.gmra.mrb[0].mxu0 %v2658
  %v2660 = vpop.f32.mrb[0].mxu0
  %v2661 = vadd.f32 %v1892, %v2660
  %v2662 = vpop.f32.mrb[0].mxu0
  %2663 = vdwg.mxu0
  %2664 = vmatprep.subr.mxu0 0.0
  %v2665 = vand.u32 %v110, 4294901760
  %2666 = vmatpush1.msra.mxu0 %v2665
  %2667 = vmatprep.subr.mxu0 0.0
  %v2668 = vand.u32 %v111, 4294901760
  %2669 = vmatpush1.msra.mxu0 %v2668
  %2670 = vmatprep.subr.mxu0 0.0
  %v2671 = vand.u32 %v112, 4294901760
  %2672 = vmatpush1.msra.mxu0 %v2671
  %2673 = vmatprep.subr.mxu0 0.0
  %v2674 = vand.u32 %v113, 4294901760
  %2675 = vmatpush1.msra.mxu0 %v2674
  %2676 = vmatprep.subr.mxu0 0.0
  %v2677 = vand.u32 %v114, 4294901760
  %2678 = vmatpush1.msra.mxu0 %v2677
  %2679 = vmatprep.subr.mxu0 0.0
  %v2680 = vand.u32 %v115, 4294901760
  %2681 = vmatpush1.msra.mxu0 %v2680
  %2682 = vmatprep.subr.mxu0 0.0
  %v2683 = vand.u32 %v116, 4294901760
  %2684 = vmatpush1.msra.mxu0 %v2683
  %2685 = vmatprep.subr.mxu0 0.0
  %v2686 = vand.u32 %v117, 4294901760
  %2687 = vmatpush1.msra.mxu0 %v2686
  %2688 = vmatprep.subr.mxu0 0.0
  %v2689 = vand.u32 %v118, 4294901760
  %2690 = vmatpush1.msra.mxu0 %v2689
  %2691 = vmatprep.subr.mxu0 0.0
  %v2692 = vand.u32 %v119, 4294901760
  %2693 = vmatpush1.msra.mxu0 %v2692
  %2694 = vmatprep.subr.mxu0 0.0
  %v2695 = vand.u32 %v120, 4294901760
  %2696 = vmatpush1.msra.mxu0 %v2695
  %2697 = vmatprep.subr.mxu0 0.0
  %v2698 = vand.u32 %v121, 4294901760
  %2699 = vmatpush1.msra.mxu0 %v2698
  %2700 = vmatprep.subr.mxu0 0.0
  %v2701 = vand.u32 %v122, 4294901760
  %2702 = vmatpush1.msra.mxu0 %v2701
  %2703 = vmatprep.subr.mxu0 0.0
  %v2704 = vand.u32 %v123, 4294901760
  %2705 = vmatpush1.msra.mxu0 %v2704
  %2706 = vmatprep.subr.mxu0 0.0
  %v2707 = vand.u32 %v124, 4294901760
  %2708 = vmatpush1.msra.mxu0 %v2707
  %2709 = vmatprep.subr.mxu0 0.0
  %v2710 = vand.u32 %v125, 4294901760
  %2711 = vmatpush1.msra.mxu0 %v2710
  %2712 = vmatprep.subr.mxu0 0.0
  %2713 = vmatpush1.msra.mxu0 0.0
  %2714 = vmatprep.subr.mxu0 0.0
  %2715 = vmatpush1.msra.mxu0 0.0
  %2716 = vmatprep.subr.mxu0 0.0
  %2717 = vmatpush1.msra.mxu0 0.0
  %2718 = vmatprep.subr.mxu0 0.0
  %2719 = vmatpush1.msra.mxu0 0.0
  %2720 = vmatprep.subr.mxu0 0.0
  %2721 = vmatpush1.msra.mxu0 0.0
  %2722 = vmatprep.subr.mxu0 0.0
  %2723 = vmatpush1.msra.mxu0 0.0
  %2724 = vmatprep.subr.mxu0 0.0
  %2725 = vmatpush1.msra.mxu0 0.0
  %2726 = vmatprep.subr.mxu0 0.0
  %2727 = vmatpush1.msra.mxu0 0.0
  %2728 = vmatprep.subr.mxu0 0.0
  %2729 = vmatpush1.msra.mxu0 0.0
  %2730 = vmatprep.subr.mxu0 0.0
  %2731 = vmatpush1.msra.mxu0 0.0
  %2732 = vmatprep.subr.mxu0 0.0
  %2733 = vmatpush1.msra.mxu0 0.0
  %2734 = vmatprep.subr.mxu0 0.0
  %2735 = vmatpush1.msra.mxu0 0.0
  %2736 = vmatprep.subr.mxu0 0.0
  %2737 = vmatpush1.msra.mxu0 0.0
  %2738 = vmatprep.subr.mxu0 0.0
  %2739 = vmatpush1.msra.mxu0 0.0
  %2740 = vmatprep.subr.mxu0 0.0
  %2741 = vmatpush1.msra.mxu0 0.0
  %2742 = vmatprep.subr.mxu0 0.0
  %2743 = vmatpush1.msra.mxu0 0.0
  %2744 = vmatprep.mubr.f32.mxu0 0.0
  %v2745 = vand.u32 %v14, 4294901760
  %v2746 = vsub.f32 %v14, %v2745
  %v2747 = vand.u32 %v2746, 4294901760
  %2748 = vmatmul.mubr.f32.gmra.mrb[0].mxu0 %v2747
  %v2749 = vpop.f32.mrb[0].mxu0
  %v2750 = vadd.f32 %v1996, %v2749
  %v2751 = vpop.f32.mrb[0].mxu0
  %2752 = vmatprep.mubr.f32.mxu0 0.0
  %v2753 = vand.u32 %v15, 4294901760
  %v2754 = vsub.f32 %v15, %v2753
  %v2755 = vand.u32 %v2754, 4294901760
  %2756 = vmatmul.mubr.f32.gmra.mrb[0].mxu0 %v2755
  %v2757 = vpop.f32.mrb[0].mxu0
  %v2758 = vadd.f32 %v2003, %v2757
  %v2759 = vpop.f32.mrb[0].mxu0
  %2760 = vmatprep.mubr.f32.mxu0 0.0
  %v2761 = vand.u32 %v16, 4294901760
  %v2762 = vsub.f32 %v16, %v2761
  %v2763 = vand.u32 %v2762, 4294901760
  %2764 = vmatmul.mubr.f32.gmra.mrb[0].mxu0 %v2763
  %v2765 = vpop.f32.mrb[0].mxu0
  %v2766 = vadd.f32 %v2010, %v2765
  %v2767 = vpop.f32.mrb[0].mxu0
  %2768 = vmatprep.mubr.f32.mxu0 0.0
  %v2769 = vand.u32 %v17, 4294901760
  %v2770 = vsub.f32 %v17, %v2769
  %v2771 = vand.u32 %v2770, 4294901760
  %2772 = vmatmul.mubr.f32.gmra.mrb[0].mxu0 %v2771
  %v2773 = vpop.f32.mrb[0].mxu0
  %v2774 = vadd.f32 %v2017, %v2773
  %v2775 = vpop.f32.mrb[0].mxu0
  %2776 = vmatprep.mubr.f32.mxu0 0.0
  %v2777 = vand.u32 %v18, 4294901760
  %v2778 = vsub.f32 %v18, %v2777
  %v2779 = vand.u32 %v2778, 4294901760
  %2780 = vmatmul.mubr.f32.gmra.mrb[0].mxu0 %v2779
  %v2781 = vpop.f32.mrb[0].mxu0
  %v2782 = vadd.f32 %v2024, %v2781
  %v2783 = vpop.f32.mrb[0].mxu0
  %2784 = vmatprep.mubr.f32.mxu0 0.0
  %v2785 = vand.u32 %v19, 4294901760
  %v2786 = vsub.f32 %v19, %v2785
  %v2787 = vand.u32 %v2786, 4294901760
  %2788 = vmatmul.mubr.f32.gmra.mrb[0].mxu0 %v2787
  %v2789 = vpop.f32.mrb[0].mxu0
  %v2790 = vadd.f32 %v2031, %v2789
  %v2791 = vpop.f32.mrb[0].mxu0
  %2792 = vmatprep.mubr.f32.mxu0 0.0
  %v2793 = vand.u32 %v20, 4294901760
  %v2794 = vsub.f32 %v20, %v2793
  %v2795 = vand.u32 %v2794, 4294901760
  %2796 = vmatmul.mubr.f32.gmra.mrb[0].mxu0 %v2795
  %v2797 = vpop.f32.mrb[0].mxu0
  %v2798 = vadd.f32 %v2038, %v2797
  %v2799 = vpop.f32.mrb[0].mxu0
  %2800 = vmatprep.mubr.f32.mxu0 0.0
  %v2801 = vand.u32 %v21, 4294901760
  %v2802 = vsub.f32 %v21, %v2801
  %v2803 = vand.u32 %v2802, 4294901760
  %2804 = vmatmul.mubr.f32.gmra.mrb[0].mxu0 %v2803
  %v2805 = vpop.f32.mrb[0].mxu0
  %v2806 = vadd.f32 %v2045, %v2805
  %v2807 = vpop.f32.mrb[0].mxu0
  %2808 = vmatprep.mubr.f32.mxu0 0.0
  %v2809 = vand.u32 %v22, 4294901760
  %v2810 = vsub.f32 %v22, %v2809
  %v2811 = vand.u32 %v2810, 4294901760
  %2812 = vmatmul.mubr.f32.gmra.mrb[0].mxu0 %v2811
  %v2813 = vpop.f32.mrb[0].mxu0
  %v2814 = vadd.f32 %v2052, %v2813
  %v2815 = vpop.f32.mrb[0].mxu0
  %2816 = vmatprep.mubr.f32.mxu0 0.0
  %v2817 = vand.u32 %v23, 4294901760
  %v2818 = vsub.f32 %v23, %v2817
  %v2819 = vand.u32 %v2818, 4294901760
  %2820 = vmatmul.mubr.f32.gmra.mrb[0].mxu0 %v2819
  %v2821 = vpop.f32.mrb[0].mxu0
  %v2822 = vadd.f32 %v2059, %v2821
  %v2823 = vpop.f32.mrb[0].mxu0
  %2824 = vmatprep.mubr.f32.mxu0 0.0
  %v2825 = vand.u32 %v24, 4294901760
  %v2826 = vsub.f32 %v24, %v2825
  %v2827 = vand.u32 %v2826, 4294901760
  %2828 = vmatmul.mubr.f32.gmra.mrb[0].mxu0 %v2827
  %v2829 = vpop.f32.mrb[0].mxu0
  %v2830 = vadd.f32 %v2066, %v2829
  %v2831 = vpop.f32.mrb[0].mxu0
  %2832 = vmatprep.mubr.f32.mxu0 0.0
  %v2833 = vand.u32 %v25, 4294901760
  %v2834 = vsub.f32 %v25, %v2833
  %v2835 = vand.u32 %v2834, 4294901760
  %2836 = vmatmul.mubr.f32.gmra.mrb[0].mxu0 %v2835
  %v2837 = vpop.f32.mrb[0].mxu0
  %v2838 = vadd.f32 %v2073, %v2837
  %v2839 = vpop.f32.mrb[0].mxu0
  %2840 = vmatprep.mubr.f32.mxu0 0.0
  %v2841 = vand.u32 %v26, 4294901760
  %v2842 = vsub.f32 %v26, %v2841
  %v2843 = vand.u32 %v2842, 4294901760
  %2844 = vmatmul.mubr.f32.gmra.mrb[0].mxu0 %v2843
  %v2845 = vpop.f32.mrb[0].mxu0
  %v2846 = vadd.f32 %v2080, %v2845
  %v2847 = vpop.f32.mrb[0].mxu0
  %2848 = vmatprep.mubr.f32.mxu0 0.0
  %v2849 = vand.u32 %v27, 4294901760
  %v2850 = vsub.f32 %v27, %v2849
  %v2851 = vand.u32 %v2850, 4294901760
  %2852 = vmatmul.mubr.f32.gmra.mrb[0].mxu0 %v2851
  %v2853 = vpop.f32.mrb[0].mxu0
  %v2854 = vadd.f32 %v2087, %v2853
  %v2855 = vpop.f32.mrb[0].mxu0
  %2856 = vmatprep.mubr.f32.mxu0 0.0
  %v2857 = vand.u32 %v28, 4294901760
  %v2858 = vsub.f32 %v28, %v2857
  %v2859 = vand.u32 %v2858, 4294901760
  %2860 = vmatmul.mubr.f32.gmra.mrb[0].mxu0 %v2859
  %v2861 = vpop.f32.mrb[0].mxu0
  %v2862 = vadd.f32 %v2094, %v2861
  %v2863 = vpop.f32.mrb[0].mxu0
  %2864 = vmatprep.mubr.f32.mxu0 0.0
  %v2865 = vand.u32 %v29, 4294901760
  %v2866 = vsub.f32 %v29, %v2865
  %v2867 = vand.u32 %v2866, 4294901760
  %2868 = vmatmul.mubr.f32.gmra.mrb[0].mxu0 %v2867
  %v2869 = vpop.f32.mrb[0].mxu0
  %v2870 = vadd.f32 %v2101, %v2869
  %v2871 = vpop.f32.mrb[0].mxu0
  %2872 = vmatprep.mubr.f32.mxu0 0.0
  %v2873 = vand.u32 %v30, 4294901760
  %v2874 = vsub.f32 %v30, %v2873
  %v2875 = vand.u32 %v2874, 4294901760
  %2876 = vmatmul.mubr.f32.gmra.mrb[0].mxu0 %v2875
  %v2877 = vpop.f32.mrb[0].mxu0
  %v2878 = vadd.f32 %v2108, %v2877
  %v2879 = vpop.f32.mrb[0].mxu0
  %2880 = vmatprep.mubr.f32.mxu0 0.0
  %v2881 = vand.u32 %v31, 4294901760
  %v2882 = vsub.f32 %v31, %v2881
  %v2883 = vand.u32 %v2882, 4294901760
  %2884 = vmatmul.mubr.f32.gmra.mrb[0].mxu0 %v2883
  %v2885 = vpop.f32.mrb[0].mxu0
  %v2886 = vadd.f32 %v2115, %v2885
  %v2887 = vpop.f32.mrb[0].mxu0
  %2888 = vmatprep.mubr.f32.mxu0 0.0
  %v2889 = vand.u32 %v32, 4294901760
  %v2890 = vsub.f32 %v32, %v2889
  %v2891 = vand.u32 %v2890, 4294901760
  %2892 = vmatmul.mubr.f32.gmra.mrb[0].mxu0 %v2891
  %v2893 = vpop.f32.mrb[0].mxu0
  %v2894 = vadd.f32 %v2122, %v2893
  %v2895 = vpop.f32.mrb[0].mxu0
  %2896 = vmatprep.mubr.f32.mxu0 0.0
  %v2897 = vand.u32 %v33, 4294901760
  %v2898 = vsub.f32 %v33, %v2897
  %v2899 = vand.u32 %v2898, 4294901760
  %2900 = vmatmul.mubr.f32.gmra.mrb[0].mxu0 %v2899
  %v2901 = vpop.f32.mrb[0].mxu0
  %v2902 = vadd.f32 %v2129, %v2901
  %v2903 = vpop.f32.mrb[0].mxu0
  %2904 = vmatprep.mubr.f32.mxu0 0.0
  %v2905 = vand.u32 %v34, 4294901760
  %v2906 = vsub.f32 %v34, %v2905
  %v2907 = vand.u32 %v2906, 4294901760
  %2908 = vmatmul.mubr.f32.gmra.mrb[0].mxu0 %v2907
  %v2909 = vpop.f32.mrb[0].mxu0
  %v2910 = vadd.f32 %v2136, %v2909
  %v2911 = vpop.f32.mrb[0].mxu0
  %2912 = vmatprep.mubr.f32.mxu0 0.0
  %v2913 = vand.u32 %v35, 4294901760
  %v2914 = vsub.f32 %v35, %v2913
  %v2915 = vand.u32 %v2914, 4294901760
  %2916 = vmatmul.mubr.f32.gmra.mrb[0].mxu0 %v2915
  %v2917 = vpop.f32.mrb[0].mxu0
  %v2918 = vadd.f32 %v2143, %v2917
  %v2919 = vpop.f32.mrb[0].mxu0
  %2920 = vmatprep.mubr.f32.mxu0 0.0
  %v2921 = vand.u32 %v36, 4294901760
  %v2922 = vsub.f32 %v36, %v2921
  %v2923 = vand.u32 %v2922, 4294901760
  %2924 = vmatmul.mubr.f32.gmra.mrb[0].mxu0 %v2923
  %v2925 = vpop.f32.mrb[0].mxu0
  %v2926 = vadd.f32 %v2150, %v2925
  %v2927 = vpop.f32.mrb[0].mxu0
  %2928 = vmatprep.mubr.f32.mxu0 0.0
  %v2929 = vand.u32 %v37, 4294901760
  %v2930 = vsub.f32 %v37, %v2929
  %v2931 = vand.u32 %v2930, 4294901760
  %2932 = vmatmul.mubr.f32.gmra.mrb[0].mxu0 %v2931
  %v2933 = vpop.f32.mrb[0].mxu0
  %v2934 = vadd.f32 %v2157, %v2933
  %v2935 = vpop.f32.mrb[0].mxu0
  %2936 = vmatprep.mubr.f32.mxu0 0.0
  %v2937 = vand.u32 %v38, 4294901760
  %v2938 = vsub.f32 %v38, %v2937
  %v2939 = vand.u32 %v2938, 4294901760
  %2940 = vmatmul.mubr.f32.gmra.mrb[0].mxu0 %v2939
  %v2941 = vpop.f32.mrb[0].mxu0
  %v2942 = vadd.f32 %v2164, %v2941
  %v2943 = vpop.f32.mrb[0].mxu0
  %2944 = vmatprep.mubr.f32.mxu0 0.0
  %v2945 = vand.u32 %v39, 4294901760
  %v2946 = vsub.f32 %v39, %v2945
  %v2947 = vand.u32 %v2946, 4294901760
  %2948 = vmatmul.mubr.f32.gmra.mrb[0].mxu0 %v2947
  %v2949 = vpop.f32.mrb[0].mxu0
  %v2950 = vadd.f32 %v2171, %v2949
  %v2951 = vpop.f32.mrb[0].mxu0
  %2952 = vmatprep.mubr.f32.mxu0 0.0
  %v2953 = vand.u32 %v40, 4294901760
  %v2954 = vsub.f32 %v40, %v2953
  %v2955 = vand.u32 %v2954, 4294901760
  %2956 = vmatmul.mubr.f32.gmra.mrb[0].mxu0 %v2955
  %v2957 = vpop.f32.mrb[0].mxu0
  %v2958 = vadd.f32 %v2178, %v2957
  %v2959 = vpop.f32.mrb[0].mxu0
  %2960 = vmatprep.mubr.f32.mxu0 0.0
  %v2961 = vand.u32 %v41, 4294901760
  %v2962 = vsub.f32 %v41, %v2961
  %v2963 = vand.u32 %v2962, 4294901760
  %2964 = vmatmul.mubr.f32.gmra.mrb[0].mxu0 %v2963
  %v2965 = vpop.f32.mrb[0].mxu0
  %v2966 = vadd.f32 %v2185, %v2965
  %v2967 = vpop.f32.mrb[0].mxu0
  %2968 = vmatprep.mubr.f32.mxu0 0.0
  %v2969 = vand.u32 %v42, 4294901760
  %v2970 = vsub.f32 %v42, %v2969
  %v2971 = vand.u32 %v2970, 4294901760
  %2972 = vmatmul.mubr.f32.gmra.mrb[0].mxu0 %v2971
  %v2973 = vpop.f32.mrb[0].mxu0
  %v2974 = vadd.f32 %v2192, %v2973
  %v2975 = vpop.f32.mrb[0].mxu0
  %2976 = vmatprep.mubr.f32.mxu0 0.0
  %v2977 = vand.u32 %v43, 4294901760
  %v2978 = vsub.f32 %v43, %v2977
  %v2979 = vand.u32 %v2978, 4294901760
  %2980 = vmatmul.mubr.f32.gmra.mrb[0].mxu0 %v2979
  %v2981 = vpop.f32.mrb[0].mxu0
  %v2982 = vadd.f32 %v2199, %v2981
  %v2983 = vpop.f32.mrb[0].mxu0
  %2984 = vmatprep.mubr.f32.mxu0 0.0
  %v2985 = vand.u32 %v44, 4294901760
  %v2986 = vsub.f32 %v44, %v2985
  %v2987 = vand.u32 %v2986, 4294901760
  %2988 = vmatmul.mubr.f32.gmra.mrb[0].mxu0 %v2987
  %v2989 = vpop.f32.mrb[0].mxu0
  %v2990 = vadd.f32 %v2206, %v2989
  %v2991 = vpop.f32.mrb[0].mxu0
  %2992 = vmatprep.mubr.f32.mxu0 0.0
  %v2993 = vand.u32 %v45, 4294901760
  %v2994 = vsub.f32 %v45, %v2993
  %v2995 = vand.u32 %v2994, 4294901760
  %2996 = vmatmul.mubr.f32.gmra.mrb[0].mxu0 %v2995
  %v2997 = vpop.f32.mrb[0].mxu0
  %v2998 = vadd.f32 %v2213, %v2997
  %v2999 = vpop.f32.mrb[0].mxu0
  %3000 = vmatprep.mubr.f32.mxu0 0.0
  %v3001 = vand.u32 %v46, 4294901760
  %v3002 = vsub.f32 %v46, %v3001
  %v3003 = vand.u32 %v3002, 4294901760
  %3004 = vmatmul.mubr.f32.gmra.mrb[0].mxu0 %v3003
  %v3005 = vpop.f32.mrb[0].mxu0
  %v3006 = vadd.f32 %v2220, %v3005
  %v3007 = vpop.f32.mrb[0].mxu0
  %3008 = vmatprep.mubr.f32.mxu0 0.0
  %v3009 = vand.u32 %v47, 4294901760
  %v3010 = vsub.f32 %v47, %v3009
  %v3011 = vand.u32 %v3010, 4294901760
  %3012 = vmatmul.mubr.f32.gmra.mrb[0].mxu0 %v3011
  %v3013 = vpop.f32.mrb[0].mxu0
  %v3014 = vadd.f32 %v2227, %v3013
  %v3015 = vpop.f32.mrb[0].mxu0
  %3016 = vmatprep.mubr.f32.mxu0 0.0
  %v3017 = vand.u32 %v48, 4294901760
  %v3018 = vsub.f32 %v48, %v3017
  %v3019 = vand.u32 %v3018, 4294901760
  %3020 = vmatmul.mubr.f32.gmra.mrb[0].mxu0 %v3019
  %v3021 = vpop.f32.mrb[0].mxu0
  %v3022 = vadd.f32 %v2234, %v3021
  %v3023 = vpop.f32.mrb[0].mxu0
  %3024 = vmatprep.mubr.f32.mxu0 0.0
  %v3025 = vand.u32 %v49, 4294901760
  %v3026 = vsub.f32 %v49, %v3025
  %v3027 = vand.u32 %v3026, 4294901760
  %3028 = vmatmul.mubr.f32.gmra.mrb[0].mxu0 %v3027
  %v3029 = vpop.f32.mrb[0].mxu0
  %v3030 = vadd.f32 %v2241, %v3029
  %v3031 = vpop.f32.mrb[0].mxu0
  %3032 = vmatprep.mubr.f32.mxu0 0.0
  %v3033 = vand.u32 %v50, 4294901760
  %v3034 = vsub.f32 %v50, %v3033
  %v3035 = vand.u32 %v3034, 4294901760
  %3036 = vmatmul.mubr.f32.gmra.mrb[0].mxu0 %v3035
  %v3037 = vpop.f32.mrb[0].mxu0
  %v3038 = vadd.f32 %v2248, %v3037
  %v3039 = vpop.f32.mrb[0].mxu0
  %3040 = vmatprep.mubr.f32.mxu0 0.0
  %v3041 = vand.u32 %v51, 4294901760
  %v3042 = vsub.f32 %v51, %v3041
  %v3043 = vand.u32 %v3042, 4294901760
  %3044 = vmatmul.mubr.f32.gmra.mrb[0].mxu0 %v3043
  %v3045 = vpop.f32.mrb[0].mxu0
  %v3046 = vadd.f32 %v2255, %v3045
  %v3047 = vpop.f32.mrb[0].mxu0
  %3048 = vmatprep.mubr.f32.mxu0 0.0
  %v3049 = vand.u32 %v52, 4294901760
  %v3050 = vsub.f32 %v52, %v3049
  %v3051 = vand.u32 %v3050, 4294901760
  %3052 = vmatmul.mubr.f32.gmra.mrb[0].mxu0 %v3051
  %v3053 = vpop.f32.mrb[0].mxu0
  %v3054 = vadd.f32 %v2262, %v3053
  %v3055 = vpop.f32.mrb[0].mxu0
  %3056 = vmatprep.mubr.f32.mxu0 0.0
  %v3057 = vand.u32 %v53, 4294901760
  %v3058 = vsub.f32 %v53, %v3057
  %v3059 = vand.u32 %v3058, 4294901760
  %3060 = vmatmul.mubr.f32.gmra.mrb[0].mxu0 %v3059
  %v3061 = vpop.f32.mrb[0].mxu0
  %v3062 = vadd.f32 %v2269, %v3061
  %v3063 = vpop.f32.mrb[0].mxu0
  %3064 = vmatprep.mubr.f32.mxu0 0.0
  %v3065 = vand.u32 %v54, 4294901760
  %v3066 = vsub.f32 %v54, %v3065
  %v3067 = vand.u32 %v3066, 4294901760
  %3068 = vmatmul.mubr.f32.gmra.mrb[0].mxu0 %v3067
  %v3069 = vpop.f32.mrb[0].mxu0
  %v3070 = vadd.f32 %v2276, %v3069
  %v3071 = vpop.f32.mrb[0].mxu0
  %3072 = vmatprep.mubr.f32.mxu0 0.0
  %v3073 = vand.u32 %v55, 4294901760
  %v3074 = vsub.f32 %v55, %v3073
  %v3075 = vand.u32 %v3074, 4294901760
  %3076 = vmatmul.mubr.f32.gmra.mrb[0].mxu0 %v3075
  %v3077 = vpop.f32.mrb[0].mxu0
  %v3078 = vadd.f32 %v2283, %v3077
  %v3079 = vpop.f32.mrb[0].mxu0
  %3080 = vmatprep.mubr.f32.mxu0 0.0
  %v3081 = vand.u32 %v56, 4294901760
  %v3082 = vsub.f32 %v56, %v3081
  %v3083 = vand.u32 %v3082, 4294901760
  %3084 = vmatmul.mubr.f32.gmra.mrb[0].mxu0 %v3083
  %v3085 = vpop.f32.mrb[0].mxu0
  %v3086 = vadd.f32 %v2290, %v3085
  %v3087 = vpop.f32.mrb[0].mxu0
  %3088 = vmatprep.mubr.f32.mxu0 0.0
  %v3089 = vand.u32 %v57, 4294901760
  %v3090 = vsub.f32 %v57, %v3089
  %v3091 = vand.u32 %v3090, 4294901760
  %3092 = vmatmul.mubr.f32.gmra.mrb[0].mxu0 %v3091
  %v3093 = vpop.f32.mrb[0].mxu0
  %v3094 = vadd.f32 %v2297, %v3093
  %v3095 = vpop.f32.mrb[0].mxu0
  %3096 = vmatprep.mubr.f32.mxu0 0.0
  %v3097 = vand.u32 %v58, 4294901760
  %v3098 = vsub.f32 %v58, %v3097
  %v3099 = vand.u32 %v3098, 4294901760
  %3100 = vmatmul.mubr.f32.gmra.mrb[0].mxu0 %v3099
  %v3101 = vpop.f32.mrb[0].mxu0
  %v3102 = vadd.f32 %v2304, %v3101
  %v3103 = vpop.f32.mrb[0].mxu0
  %3104 = vmatprep.mubr.f32.mxu0 0.0
  %v3105 = vand.u32 %v59, 4294901760
  %v3106 = vsub.f32 %v59, %v3105
  %v3107 = vand.u32 %v3106, 4294901760
  %3108 = vmatmul.mubr.f32.gmra.mrb[0].mxu0 %v3107
  %v3109 = vpop.f32.mrb[0].mxu0
  %v3110 = vadd.f32 %v2311, %v3109
  %v3111 = vpop.f32.mrb[0].mxu0
  %3112 = vmatprep.mubr.f32.mxu0 0.0
  %v3113 = vand.u32 %v60, 4294901760
  %v3114 = vsub.f32 %v60, %v3113
  %v3115 = vand.u32 %v3114, 4294901760
  %3116 = vmatmul.mubr.f32.gmra.mrb[0].mxu0 %v3115
  %v3117 = vpop.f32.mrb[0].mxu0
  %v3118 = vadd.f32 %v2318, %v3117
  %v3119 = vpop.f32.mrb[0].mxu0
  %3120 = vmatprep.mubr.f32.mxu0 0.0
  %v3121 = vand.u32 %v61, 4294901760
  %v3122 = vsub.f32 %v61, %v3121
  %v3123 = vand.u32 %v3122, 4294901760
  %3124 = vmatmul.mubr.f32.gmra.mrb[0].mxu0 %v3123
  %v3125 = vpop.f32.mrb[0].mxu0
  %v3126 = vadd.f32 %v2325, %v3125
  %v3127 = vpop.f32.mrb[0].mxu0
  %3128 = vmatprep.mubr.f32.mxu0 0.0
  %v3129 = vand.u32 %v62, 4294901760
  %v3130 = vsub.f32 %v62, %v3129
  %v3131 = vand.u32 %v3130, 4294901760
  %3132 = vmatmul.mubr.f32.gmra.mrb[0].mxu0 %v3131
  %v3133 = vpop.f32.mrb[0].mxu0
  %v3134 = vadd.f32 %v2332, %v3133
  %v3135 = vpop.f32.mrb[0].mxu0
  %3136 = vmatprep.mubr.f32.mxu0 0.0
  %v3137 = vand.u32 %v63, 4294901760
  %v3138 = vsub.f32 %v63, %v3137
  %v3139 = vand.u32 %v3138, 4294901760
  %3140 = vmatmul.mubr.f32.gmra.mrb[0].mxu0 %v3139
  %v3141 = vpop.f32.mrb[0].mxu0
  %v3142 = vadd.f32 %v2339, %v3141
  %v3143 = vpop.f32.mrb[0].mxu0
  %3144 = vmatprep.mubr.f32.mxu0 0.0
  %v3145 = vand.u32 %v64, 4294901760
  %v3146 = vsub.f32 %v64, %v3145
  %v3147 = vand.u32 %v3146, 4294901760
  %3148 = vmatmul.mubr.f32.gmra.mrb[0].mxu0 %v3147
  %v3149 = vpop.f32.mrb[0].mxu0
  %v3150 = vadd.f32 %v2346, %v3149
  %v3151 = vpop.f32.mrb[0].mxu0
  %3152 = vmatprep.mubr.f32.mxu0 0.0
  %v3153 = vand.u32 %v65, 4294901760
  %v3154 = vsub.f32 %v65, %v3153
  %v3155 = vand.u32 %v3154, 4294901760
  %3156 = vmatmul.mubr.f32.gmra.mrb[0].mxu0 %v3155
  %v3157 = vpop.f32.mrb[0].mxu0
  %v3158 = vadd.f32 %v2353, %v3157
  %v3159 = vpop.f32.mrb[0].mxu0
  %3160 = vmatprep.mubr.f32.mxu0 0.0
  %v3161 = vand.u32 %v66, 4294901760
  %v3162 = vsub.f32 %v66, %v3161
  %v3163 = vand.u32 %v3162, 4294901760
  %3164 = vmatmul.mubr.f32.gmra.mrb[0].mxu0 %v3163
  %v3165 = vpop.f32.mrb[0].mxu0
  %v3166 = vadd.f32 %v2360, %v3165
  %v3167 = vpop.f32.mrb[0].mxu0
  %3168 = vmatprep.mubr.f32.mxu0 0.0
  %v3169 = vand.u32 %v67, 4294901760
  %v3170 = vsub.f32 %v67, %v3169
  %v3171 = vand.u32 %v3170, 4294901760
  %3172 = vmatmul.mubr.f32.gmra.mrb[0].mxu0 %v3171
  %v3173 = vpop.f32.mrb[0].mxu0
  %v3174 = vadd.f32 %v2367, %v3173
  %v3175 = vpop.f32.mrb[0].mxu0
  %3176 = vmatprep.mubr.f32.mxu0 0.0
  %v3177 = vand.u32 %v68, 4294901760
  %v3178 = vsub.f32 %v68, %v3177
  %v3179 = vand.u32 %v3178, 4294901760
  %3180 = vmatmul.mubr.f32.gmra.mrb[0].mxu0 %v3179
  %v3181 = vpop.f32.mrb[0].mxu0
  %v3182 = vadd.f32 %v2374, %v3181
  %v3183 = vpop.f32.mrb[0].mxu0
  %3184 = vmatprep.mubr.f32.mxu0 0.0
  %v3185 = vand.u32 %v69, 4294901760
  %v3186 = vsub.f32 %v69, %v3185
  %v3187 = vand.u32 %v3186, 4294901760
  %3188 = vmatmul.mubr.f32.gmra.mrb[0].mxu0 %v3187
  %v3189 = vpop.f32.mrb[0].mxu0
  %v3190 = vadd.f32 %v2381, %v3189
  %v3191 = vpop.f32.mrb[0].mxu0
  %3192 = vmatprep.mubr.f32.mxu0 0.0
  %v3193 = vand.u32 %v70, 4294901760
  %v3194 = vsub.f32 %v70, %v3193
  %v3195 = vand.u32 %v3194, 4294901760
  %3196 = vmatmul.mubr.f32.gmra.mrb[0].mxu0 %v3195
  %v3197 = vpop.f32.mrb[0].mxu0
  %v3198 = vadd.f32 %v2388, %v3197
  %v3199 = vpop.f32.mrb[0].mxu0
  %3200 = vmatprep.mubr.f32.mxu0 0.0
  %v3201 = vand.u32 %v71, 4294901760
  %v3202 = vsub.f32 %v71, %v3201
  %v3203 = vand.u32 %v3202, 4294901760
  %3204 = vmatmul.mubr.f32.gmra.mrb[0].mxu0 %v3203
  %v3205 = vpop.f32.mrb[0].mxu0
  %v3206 = vadd.f32 %v2395, %v3205
  %v3207 = vpop.f32.mrb[0].mxu0
  %3208 = vmatprep.mubr.f32.mxu0 0.0
  %v3209 = vand.u32 %v72, 4294901760
  %v3210 = vsub.f32 %v72, %v3209
  %v3211 = vand.u32 %v3210, 4294901760
  %3212 = vmatmul.mubr.f32.gmra.mrb[0].mxu0 %v3211
  %v3213 = vpop.f32.mrb[0].mxu0
  %v3214 = vadd.f32 %v2402, %v3213
  %v3215 = vpop.f32.mrb[0].mxu0
  %3216 = vmatprep.mubr.f32.mxu0 0.0
  %v3217 = vand.u32 %v73, 4294901760
  %v3218 = vsub.f32 %v73, %v3217
  %v3219 = vand.u32 %v3218, 4294901760
  %3220 = vmatmul.mubr.f32.gmra.mrb[0].mxu0 %v3219
  %v3221 = vpop.f32.mrb[0].mxu0
  %v3222 = vadd.f32 %v2409, %v3221
  %v3223 = vpop.f32.mrb[0].mxu0
  %3224 = vmatprep.mubr.f32.mxu0 0.0
  %v3225 = vand.u32 %v74, 4294901760
  %v3226 = vsub.f32 %v74, %v3225
  %v3227 = vand.u32 %v3226, 4294901760
  %3228 = vmatmul.mubr.f32.gmra.mrb[0].mxu0 %v3227
  %v3229 = vpop.f32.mrb[0].mxu0
  %v3230 = vadd.f32 %v2416, %v3229
  %v3231 = vpop.f32.mrb[0].mxu0
  %3232 = vmatprep.mubr.f32.mxu0 0.0
  %v3233 = vand.u32 %v75, 4294901760
  %v3234 = vsub.f32 %v75, %v3233
  %v3235 = vand.u32 %v3234, 4294901760
  %3236 = vmatmul.mubr.f32.gmra.mrb[0].mxu0 %v3235
  %v3237 = vpop.f32.mrb[0].mxu0
  %v3238 = vadd.f32 %v2423, %v3237
  %v3239 = vpop.f32.mrb[0].mxu0
  %3240 = vmatprep.mubr.f32.mxu0 0.0
  %v3241 = vand.u32 %v76, 4294901760
  %v3242 = vsub.f32 %v76, %v3241
  %v3243 = vand.u32 %v3242, 4294901760
  %3244 = vmatmul.mubr.f32.gmra.mrb[0].mxu0 %v3243
  %v3245 = vpop.f32.mrb[0].mxu0
  %v3246 = vadd.f32 %v2430, %v3245
  %v3247 = vpop.f32.mrb[0].mxu0
  %3248 = vmatprep.mubr.f32.mxu0 0.0
  %v3249 = vand.u32 %v77, 4294901760
  %v3250 = vsub.f32 %v77, %v3249
  %v3251 = vand.u32 %v3250, 4294901760
  %3252 = vmatmul.mubr.f32.gmra.mrb[0].mxu0 %v3251
  %v3253 = vpop.f32.mrb[0].mxu0
  %v3254 = vadd.f32 %v2437, %v3253
  %v3255 = vpop.f32.mrb[0].mxu0
  %3256 = vmatprep.mubr.f32.mxu0 0.0
  %v3257 = vand.u32 %v78, 4294901760
  %v3258 = vsub.f32 %v78, %v3257
  %v3259 = vand.u32 %v3258, 4294901760
  %3260 = vmatmul.mubr.f32.gmra.mrb[0].mxu0 %v3259
  %v3261 = vpop.f32.mrb[0].mxu0
  %v3262 = vadd.f32 %v2444, %v3261
  %v3263 = vpop.f32.mrb[0].mxu0
  %3264 = vmatprep.mubr.f32.mxu0 0.0
  %v3265 = vand.u32 %v79, 4294901760
  %v3266 = vsub.f32 %v79, %v3265
  %v3267 = vand.u32 %v3266, 4294901760
  %3268 = vmatmul.mubr.f32.gmra.mrb[0].mxu0 %v3267
  %v3269 = vpop.f32.mrb[0].mxu0
  %v3270 = vadd.f32 %v2451, %v3269
  %v3271 = vpop.f32.mrb[0].mxu0
  %3272 = vmatprep.mubr.f32.mxu0 0.0
  %v3273 = vand.u32 %v80, 4294901760
  %v3274 = vsub.f32 %v80, %v3273
  %v3275 = vand.u32 %v3274, 4294901760
  %3276 = vmatmul.mubr.f32.gmra.mrb[0].mxu0 %v3275
  %v3277 = vpop.f32.mrb[0].mxu0
  %v3278 = vadd.f32 %v2458, %v3277
  %v3279 = vpop.f32.mrb[0].mxu0
  %3280 = vmatprep.mubr.f32.mxu0 0.0
  %v3281 = vand.u32 %v81, 4294901760
  %v3282 = vsub.f32 %v81, %v3281
  %v3283 = vand.u32 %v3282, 4294901760
  %3284 = vmatmul.mubr.f32.gmra.mrb[0].mxu0 %v3283
  %v3285 = vpop.f32.mrb[0].mxu0
  %v3286 = vadd.f32 %v2465, %v3285
  %v3287 = vpop.f32.mrb[0].mxu0
  %3288 = vmatprep.mubr.f32.mxu0 0.0
  %v3289 = vand.u32 %v82, 4294901760
  %v3290 = vsub.f32 %v82, %v3289
  %v3291 = vand.u32 %v3290, 4294901760
  %3292 = vmatmul.mubr.f32.gmra.mrb[0].mxu0 %v3291
  %v3293 = vpop.f32.mrb[0].mxu0
  %v3294 = vadd.f32 %v2472, %v3293
  %v3295 = vpop.f32.mrb[0].mxu0
  %3296 = vmatprep.mubr.f32.mxu0 0.0
  %v3297 = vand.u32 %v83, 4294901760
  %v3298 = vsub.f32 %v83, %v3297
  %v3299 = vand.u32 %v3298, 4294901760
  %3300 = vmatmul.mubr.f32.gmra.mrb[0].mxu0 %v3299
  %v3301 = vpop.f32.mrb[0].mxu0
  %v3302 = vadd.f32 %v2479, %v3301
  %v3303 = vpop.f32.mrb[0].mxu0
  %3304 = vmatprep.mubr.f32.mxu0 0.0
  %v3305 = vand.u32 %v84, 4294901760
  %v3306 = vsub.f32 %v84, %v3305
  %v3307 = vand.u32 %v3306, 4294901760
  %3308 = vmatmul.mubr.f32.gmra.mrb[0].mxu0 %v3307
  %v3309 = vpop.f32.mrb[0].mxu0
  %v3310 = vadd.f32 %v2486, %v3309
  %v3311 = vpop.f32.mrb[0].mxu0
  %3312 = vmatprep.mubr.f32.mxu0 0.0
  %v3313 = vand.u32 %v85, 4294901760
  %v3314 = vsub.f32 %v85, %v3313
  %v3315 = vand.u32 %v3314, 4294901760
  %3316 = vmatmul.mubr.f32.gmra.mrb[0].mxu0 %v3315
  %v3317 = vpop.f32.mrb[0].mxu0
  %v3318 = vadd.f32 %v2493, %v3317
  %v3319 = vpop.f32.mrb[0].mxu0
  %3320 = vmatprep.mubr.f32.mxu0 0.0
  %v3321 = vand.u32 %v86, 4294901760
  %v3322 = vsub.f32 %v86, %v3321
  %v3323 = vand.u32 %v3322, 4294901760
  %3324 = vmatmul.mubr.f32.gmra.mrb[0].mxu0 %v3323
  %v3325 = vpop.f32.mrb[0].mxu0
  %v3326 = vadd.f32 %v2500, %v3325
  %v3327 = vpop.f32.mrb[0].mxu0
  %3328 = vmatprep.mubr.f32.mxu0 0.0
  %v3329 = vand.u32 %v87, 4294901760
  %v3330 = vsub.f32 %v87, %v3329
  %v3331 = vand.u32 %v3330, 4294901760
  %3332 = vmatmul.mubr.f32.gmra.mrb[0].mxu0 %v3331
  %v3333 = vpop.f32.mrb[0].mxu0
  %v3334 = vadd.f32 %v2507, %v3333
  %v3335 = vpop.f32.mrb[0].mxu0
  %3336 = vmatprep.mubr.f32.mxu0 0.0
  %v3337 = vand.u32 %v88, 4294901760
  %v3338 = vsub.f32 %v88, %v3337
  %v3339 = vand.u32 %v3338, 4294901760
  %3340 = vmatmul.mubr.f32.gmra.mrb[0].mxu0 %v3339
  %v3341 = vpop.f32.mrb[0].mxu0
  %v3342 = vadd.f32 %v2514, %v3341
  %v3343 = vpop.f32.mrb[0].mxu0
  %3344 = vmatprep.mubr.f32.mxu0 0.0
  %v3345 = vand.u32 %v89, 4294901760
  %v3346 = vsub.f32 %v89, %v3345
  %v3347 = vand.u32 %v3346, 4294901760
  %3348 = vmatmul.mubr.f32.gmra.mrb[0].mxu0 %v3347
  %v3349 = vpop.f32.mrb[0].mxu0
  %v3350 = vadd.f32 %v2521, %v3349
  %v3351 = vpop.f32.mrb[0].mxu0
  %3352 = vmatprep.mubr.f32.mxu0 0.0
  %v3353 = vand.u32 %v90, 4294901760
  %v3354 = vsub.f32 %v90, %v3353
  %v3355 = vand.u32 %v3354, 4294901760
  %3356 = vmatmul.mubr.f32.gmra.mrb[0].mxu0 %v3355
  %v3357 = vpop.f32.mrb[0].mxu0
  %v3358 = vadd.f32 %v2528, %v3357
  %v3359 = vpop.f32.mrb[0].mxu0
  %3360 = vmatprep.mubr.f32.mxu0 0.0
  %v3361 = vand.u32 %v91, 4294901760
  %v3362 = vsub.f32 %v91, %v3361
  %v3363 = vand.u32 %v3362, 4294901760
  %3364 = vmatmul.mubr.f32.gmra.mrb[0].mxu0 %v3363
  %v3365 = vpop.f32.mrb[0].mxu0
  %v3366 = vadd.f32 %v2535, %v3365
  %v3367 = vpop.f32.mrb[0].mxu0
  %3368 = vmatprep.mubr.f32.mxu0 0.0
  %v3369 = vand.u32 %v92, 4294901760
  %v3370 = vsub.f32 %v92, %v3369
  %v3371 = vand.u32 %v3370, 4294901760
  %3372 = vmatmul.mubr.f32.gmra.mrb[0].mxu0 %v3371
  %v3373 = vpop.f32.mrb[0].mxu0
  %v3374 = vadd.f32 %v2542, %v3373
  %v3375 = vpop.f32.mrb[0].mxu0
  %3376 = vmatprep.mubr.f32.mxu0 0.0
  %v3377 = vand.u32 %v93, 4294901760
  %v3378 = vsub.f32 %v93, %v3377
  %v3379 = vand.u32 %v3378, 4294901760
  %3380 = vmatmul.mubr.f32.gmra.mrb[0].mxu0 %v3379
  %v3381 = vpop.f32.mrb[0].mxu0
  %v3382 = vadd.f32 %v2549, %v3381
  %v3383 = vpop.f32.mrb[0].mxu0
  %3384 = vmatprep.mubr.f32.mxu0 0.0
  %v3385 = vand.u32 %v94, 4294901760
  %v3386 = vsub.f32 %v94, %v3385
  %v3387 = vand.u32 %v3386, 4294901760
  %3388 = vmatmul.mubr.f32.gmra.mrb[0].mxu0 %v3387
  %v3389 = vpop.f32.mrb[0].mxu0
  %v3390 = vadd.f32 %v2556, %v3389
  %v3391 = vpop.f32.mrb[0].mxu0
  %3392 = vmatprep.mubr.f32.mxu0 0.0
  %v3393 = vand.u32 %v95, 4294901760
  %v3394 = vsub.f32 %v95, %v3393
  %v3395 = vand.u32 %v3394, 4294901760
  %3396 = vmatmul.mubr.f32.gmra.mrb[0].mxu0 %v3395
  %v3397 = vpop.f32.mrb[0].mxu0
  %v3398 = vadd.f32 %v2563, %v3397
  %v3399 = vpop.f32.mrb[0].mxu0
  %3400 = vmatprep.mubr.f32.mxu0 0.0
  %v3401 = vand.u32 %v96, 4294901760
  %v3402 = vsub.f32 %v96, %v3401
  %v3403 = vand.u32 %v3402, 4294901760
  %3404 = vmatmul.mubr.f32.gmra.mrb[0].mxu0 %v3403
  %v3405 = vpop.f32.mrb[0].mxu0
  %v3406 = vadd.f32 %v2570, %v3405
  %v3407 = vpop.f32.mrb[0].mxu0
  %3408 = vmatprep.mubr.f32.mxu0 0.0
  %v3409 = vand.u32 %v97, 4294901760
  %v3410 = vsub.f32 %v97, %v3409
  %v3411 = vand.u32 %v3410, 4294901760
  %3412 = vmatmul.mubr.f32.gmra.mrb[0].mxu0 %v3411
  %v3413 = vpop.f32.mrb[0].mxu0
  %v3414 = vadd.f32 %v2577, %v3413
  %v3415 = vpop.f32.mrb[0].mxu0
  %3416 = vmatprep.mubr.f32.mxu0 0.0
  %v3417 = vand.u32 %v98, 4294901760
  %v3418 = vsub.f32 %v98, %v3417
  %v3419 = vand.u32 %v3418, 4294901760
  %3420 = vmatmul.mubr.f32.gmra.mrb[0].mxu0 %v3419
  %v3421 = vpop.f32.mrb[0].mxu0
  %v3422 = vadd.f32 %v2584, %v3421
  %v3423 = vpop.f32.mrb[0].mxu0
  %3424 = vmatprep.mubr.f32.mxu0 0.0
  %v3425 = vand.u32 %v99, 4294901760
  %v3426 = vsub.f32 %v99, %v3425
  %v3427 = vand.u32 %v3426, 4294901760
  %3428 = vmatmul.mubr.f32.gmra.mrb[0].mxu0 %v3427
  %v3429 = vpop.f32.mrb[0].mxu0
  %v3430 = vadd.f32 %v2591, %v3429
  %v3431 = vpop.f32.mrb[0].mxu0
  %3432 = vmatprep.mubr.f32.mxu0 0.0
  %v3433 = vand.u32 %v100, 4294901760
  %v3434 = vsub.f32 %v100, %v3433
  %v3435 = vand.u32 %v3434, 4294901760
  %3436 = vmatmul.mubr.f32.gmra.mrb[0].mxu0 %v3435
  %v3437 = vpop.f32.mrb[0].mxu0
  %v3438 = vadd.f32 %v2598, %v3437
  %v3439 = vpop.f32.mrb[0].mxu0
  %3440 = vmatprep.mubr.f32.mxu0 0.0
  %v3441 = vand.u32 %v101, 4294901760
  %v3442 = vsub.f32 %v101, %v3441
  %v3443 = vand.u32 %v3442, 4294901760
  %3444 = vmatmul.mubr.f32.gmra.mrb[0].mxu0 %v3443
  %v3445 = vpop.f32.mrb[0].mxu0
  %v3446 = vadd.f32 %v2605, %v3445
  %v3447 = vpop.f32.mrb[0].mxu0
  %3448 = vmatprep.mubr.f32.mxu0 0.0
  %v3449 = vand.u32 %v102, 4294901760
  %v3450 = vsub.f32 %v102, %v3449
  %v3451 = vand.u32 %v3450, 4294901760
  %3452 = vmatmul.mubr.f32.gmra.mrb[0].mxu0 %v3451
  %v3453 = vpop.f32.mrb[0].mxu0
  %v3454 = vadd.f32 %v2612, %v3453
  %v3455 = vpop.f32.mrb[0].mxu0
  %3456 = vmatprep.mubr.f32.mxu0 0.0
  %v3457 = vand.u32 %v103, 4294901760
  %v3458 = vsub.f32 %v103, %v3457
  %v3459 = vand.u32 %v3458, 4294901760
  %3460 = vmatmul.mubr.f32.gmra.mrb[0].mxu0 %v3459
  %v3461 = vpop.f32.mrb[0].mxu0
  %v3462 = vadd.f32 %v2619, %v3461
  %v3463 = vpop.f32.mrb[0].mxu0
  %3464 = vmatprep.mubr.f32.mxu0 0.0
  %v3465 = vand.u32 %v104, 4294901760
  %v3466 = vsub.f32 %v104, %v3465
  %v3467 = vand.u32 %v3466, 4294901760
  %3468 = vmatmul.mubr.f32.gmra.mrb[0].mxu0 %v3467
  %v3469 = vpop.f32.mrb[0].mxu0
  %v3470 = vadd.f32 %v2626, %v3469
  %v3471 = vpop.f32.mrb[0].mxu0
  %3472 = vmatprep.mubr.f32.mxu0 0.0
  %v3473 = vand.u32 %v105, 4294901760
  %v3474 = vsub.f32 %v105, %v3473
  %v3475 = vand.u32 %v3474, 4294901760
  %3476 = vmatmul.mubr.f32.gmra.mrb[0].mxu0 %v3475
  %v3477 = vpop.f32.mrb[0].mxu0
  %v3478 = vadd.f32 %v2633, %v3477
  %v3479 = vpop.f32.mrb[0].mxu0
  %3480 = vmatprep.mubr.f32.mxu0 0.0
  %v3481 = vand.u32 %v106, 4294901760
  %v3482 = vsub.f32 %v106, %v3481
  %v3483 = vand.u32 %v3482, 4294901760
  %3484 = vmatmul.mubr.f32.gmra.mrb[0].mxu0 %v3483
  %v3485 = vpop.f32.mrb[0].mxu0
  %v3486 = vadd.f32 %v2640, %v3485
  %v3487 = vpop.f32.mrb[0].mxu0
  %3488 = vmatprep.mubr.f32.mxu0 0.0
  %v3489 = vand.u32 %v107, 4294901760
  %v3490 = vsub.f32 %v107, %v3489
  %v3491 = vand.u32 %v3490, 4294901760
  %3492 = vmatmul.mubr.f32.gmra.mrb[0].mxu0 %v3491
  %v3493 = vpop.f32.mrb[0].mxu0
  %v3494 = vadd.f32 %v2647, %v3493
  %v3495 = vpop.f32.mrb[0].mxu0
  %3496 = vmatprep.mubr.f32.mxu0 0.0
  %v3497 = vand.u32 %v108, 4294901760
  %v3498 = vsub.f32 %v108, %v3497
  %v3499 = vand.u32 %v3498, 4294901760
  %3500 = vmatmul.mubr.f32.gmra.mrb[0].mxu0 %v3499
  %v3501 = vpop.f32.mrb[0].mxu0
  %v3502 = vadd.f32 %v2654, %v3501
  %v3503 = vpop.f32.mrb[0].mxu0
  %3504 = vmatprep.mubr.f32.mxu0 0.0
  %v3505 = vand.u32 %v109, 4294901760
  %v3506 = vsub.f32 %v109, %v3505
  %v3507 = vand.u32 %v3506, 4294901760
  %3508 = vmatmul.mubr.f32.gmra.mrb[0].mxu0 %v3507
  %v3509 = vpop.f32.mrb[0].mxu0
  %v3510 = vadd.f32 %v2661, %v3509
  %v3511 = vpop.f32.mrb[0].mxu0
  %3512 = vdwg.mxu0
  %3513 = vmatprep.subr.mxu0 0.0
  %v3514 = vand.u32 %v110, 4294901760
  %v3515 = vsub.f32 %v110, %v3514
  %v3516 = vand.u32 %v3515, 4294901760
  %3517 = vmatpush1.msra.mxu0 %v3516
  %3518 = vmatprep.subr.mxu0 0.0
  %v3519 = vand.u32 %v111, 4294901760
  %v3520 = vsub.f32 %v111, %v3519
  %v3521 = vand.u32 %v3520, 4294901760
  %3522 = vmatpush1.msra.mxu0 %v3521
  %3523 = vmatprep.subr.mxu0 0.0
  %v3524 = vand.u32 %v112, 4294901760
  %v3525 = vsub.f32 %v112, %v3524
  %v3526 = vand.u32 %v3525, 4294901760
  %3527 = vmatpush1.msra.mxu0 %v3526
  %3528 = vmatprep.subr.mxu0 0.0
  %v3529 = vand.u32 %v113, 4294901760
  %v3530 = vsub.f32 %v113, %v3529
  %v3531 = vand.u32 %v3530, 4294901760
  %3532 = vmatpush1.msra.mxu0 %v3531
  %3533 = vmatprep.subr.mxu0 0.0
  %v3534 = vand.u32 %v114, 4294901760
  %v3535 = vsub.f32 %v114, %v3534
  %v3536 = vand.u32 %v3535, 4294901760
  %3537 = vmatpush1.msra.mxu0 %v3536
  %3538 = vmatprep.subr.mxu0 0.0
  %v3539 = vand.u32 %v115, 4294901760
  %v3540 = vsub.f32 %v115, %v3539
  %v3541 = vand.u32 %v3540, 4294901760
  %3542 = vmatpush1.msra.mxu0 %v3541
  %3543 = vmatprep.subr.mxu0 0.0
  %v3544 = vand.u32 %v116, 4294901760
  %v3545 = vsub.f32 %v116, %v3544
  %v3546 = vand.u32 %v3545, 4294901760
  %3547 = vmatpush1.msra.mxu0 %v3546
  %3548 = vmatprep.subr.mxu0 0.0
  %v3549 = vand.u32 %v117, 4294901760
  %v3550 = vsub.f32 %v117, %v3549
  %v3551 = vand.u32 %v3550, 4294901760
  %3552 = vmatpush1.msra.mxu0 %v3551
  %3553 = vmatprep.subr.mxu0 0.0
  %v3554 = vand.u32 %v118, 4294901760
  %v3555 = vsub.f32 %v118, %v3554
  %v3556 = vand.u32 %v3555, 4294901760
  %3557 = vmatpush1.msra.mxu0 %v3556
  %3558 = vmatprep.subr.mxu0 0.0
  %v3559 = vand.u32 %v119, 4294901760
  %v3560 = vsub.f32 %v119, %v3559
  %v3561 = vand.u32 %v3560, 4294901760
  %3562 = vmatpush1.msra.mxu0 %v3561
  %3563 = vmatprep.subr.mxu0 0.0
  %v3564 = vand.u32 %v120, 4294901760
  %v3565 = vsub.f32 %v120, %v3564
  %v3566 = vand.u32 %v3565, 4294901760
  %3567 = vmatpush1.msra.mxu0 %v3566
  %3568 = vmatprep.subr.mxu0 0.0
  %v3569 = vand.u32 %v121, 4294901760
  %v3570 = vsub.f32 %v121, %v3569
  %v3571 = vand.u32 %v3570, 4294901760
  %3572 = vmatpush1.msra.mxu0 %v3571
  %3573 = vmatprep.subr.mxu0 0.0
  %v3574 = vand.u32 %v122, 4294901760
  %v3575 = vsub.f32 %v122, %v3574
  %v3576 = vand.u32 %v3575, 4294901760
  %3577 = vmatpush1.msra.mxu0 %v3576
  %3578 = vmatprep.subr.mxu0 0.0
  %v3579 = vand.u32 %v123, 4294901760
  %v3580 = vsub.f32 %v123, %v3579
  %v3581 = vand.u32 %v3580, 4294901760
  %3582 = vmatpush1.msra.mxu0 %v3581
  %3583 = vmatprep.subr.mxu0 0.0
  %v3584 = vand.u32 %v124, 4294901760
  %v3585 = vsub.f32 %v124, %v3584
  %v3586 = vand.u32 %v3585, 4294901760
  %3587 = vmatpush1.msra.mxu0 %v3586
  %3588 = vmatprep.subr.mxu0 0.0
  %v3589 = vand.u32 %v125, 4294901760
  %v3590 = vsub.f32 %v125, %v3589
  %v3591 = vand.u32 %v3590, 4294901760
  %3592 = vmatpush1.msra.mxu0 %v3591
  %3593 = vmatprep.subr.mxu0 0.0
  %3594 = vmatpush1.msra.mxu0 0.0
  %3595 = vmatprep.subr.mxu0 0.0
  %3596 = vmatpush1.msra.mxu0 0.0
  %3597 = vmatprep.subr.mxu0 0.0
  %3598 = vmatpush1.msra.mxu0 0.0
  %3599 = vmatprep.subr.mxu0 0.0
  %3600 = vmatpush1.msra.mxu0 0.0
  %3601 = vmatprep.subr.mxu0 0.0
  %3602 = vmatpush1.msra.mxu0 0.0
  %3603 = vmatprep.subr.mxu0 0.0
  %3604 = vmatpush1.msra.mxu0 0.0
  %3605 = vmatprep.subr.mxu0 0.0
  %3606 = vmatpush1.msra.mxu0 0.0
  %3607 = vmatprep.subr.mxu0 0.0
  %3608 = vmatpush1.msra.mxu0 0.0
  %3609 = vmatprep.subr.mxu0 0.0
  %3610 = vmatpush1.msra.mxu0 0.0
  %3611 = vmatprep.subr.mxu0 0.0
  %3612 = vmatpush1.msra.mxu0 0.0
  %3613 = vmatprep.subr.mxu0 0.0
  %3614 = vmatpush1.msra.mxu0 0.0
  %3615 = vmatprep.subr.mxu0 0.0
  %3616 = vmatpush1.msra.mxu0 0.0
  %3617 = vmatprep.subr.mxu0 0.0
  %3618 = vmatpush1.msra.mxu0 0.0
  %3619 = vmatprep.subr.mxu0 0.0
  %3620 = vmatpush1.msra.mxu0 0.0
  %3621 = vmatprep.subr.mxu0 0.0
  %3622 = vmatpush1.msra.mxu0 0.0
  %3623 = vmatprep.subr.mxu0 0.0
  %3624 = vmatpush1.msra.mxu0 0.0
  %3625 = vmatprep.mubr.f32.mxu0 0.0
  %v3626 = vand.u32 %v14, 4294901760
  %3627 = vmatmul.mubr.f32.gmra.mrb[0].mxu0 %v3626
  %v3628 = vpop.f32.mrb[0].mxu0
  %v3629 = vadd.f32 %v2750, %v3628
  %v3630 = vpop.f32.mrb[0].mxu0
  %3631 = vmatprep.mubr.f32.mxu0 0.0
  %v3632 = vand.u32 %v15, 4294901760
  %3633 = vmatmul.mubr.f32.gmra.mrb[0].mxu0 %v3632
  %v3634 = vpop.f32.mrb[0].mxu0
  %v3635 = vadd.f32 %v2758, %v3634
  %v3636 = vpop.f32.mrb[0].mxu0
  %3637 = vmatprep.mubr.f32.mxu0 0.0
  %v3638 = vand.u32 %v16, 4294901760
  %3639 = vmatmul.mubr.f32.gmra.mrb[0].mxu0 %v3638
  %v3640 = vpop.f32.mrb[0].mxu0
  %v3641 = vadd.f32 %v2766, %v3640
  %v3642 = vpop.f32.mrb[0].mxu0
  %3643 = vmatprep.mubr.f32.mxu0 0.0
  %v3644 = vand.u32 %v17, 4294901760
  %3645 = vmatmul.mubr.f32.gmra.mrb[0].mxu0 %v3644
  %v3646 = vpop.f32.mrb[0].mxu0
  %v3647 = vadd.f32 %v2774, %v3646
  %v3648 = vpop.f32.mrb[0].mxu0
  %3649 = vmatprep.mubr.f32.mxu0 0.0
  %v3650 = vand.u32 %v18, 4294901760
  %3651 = vmatmul.mubr.f32.gmra.mrb[0].mxu0 %v3650
  %v3652 = vpop.f32.mrb[0].mxu0
  %v3653 = vadd.f32 %v2782, %v3652
  %v3654 = vpop.f32.mrb[0].mxu0
  %3655 = vmatprep.mubr.f32.mxu0 0.0
  %v3656 = vand.u32 %v19, 4294901760
  %3657 = vmatmul.mubr.f32.gmra.mrb[0].mxu0 %v3656
  %v3658 = vpop.f32.mrb[0].mxu0
  %v3659 = vadd.f32 %v2790, %v3658
  %v3660 = vpop.f32.mrb[0].mxu0
  %3661 = vmatprep.mubr.f32.mxu0 0.0
  %v3662 = vand.u32 %v20, 4294901760
  %3663 = vmatmul.mubr.f32.gmra.mrb[0].mxu0 %v3662
  %v3664 = vpop.f32.mrb[0].mxu0
  %v3665 = vadd.f32 %v2798, %v3664
  %v3666 = vpop.f32.mrb[0].mxu0
  %3667 = vmatprep.mubr.f32.mxu0 0.0
  %v3668 = vand.u32 %v21, 4294901760
  %3669 = vmatmul.mubr.f32.gmra.mrb[0].mxu0 %v3668
  %v3670 = vpop.f32.mrb[0].mxu0
  %v3671 = vadd.f32 %v2806, %v3670
  %v3672 = vpop.f32.mrb[0].mxu0
  %3673 = vmatprep.mubr.f32.mxu0 0.0
  %v3674 = vand.u32 %v22, 4294901760
  %3675 = vmatmul.mubr.f32.gmra.mrb[0].mxu0 %v3674
  %v3676 = vpop.f32.mrb[0].mxu0
  %v3677 = vadd.f32 %v2814, %v3676
  %v3678 = vpop.f32.mrb[0].mxu0
  %3679 = vmatprep.mubr.f32.mxu0 0.0
  %v3680 = vand.u32 %v23, 4294901760
  %3681 = vmatmul.mubr.f32.gmra.mrb[0].mxu0 %v3680
  %v3682 = vpop.f32.mrb[0].mxu0
  %v3683 = vadd.f32 %v2822, %v3682
  %v3684 = vpop.f32.mrb[0].mxu0
  %3685 = vmatprep.mubr.f32.mxu0 0.0
  %v3686 = vand.u32 %v24, 4294901760
  %3687 = vmatmul.mubr.f32.gmra.mrb[0].mxu0 %v3686
  %v3688 = vpop.f32.mrb[0].mxu0
  %v3689 = vadd.f32 %v2830, %v3688
  %v3690 = vpop.f32.mrb[0].mxu0
  %3691 = vmatprep.mubr.f32.mxu0 0.0
  %v3692 = vand.u32 %v25, 4294901760
  %3693 = vmatmul.mubr.f32.gmra.mrb[0].mxu0 %v3692
  %v3694 = vpop.f32.mrb[0].mxu0
  %v3695 = vadd.f32 %v2838, %v3694
  %v3696 = vpop.f32.mrb[0].mxu0
  %3697 = vmatprep.mubr.f32.mxu0 0.0
  %v3698 = vand.u32 %v26, 4294901760
  %3699 = vmatmul.mubr.f32.gmra.mrb[0].mxu0 %v3698
  %v3700 = vpop.f32.mrb[0].mxu0
  %v3701 = vadd.f32 %v2846, %v3700
  %v3702 = vpop.f32.mrb[0].mxu0
  %3703 = vmatprep.mubr.f32.mxu0 0.0
  %v3704 = vand.u32 %v27, 4294901760
  %3705 = vmatmul.mubr.f32.gmra.mrb[0].mxu0 %v3704
  %v3706 = vpop.f32.mrb[0].mxu0
  %v3707 = vadd.f32 %v2854, %v3706
  %v3708 = vpop.f32.mrb[0].mxu0
  %3709 = vmatprep.mubr.f32.mxu0 0.0
  %v3710 = vand.u32 %v28, 4294901760
  %3711 = vmatmul.mubr.f32.gmra.mrb[0].mxu0 %v3710
  %v3712 = vpop.f32.mrb[0].mxu0
  %v3713 = vadd.f32 %v2862, %v3712
  %v3714 = vpop.f32.mrb[0].mxu0
  %3715 = vmatprep.mubr.f32.mxu0 0.0
  %v3716 = vand.u32 %v29, 4294901760
  %3717 = vmatmul.mubr.f32.gmra.mrb[0].mxu0 %v3716
  %v3718 = vpop.f32.mrb[0].mxu0
  %v3719 = vadd.f32 %v2870, %v3718
  %v3720 = vpop.f32.mrb[0].mxu0
  %3721 = vmatprep.mubr.f32.mxu0 0.0
  %v3722 = vand.u32 %v30, 4294901760
  %3723 = vmatmul.mubr.f32.gmra.mrb[0].mxu0 %v3722
  %v3724 = vpop.f32.mrb[0].mxu0
  %v3725 = vadd.f32 %v2878, %v3724
  %v3726 = vpop.f32.mrb[0].mxu0
  %3727 = vmatprep.mubr.f32.mxu0 0.0
  %v3728 = vand.u32 %v31, 4294901760
  %3729 = vmatmul.mubr.f32.gmra.mrb[0].mxu0 %v3728
  %v3730 = vpop.f32.mrb[0].mxu0
  %v3731 = vadd.f32 %v2886, %v3730
  %v3732 = vpop.f32.mrb[0].mxu0
  %3733 = vmatprep.mubr.f32.mxu0 0.0
  %v3734 = vand.u32 %v32, 4294901760
  %3735 = vmatmul.mubr.f32.gmra.mrb[0].mxu0 %v3734
  %v3736 = vpop.f32.mrb[0].mxu0
  %v3737 = vadd.f32 %v2894, %v3736
  %v3738 = vpop.f32.mrb[0].mxu0
  %3739 = vmatprep.mubr.f32.mxu0 0.0
  %v3740 = vand.u32 %v33, 4294901760
  %3741 = vmatmul.mubr.f32.gmra.mrb[0].mxu0 %v3740
  %v3742 = vpop.f32.mrb[0].mxu0
  %v3743 = vadd.f32 %v2902, %v3742
  %v3744 = vpop.f32.mrb[0].mxu0
  %3745 = vmatprep.mubr.f32.mxu0 0.0
  %v3746 = vand.u32 %v34, 4294901760
  %3747 = vmatmul.mubr.f32.gmra.mrb[0].mxu0 %v3746
  %v3748 = vpop.f32.mrb[0].mxu0
  %v3749 = vadd.f32 %v2910, %v3748
  %v3750 = vpop.f32.mrb[0].mxu0
  %3751 = vmatprep.mubr.f32.mxu0 0.0
  %v3752 = vand.u32 %v35, 4294901760
  %3753 = vmatmul.mubr.f32.gmra.mrb[0].mxu0 %v3752
  %v3754 = vpop.f32.mrb[0].mxu0
  %v3755 = vadd.f32 %v2918, %v3754
  %v3756 = vpop.f32.mrb[0].mxu0
  %3757 = vmatprep.mubr.f32.mxu0 0.0
  %v3758 = vand.u32 %v36, 4294901760
  %3759 = vmatmul.mubr.f32.gmra.mrb[0].mxu0 %v3758
  %v3760 = vpop.f32.mrb[0].mxu0
  %v3761 = vadd.f32 %v2926, %v3760
  %v3762 = vpop.f32.mrb[0].mxu0
  %3763 = vmatprep.mubr.f32.mxu0 0.0
  %v3764 = vand.u32 %v37, 4294901760
  %3765 = vmatmul.mubr.f32.gmra.mrb[0].mxu0 %v3764
  %v3766 = vpop.f32.mrb[0].mxu0
  %v3767 = vadd.f32 %v2934, %v3766
  %v3768 = vpop.f32.mrb[0].mxu0
  %3769 = vmatprep.mubr.f32.mxu0 0.0
  %v3770 = vand.u32 %v38, 4294901760
  %3771 = vmatmul.mubr.f32.gmra.mrb[0].mxu0 %v3770
  %v3772 = vpop.f32.mrb[0].mxu0
  %v3773 = vadd.f32 %v2942, %v3772
  %v3774 = vpop.f32.mrb[0].mxu0
  %3775 = vmatprep.mubr.f32.mxu0 0.0
  %v3776 = vand.u32 %v39, 4294901760
  %3777 = vmatmul.mubr.f32.gmra.mrb[0].mxu0 %v3776
  %v3778 = vpop.f32.mrb[0].mxu0
  %v3779 = vadd.f32 %v2950, %v3778
  %v3780 = vpop.f32.mrb[0].mxu0
  %3781 = vmatprep.mubr.f32.mxu0 0.0
  %v3782 = vand.u32 %v40, 4294901760
  %3783 = vmatmul.mubr.f32.gmra.mrb[0].mxu0 %v3782
  %v3784 = vpop.f32.mrb[0].mxu0
  %v3785 = vadd.f32 %v2958, %v3784
  %v3786 = vpop.f32.mrb[0].mxu0
  %3787 = vmatprep.mubr.f32.mxu0 0.0
  %v3788 = vand.u32 %v41, 4294901760
  %3789 = vmatmul.mubr.f32.gmra.mrb[0].mxu0 %v3788
  %v3790 = vpop.f32.mrb[0].mxu0
  %v3791 = vadd.f32 %v2966, %v3790
  %v3792 = vpop.f32.mrb[0].mxu0
  %3793 = vmatprep.mubr.f32.mxu0 0.0
  %v3794 = vand.u32 %v42, 4294901760
  %3795 = vmatmul.mubr.f32.gmra.mrb[0].mxu0 %v3794
  %v3796 = vpop.f32.mrb[0].mxu0
  %v3797 = vadd.f32 %v2974, %v3796
  %v3798 = vpop.f32.mrb[0].mxu0
  %3799 = vmatprep.mubr.f32.mxu0 0.0
  %v3800 = vand.u32 %v43, 4294901760
  %3801 = vmatmul.mubr.f32.gmra.mrb[0].mxu0 %v3800
  %v3802 = vpop.f32.mrb[0].mxu0
  %v3803 = vadd.f32 %v2982, %v3802
  %v3804 = vpop.f32.mrb[0].mxu0
  %3805 = vmatprep.mubr.f32.mxu0 0.0
  %v3806 = vand.u32 %v44, 4294901760
  %3807 = vmatmul.mubr.f32.gmra.mrb[0].mxu0 %v3806
  %v3808 = vpop.f32.mrb[0].mxu0
  %v3809 = vadd.f32 %v2990, %v3808
  %v3810 = vpop.f32.mrb[0].mxu0
  %3811 = vmatprep.mubr.f32.mxu0 0.0
  %v3812 = vand.u32 %v45, 4294901760
  %3813 = vmatmul.mubr.f32.gmra.mrb[0].mxu0 %v3812
  %v3814 = vpop.f32.mrb[0].mxu0
  %v3815 = vadd.f32 %v2998, %v3814
  %v3816 = vpop.f32.mrb[0].mxu0
  %3817 = vmatprep.mubr.f32.mxu0 0.0
  %v3818 = vand.u32 %v46, 4294901760
  %3819 = vmatmul.mubr.f32.gmra.mrb[0].mxu0 %v3818
  %v3820 = vpop.f32.mrb[0].mxu0
  %v3821 = vadd.f32 %v3006, %v3820
  %v3822 = vpop.f32.mrb[0].mxu0
  %3823 = vmatprep.mubr.f32.mxu0 0.0
  %v3824 = vand.u32 %v47, 4294901760
  %3825 = vmatmul.mubr.f32.gmra.mrb[0].mxu0 %v3824
  %v3826 = vpop.f32.mrb[0].mxu0
  %v3827 = vadd.f32 %v3014, %v3826
  %v3828 = vpop.f32.mrb[0].mxu0
  %3829 = vmatprep.mubr.f32.mxu0 0.0
  %v3830 = vand.u32 %v48, 4294901760
  %3831 = vmatmul.mubr.f32.gmra.mrb[0].mxu0 %v3830
  %v3832 = vpop.f32.mrb[0].mxu0
  %v3833 = vadd.f32 %v3022, %v3832
  %v3834 = vpop.f32.mrb[0].mxu0
  %3835 = vmatprep.mubr.f32.mxu0 0.0
  %v3836 = vand.u32 %v49, 4294901760
  %3837 = vmatmul.mubr.f32.gmra.mrb[0].mxu0 %v3836
  %v3838 = vpop.f32.mrb[0].mxu0
  %v3839 = vadd.f32 %v3030, %v3838
  %v3840 = vpop.f32.mrb[0].mxu0
  %3841 = vmatprep.mubr.f32.mxu0 0.0
  %v3842 = vand.u32 %v50, 4294901760
  %3843 = vmatmul.mubr.f32.gmra.mrb[0].mxu0 %v3842
  %v3844 = vpop.f32.mrb[0].mxu0
  %v3845 = vadd.f32 %v3038, %v3844
  %v3846 = vpop.f32.mrb[0].mxu0
  %3847 = vmatprep.mubr.f32.mxu0 0.0
  %v3848 = vand.u32 %v51, 4294901760
  %3849 = vmatmul.mubr.f32.gmra.mrb[0].mxu0 %v3848
  %v3850 = vpop.f32.mrb[0].mxu0
  %v3851 = vadd.f32 %v3046, %v3850
  %v3852 = vpop.f32.mrb[0].mxu0
  %3853 = vmatprep.mubr.f32.mxu0 0.0
  %v3854 = vand.u32 %v52, 4294901760
  %3855 = vmatmul.mubr.f32.gmra.mrb[0].mxu0 %v3854
  %v3856 = vpop.f32.mrb[0].mxu0
  %v3857 = vadd.f32 %v3054, %v3856
  %v3858 = vpop.f32.mrb[0].mxu0
  %3859 = vmatprep.mubr.f32.mxu0 0.0
  %v3860 = vand.u32 %v53, 4294901760
  %3861 = vmatmul.mubr.f32.gmra.mrb[0].mxu0 %v3860
  %v3862 = vpop.f32.mrb[0].mxu0
  %v3863 = vadd.f32 %v3062, %v3862
  %v3864 = vpop.f32.mrb[0].mxu0
  %3865 = vmatprep.mubr.f32.mxu0 0.0
  %v3866 = vand.u32 %v54, 4294901760
  %3867 = vmatmul.mubr.f32.gmra.mrb[0].mxu0 %v3866
  %v3868 = vpop.f32.mrb[0].mxu0
  %v3869 = vadd.f32 %v3070, %v3868
  %v3870 = vpop.f32.mrb[0].mxu0
  %3871 = vmatprep.mubr.f32.mxu0 0.0
  %v3872 = vand.u32 %v55, 4294901760
  %3873 = vmatmul.mubr.f32.gmra.mrb[0].mxu0 %v3872
  %v3874 = vpop.f32.mrb[0].mxu0
  %v3875 = vadd.f32 %v3078, %v3874
  %v3876 = vpop.f32.mrb[0].mxu0
  %3877 = vmatprep.mubr.f32.mxu0 0.0
  %v3878 = vand.u32 %v56, 4294901760
  %3879 = vmatmul.mubr.f32.gmra.mrb[0].mxu0 %v3878
  %v3880 = vpop.f32.mrb[0].mxu0
  %v3881 = vadd.f32 %v3086, %v3880
  %v3882 = vpop.f32.mrb[0].mxu0
  %3883 = vmatprep.mubr.f32.mxu0 0.0
  %v3884 = vand.u32 %v57, 4294901760
  %3885 = vmatmul.mubr.f32.gmra.mrb[0].mxu0 %v3884
  %v3886 = vpop.f32.mrb[0].mxu0
  %v3887 = vadd.f32 %v3094, %v3886
  %v3888 = vpop.f32.mrb[0].mxu0
  %3889 = vmatprep.mubr.f32.mxu0 0.0
  %v3890 = vand.u32 %v58, 4294901760
  %3891 = vmatmul.mubr.f32.gmra.mrb[0].mxu0 %v3890
  %v3892 = vpop.f32.mrb[0].mxu0
  %v3893 = vadd.f32 %v3102, %v3892
  %v3894 = vpop.f32.mrb[0].mxu0
  %3895 = vmatprep.mubr.f32.mxu0 0.0
  %v3896 = vand.u32 %v59, 4294901760
  %3897 = vmatmul.mubr.f32.gmra.mrb[0].mxu0 %v3896
  %v3898 = vpop.f32.mrb[0].mxu0
  %v3899 = vadd.f32 %v3110, %v3898
  %v3900 = vpop.f32.mrb[0].mxu0
  %3901 = vmatprep.mubr.f32.mxu0 0.0
  %v3902 = vand.u32 %v60, 4294901760
  %3903 = vmatmul.mubr.f32.gmra.mrb[0].mxu0 %v3902
  %v3904 = vpop.f32.mrb[0].mxu0
  %v3905 = vadd.f32 %v3118, %v3904
  %v3906 = vpop.f32.mrb[0].mxu0
  %3907 = vmatprep.mubr.f32.mxu0 0.0
  %v3908 = vand.u32 %v61, 4294901760
  %3909 = vmatmul.mubr.f32.gmra.mrb[0].mxu0 %v3908
  %v3910 = vpop.f32.mrb[0].mxu0
  %v3911 = vadd.f32 %v3126, %v3910
  %v3912 = vpop.f32.mrb[0].mxu0
  %3913 = vmatprep.mubr.f32.mxu0 0.0
  %v3914 = vand.u32 %v62, 4294901760
  %3915 = vmatmul.mubr.f32.gmra.mrb[0].mxu0 %v3914
  %v3916 = vpop.f32.mrb[0].mxu0
  %v3917 = vadd.f32 %v3134, %v3916
  %v3918 = vpop.f32.mrb[0].mxu0
  %3919 = vmatprep.mubr.f32.mxu0 0.0
  %v3920 = vand.u32 %v63, 4294901760
  %3921 = vmatmul.mubr.f32.gmra.mrb[0].mxu0 %v3920
  %v3922 = vpop.f32.mrb[0].mxu0
  %v3923 = vadd.f32 %v3142, %v3922
  %v3924 = vpop.f32.mrb[0].mxu0
  %3925 = vmatprep.mubr.f32.mxu0 0.0
  %v3926 = vand.u32 %v64, 4294901760
  %3927 = vmatmul.mubr.f32.gmra.mrb[0].mxu0 %v3926
  %v3928 = vpop.f32.mrb[0].mxu0
  %v3929 = vadd.f32 %v3150, %v3928
  %v3930 = vpop.f32.mrb[0].mxu0
  %3931 = vmatprep.mubr.f32.mxu0 0.0
  %v3932 = vand.u32 %v65, 4294901760
  %3933 = vmatmul.mubr.f32.gmra.mrb[0].mxu0 %v3932
  %v3934 = vpop.f32.mrb[0].mxu0
  %v3935 = vadd.f32 %v3158, %v3934
  %v3936 = vpop.f32.mrb[0].mxu0
  %3937 = vmatprep.mubr.f32.mxu0 0.0
  %v3938 = vand.u32 %v66, 4294901760
  %3939 = vmatmul.mubr.f32.gmra.mrb[0].mxu0 %v3938
  %v3940 = vpop.f32.mrb[0].mxu0
  %v3941 = vadd.f32 %v3166, %v3940
  %v3942 = vpop.f32.mrb[0].mxu0
  %3943 = vmatprep.mubr.f32.mxu0 0.0
  %v3944 = vand.u32 %v67, 4294901760
  %3945 = vmatmul.mubr.f32.gmra.mrb[0].mxu0 %v3944
  %v3946 = vpop.f32.mrb[0].mxu0
  %v3947 = vadd.f32 %v3174, %v3946
  %v3948 = vpop.f32.mrb[0].mxu0
  %3949 = vmatprep.mubr.f32.mxu0 0.0
  %v3950 = vand.u32 %v68, 4294901760
  %3951 = vmatmul.mubr.f32.gmra.mrb[0].mxu0 %v3950
  %v3952 = vpop.f32.mrb[0].mxu0
  %v3953 = vadd.f32 %v3182, %v3952
  %v3954 = vpop.f32.mrb[0].mxu0
  %3955 = vmatprep.mubr.f32.mxu0 0.0
  %v3956 = vand.u32 %v69, 4294901760
  %3957 = vmatmul.mubr.f32.gmra.mrb[0].mxu0 %v3956
  %v3958 = vpop.f32.mrb[0].mxu0
  %v3959 = vadd.f32 %v3190, %v3958
  %v3960 = vpop.f32.mrb[0].mxu0
  %3961 = vmatprep.mubr.f32.mxu0 0.0
  %v3962 = vand.u32 %v70, 4294901760
  %3963 = vmatmul.mubr.f32.gmra.mrb[0].mxu0 %v3962
  %v3964 = vpop.f32.mrb[0].mxu0
  %v3965 = vadd.f32 %v3198, %v3964
  %v3966 = vpop.f32.mrb[0].mxu0
  %3967 = vmatprep.mubr.f32.mxu0 0.0
  %v3968 = vand.u32 %v71, 4294901760
  %3969 = vmatmul.mubr.f32.gmra.mrb[0].mxu0 %v3968
  %v3970 = vpop.f32.mrb[0].mxu0
  %v3971 = vadd.f32 %v3206, %v3970
  %v3972 = vpop.f32.mrb[0].mxu0
  %3973 = vmatprep.mubr.f32.mxu0 0.0
  %v3974 = vand.u32 %v72, 4294901760
  %3975 = vmatmul.mubr.f32.gmra.mrb[0].mxu0 %v3974
  %v3976 = vpop.f32.mrb[0].mxu0
  %v3977 = vadd.f32 %v3214, %v3976
  %v3978 = vpop.f32.mrb[0].mxu0
  %3979 = vmatprep.mubr.f32.mxu0 0.0
  %v3980 = vand.u32 %v73, 4294901760
  %3981 = vmatmul.mubr.f32.gmra.mrb[0].mxu0 %v3980
  %v3982 = vpop.f32.mrb[0].mxu0
  %v3983 = vadd.f32 %v3222, %v3982
  %v3984 = vpop.f32.mrb[0].mxu0
  %3985 = vmatprep.mubr.f32.mxu0 0.0
  %v3986 = vand.u32 %v74, 4294901760
  %3987 = vmatmul.mubr.f32.gmra.mrb[0].mxu0 %v3986
  %v3988 = vpop.f32.mrb[0].mxu0
  %v3989 = vadd.f32 %v3230, %v3988
  %v3990 = vpop.f32.mrb[0].mxu0
  %3991 = vmatprep.mubr.f32.mxu0 0.0
  %v3992 = vand.u32 %v75, 4294901760
  %3993 = vmatmul.mubr.f32.gmra.mrb[0].mxu0 %v3992
  %v3994 = vpop.f32.mrb[0].mxu0
  %v3995 = vadd.f32 %v3238, %v3994
  %v3996 = vpop.f32.mrb[0].mxu0
  %3997 = vmatprep.mubr.f32.mxu0 0.0
  %v3998 = vand.u32 %v76, 4294901760
  %3999 = vmatmul.mubr.f32.gmra.mrb[0].mxu0 %v3998
  %v4000 = vpop.f32.mrb[0].mxu0
  %v4001 = vadd.f32 %v3246, %v4000
  %v4002 = vpop.f32.mrb[0].mxu0
  %4003 = vmatprep.mubr.f32.mxu0 0.0
  %v4004 = vand.u32 %v77, 4294901760
  %4005 = vmatmul.mubr.f32.gmra.mrb[0].mxu0 %v4004
  %v4006 = vpop.f32.mrb[0].mxu0
  %v4007 = vadd.f32 %v3254, %v4006
  %v4008 = vpop.f32.mrb[0].mxu0
  %4009 = vmatprep.mubr.f32.mxu0 0.0
  %v4010 = vand.u32 %v78, 4294901760
  %4011 = vmatmul.mubr.f32.gmra.mrb[0].mxu0 %v4010
  %v4012 = vpop.f32.mrb[0].mxu0
  %v4013 = vadd.f32 %v3262, %v4012
  %v4014 = vpop.f32.mrb[0].mxu0
  %4015 = vmatprep.mubr.f32.mxu0 0.0
  %v4016 = vand.u32 %v79, 4294901760
  %4017 = vmatmul.mubr.f32.gmra.mrb[0].mxu0 %v4016
  %v4018 = vpop.f32.mrb[0].mxu0
  %v4019 = vadd.f32 %v3270, %v4018
  %v4020 = vpop.f32.mrb[0].mxu0
  %4021 = vmatprep.mubr.f32.mxu0 0.0
  %v4022 = vand.u32 %v80, 4294901760
  %4023 = vmatmul.mubr.f32.gmra.mrb[0].mxu0 %v4022
  %v4024 = vpop.f32.mrb[0].mxu0
  %v4025 = vadd.f32 %v3278, %v4024
  %v4026 = vpop.f32.mrb[0].mxu0
  %4027 = vmatprep.mubr.f32.mxu0 0.0
  %v4028 = vand.u32 %v81, 4294901760
  %4029 = vmatmul.mubr.f32.gmra.mrb[0].mxu0 %v4028
  %v4030 = vpop.f32.mrb[0].mxu0
  %v4031 = vadd.f32 %v3286, %v4030
  %v4032 = vpop.f32.mrb[0].mxu0
  %4033 = vmatprep.mubr.f32.mxu0 0.0
  %v4034 = vand.u32 %v82, 4294901760
  %4035 = vmatmul.mubr.f32.gmra.mrb[0].mxu0 %v4034
  %v4036 = vpop.f32.mrb[0].mxu0
  %v4037 = vadd.f32 %v3294, %v4036
  %v4038 = vpop.f32.mrb[0].mxu0
  %4039 = vmatprep.mubr.f32.mxu0 0.0
  %v4040 = vand.u32 %v83, 4294901760
  %4041 = vmatmul.mubr.f32.gmra.mrb[0].mxu0 %v4040
  %v4042 = vpop.f32.mrb[0].mxu0
  %v4043 = vadd.f32 %v3302, %v4042
  %v4044 = vpop.f32.mrb[0].mxu0
  %4045 = vmatprep.mubr.f32.mxu0 0.0
  %v4046 = vand.u32 %v84, 4294901760
  %4047 = vmatmul.mubr.f32.gmra.mrb[0].mxu0 %v4046
  %v4048 = vpop.f32.mrb[0].mxu0
  %v4049 = vadd.f32 %v3310, %v4048
  %v4050 = vpop.f32.mrb[0].mxu0
  %4051 = vmatprep.mubr.f32.mxu0 0.0
  %v4052 = vand.u32 %v85, 4294901760
  %4053 = vmatmul.mubr.f32.gmra.mrb[0].mxu0 %v4052
  %v4054 = vpop.f32.mrb[0].mxu0
  %v4055 = vadd.f32 %v3318, %v4054
  %v4056 = vpop.f32.mrb[0].mxu0
  %4057 = vmatprep.mubr.f32.mxu0 0.0
  %v4058 = vand.u32 %v86, 4294901760
  %4059 = vmatmul.mubr.f32.gmra.mrb[0].mxu0 %v4058
  %v4060 = vpop.f32.mrb[0].mxu0
  %v4061 = vadd.f32 %v3326, %v4060
  %v4062 = vpop.f32.mrb[0].mxu0
  %4063 = vmatprep.mubr.f32.mxu0 0.0
  %v4064 = vand.u32 %v87, 4294901760
  %4065 = vmatmul.mubr.f32.gmra.mrb[0].mxu0 %v4064
  %v4066 = vpop.f32.mrb[0].mxu0
  %v4067 = vadd.f32 %v3334, %v4066
  %v4068 = vpop.f32.mrb[0].mxu0
  %4069 = vmatprep.mubr.f32.mxu0 0.0
  %v4070 = vand.u32 %v88, 4294901760
  %4071 = vmatmul.mubr.f32.gmra.mrb[0].mxu0 %v4070
  %v4072 = vpop.f32.mrb[0].mxu0
  %v4073 = vadd.f32 %v3342, %v4072
  %v4074 = vpop.f32.mrb[0].mxu0
  %4075 = vmatprep.mubr.f32.mxu0 0.0
  %v4076 = vand.u32 %v89, 4294901760
  %4077 = vmatmul.mubr.f32.gmra.mrb[0].mxu0 %v4076
  %v4078 = vpop.f32.mrb[0].mxu0
  %v4079 = vadd.f32 %v3350, %v4078
  %v4080 = vpop.f32.mrb[0].mxu0
  %4081 = vmatprep.mubr.f32.mxu0 0.0
  %v4082 = vand.u32 %v90, 4294901760
  %4083 = vmatmul.mubr.f32.gmra.mrb[0].mxu0 %v4082
  %v4084 = vpop.f32.mrb[0].mxu0
  %v4085 = vadd.f32 %v3358, %v4084
  %v4086 = vpop.f32.mrb[0].mxu0
  %4087 = vmatprep.mubr.f32.mxu0 0.0
  %v4088 = vand.u32 %v91, 4294901760
  %4089 = vmatmul.mubr.f32.gmra.mrb[0].mxu0 %v4088
  %v4090 = vpop.f32.mrb[0].mxu0
  %v4091 = vadd.f32 %v3366, %v4090
  %v4092 = vpop.f32.mrb[0].mxu0
  %4093 = vmatprep.mubr.f32.mxu0 0.0
  %v4094 = vand.u32 %v92, 4294901760
  %4095 = vmatmul.mubr.f32.gmra.mrb[0].mxu0 %v4094
  %v4096 = vpop.f32.mrb[0].mxu0
  %v4097 = vadd.f32 %v3374, %v4096
  %v4098 = vpop.f32.mrb[0].mxu0
  %4099 = vmatprep.mubr.f32.mxu0 0.0
  %v4100 = vand.u32 %v93, 4294901760
  %4101 = vmatmul.mubr.f32.gmra.mrb[0].mxu0 %v4100
  %v4102 = vpop.f32.mrb[0].mxu0
  %v4103 = vadd.f32 %v3382, %v4102
  %v4104 = vpop.f32.mrb[0].mxu0
  %4105 = vmatprep.mubr.f32.mxu0 0.0
  %v4106 = vand.u32 %v94, 4294901760
  %4107 = vmatmul.mubr.f32.gmra.mrb[0].mxu0 %v4106
  %v4108 = vpop.f32.mrb[0].mxu0
  %v4109 = vadd.f32 %v3390, %v4108
  %v4110 = vpop.f32.mrb[0].mxu0
  %4111 = vmatprep.mubr.f32.mxu0 0.0
  %v4112 = vand.u32 %v95, 4294901760
  %4113 = vmatmul.mubr.f32.gmra.mrb[0].mxu0 %v4112
  %v4114 = vpop.f32.mrb[0].mxu0
  %v4115 = vadd.f32 %v3398, %v4114
  %v4116 = vpop.f32.mrb[0].mxu0
  %4117 = vmatprep.mubr.f32.mxu0 0.0
  %v4118 = vand.u32 %v96, 4294901760
  %4119 = vmatmul.mubr.f32.gmra.mrb[0].mxu0 %v4118
  %v4120 = vpop.f32.mrb[0].mxu0
  %v4121 = vadd.f32 %v3406, %v4120
  %v4122 = vpop.f32.mrb[0].mxu0
  %4123 = vmatprep.mubr.f32.mxu0 0.0
  %v4124 = vand.u32 %v97, 4294901760
  %4125 = vmatmul.mubr.f32.gmra.mrb[0].mxu0 %v4124
  %v4126 = vpop.f32.mrb[0].mxu0
  %v4127 = vadd.f32 %v3414, %v4126
  %v4128 = vpop.f32.mrb[0].mxu0
  %4129 = vmatprep.mubr.f32.mxu0 0.0
  %v4130 = vand.u32 %v98, 4294901760
  %4131 = vmatmul.mubr.f32.gmra.mrb[0].mxu0 %v4130
  %v4132 = vpop.f32.mrb[0].mxu0
  %v4133 = vadd.f32 %v3422, %v4132
  %v4134 = vpop.f32.mrb[0].mxu0
  %4135 = vmatprep.mubr.f32.mxu0 0.0
  %v4136 = vand.u32 %v99, 4294901760
  %4137 = vmatmul.mubr.f32.gmra.mrb[0].mxu0 %v4136
  %v4138 = vpop.f32.mrb[0].mxu0
  %v4139 = vadd.f32 %v3430, %v4138
  %v4140 = vpop.f32.mrb[0].mxu0
  %4141 = vmatprep.mubr.f32.mxu0 0.0
  %v4142 = vand.u32 %v100, 4294901760
  %4143 = vmatmul.mubr.f32.gmra.mrb[0].mxu0 %v4142
  %v4144 = vpop.f32.mrb[0].mxu0
  %v4145 = vadd.f32 %v3438, %v4144
  %v4146 = vpop.f32.mrb[0].mxu0
  %4147 = vmatprep.mubr.f32.mxu0 0.0
  %v4148 = vand.u32 %v101, 4294901760
  %4149 = vmatmul.mubr.f32.gmra.mrb[0].mxu0 %v4148
  %v4150 = vpop.f32.mrb[0].mxu0
  %v4151 = vadd.f32 %v3446, %v4150
  %v4152 = vpop.f32.mrb[0].mxu0
  %4153 = vmatprep.mubr.f32.mxu0 0.0
  %v4154 = vand.u32 %v102, 4294901760
  %4155 = vmatmul.mubr.f32.gmra.mrb[0].mxu0 %v4154
  %v4156 = vpop.f32.mrb[0].mxu0
  %v4157 = vadd.f32 %v3454, %v4156
  %v4158 = vpop.f32.mrb[0].mxu0
  %4159 = vmatprep.mubr.f32.mxu0 0.0
  %v4160 = vand.u32 %v103, 4294901760
  %4161 = vmatmul.mubr.f32.gmra.mrb[0].mxu0 %v4160
  %v4162 = vpop.f32.mrb[0].mxu0
  %v4163 = vadd.f32 %v3462, %v4162
  %v4164 = vpop.f32.mrb[0].mxu0
  %4165 = vmatprep.mubr.f32.mxu0 0.0
  %v4166 = vand.u32 %v104, 4294901760
  %4167 = vmatmul.mubr.f32.gmra.mrb[0].mxu0 %v4166
  %v4168 = vpop.f32.mrb[0].mxu0
  %v4169 = vadd.f32 %v3470, %v4168
  %v4170 = vpop.f32.mrb[0].mxu0
  %4171 = vmatprep.mubr.f32.mxu0 0.0
  %v4172 = vand.u32 %v105, 4294901760
  %4173 = vmatmul.mubr.f32.gmra.mrb[0].mxu0 %v4172
  %v4174 = vpop.f32.mrb[0].mxu0
  %v4175 = vadd.f32 %v3478, %v4174
  %v4176 = vpop.f32.mrb[0].mxu0
  %4177 = vmatprep.mubr.f32.mxu0 0.0
  %v4178 = vand.u32 %v106, 4294901760
  %4179 = vmatmul.mubr.f32.gmra.mrb[0].mxu0 %v4178
  %v4180 = vpop.f32.mrb[0].mxu0
  %v4181 = vadd.f32 %v3486, %v4180
  %v4182 = vpop.f32.mrb[0].mxu0
  %4183 = vmatprep.mubr.f32.mxu0 0.0
  %v4184 = vand.u32 %v107, 4294901760
  %4185 = vmatmul.mubr.f32.gmra.mrb[0].mxu0 %v4184
  %v4186 = vpop.f32.mrb[0].mxu0
  %v4187 = vadd.f32 %v3494, %v4186
  %v4188 = vpop.f32.mrb[0].mxu0
  %4189 = vmatprep.mubr.f32.mxu0 0.0
  %v4190 = vand.u32 %v108, 4294901760
  %4191 = vmatmul.mubr.f32.gmra.mrb[0].mxu0 %v4190
  %v4192 = vpop.f32.mrb[0].mxu0
  %v4193 = vadd.f32 %v3502, %v4192
  %v4194 = vpop.f32.mrb[0].mxu0
  %4195 = vmatprep.mubr.f32.mxu0 0.0
  %v4196 = vand.u32 %v109, 4294901760
  %4197 = vmatmul.mubr.f32.gmra.mrb[0].mxu0 %v4196
  %v4198 = vpop.f32.mrb[0].mxu0
  %v4199 = vadd.f32 %v3510, %v4198
  %v4200 = vpop.f32.mrb[0].mxu0
  %4201 = vdwg.mxu0
  %4202 = vmatprep.subr.mxu0 0.0
  %v4203 = vand.u32 %v110, 4294901760
  %4204 = vmatpush1.msra.mxu0 %v4203
  %4205 = vmatprep.subr.mxu0 0.0
  %v4206 = vand.u32 %v111, 4294901760
  %4207 = vmatpush1.msra.mxu0 %v4206
  %4208 = vmatprep.subr.mxu0 0.0
  %v4209 = vand.u32 %v112, 4294901760
  %4210 = vmatpush1.msra.mxu0 %v4209
  %4211 = vmatprep.subr.mxu0 0.0
  %v4212 = vand.u32 %v113, 4294901760
  %4213 = vmatpush1.msra.mxu0 %v4212
  %4214 = vmatprep.subr.mxu0 0.0
  %v4215 = vand.u32 %v114, 4294901760
  %4216 = vmatpush1.msra.mxu0 %v4215
  %4217 = vmatprep.subr.mxu0 0.0
  %v4218 = vand.u32 %v115, 4294901760
  %4219 = vmatpush1.msra.mxu0 %v4218
  %4220 = vmatprep.subr.mxu0 0.0
  %v4221 = vand.u32 %v116, 4294901760
  %4222 = vmatpush1.msra.mxu0 %v4221
  %4223 = vmatprep.subr.mxu0 0.0
  %v4224 = vand.u32 %v117, 4294901760
  %4225 = vmatpush1.msra.mxu0 %v4224
  %4226 = vmatprep.subr.mxu0 0.0
  %v4227 = vand.u32 %v118, 4294901760
  %4228 = vmatpush1.msra.mxu0 %v4227
  %4229 = vmatprep.subr.mxu0 0.0
  %v4230 = vand.u32 %v119, 4294901760
  %4231 = vmatpush1.msra.mxu0 %v4230
  %4232 = vmatprep.subr.mxu0 0.0
  %v4233 = vand.u32 %v120, 4294901760
  %4234 = vmatpush1.msra.mxu0 %v4233
  %4235 = vmatprep.subr.mxu0 0.0
  %v4236 = vand.u32 %v121, 4294901760
  %4237 = vmatpush1.msra.mxu0 %v4236
  %4238 = vmatprep.subr.mxu0 0.0
  %v4239 = vand.u32 %v122, 4294901760
  %4240 = vmatpush1.msra.mxu0 %v4239
  %4241 = vmatprep.subr.mxu0 0.0
  %v4242 = vand.u32 %v123, 4294901760
  %4243 = vmatpush1.msra.mxu0 %v4242
  %4244 = vmatprep.subr.mxu0 0.0
  %v4245 = vand.u32 %v124, 4294901760
  %4246 = vmatpush1.msra.mxu0 %v4245
  %4247 = vmatprep.subr.mxu0 0.0
  %v4248 = vand.u32 %v125, 4294901760
  %4249 = vmatpush1.msra.mxu0 %v4248
  %4250 = vmatprep.subr.mxu0 0.0
  %4251 = vmatpush1.msra.mxu0 0.0
  %4252 = vmatprep.subr.mxu0 0.0
  %4253 = vmatpush1.msra.mxu0 0.0
  %4254 = vmatprep.subr.mxu0 0.0
  %4255 = vmatpush1.msra.mxu0 0.0
  %4256 = vmatprep.subr.mxu0 0.0
  %4257 = vmatpush1.msra.mxu0 0.0
  %4258 = vmatprep.subr.mxu0 0.0
  %4259 = vmatpush1.msra.mxu0 0.0
  %4260 = vmatprep.subr.mxu0 0.0
  %4261 = vmatpush1.msra.mxu0 0.0
  %4262 = vmatprep.subr.mxu0 0.0
  %4263 = vmatpush1.msra.mxu0 0.0
  %4264 = vmatprep.subr.mxu0 0.0
  %4265 = vmatpush1.msra.mxu0 0.0
  %4266 = vmatprep.subr.mxu0 0.0
  %4267 = vmatpush1.msra.mxu0 0.0
  %4268 = vmatprep.subr.mxu0 0.0
  %4269 = vmatpush1.msra.mxu0 0.0
  %4270 = vmatprep.subr.mxu0 0.0
  %4271 = vmatpush1.msra.mxu0 0.0
  %4272 = vmatprep.subr.mxu0 0.0
  %4273 = vmatpush1.msra.mxu0 0.0
  %4274 = vmatprep.subr.mxu0 0.0
  %4275 = vmatpush1.msra.mxu0 0.0
  %4276 = vmatprep.subr.mxu0 0.0
  %4277 = vmatpush1.msra.mxu0 0.0
  %4278 = vmatprep.subr.mxu0 0.0
  %4279 = vmatpush1.msra.mxu0 0.0
  %4280 = vmatprep.subr.mxu0 0.0
  %4281 = vmatpush1.msra.mxu0 0.0
  %4282 = vmatprep.mubr.f32.mxu0 0.0
  %v4283 = vand.u32 %v14, 4294901760
  %4284 = vmatmul.mubr.f32.gmra.mrb[0].mxu0 %v4283
  %v4285 = vpop.f32.mrb[0].mxu0
  %v4286 = vadd.f32 %v3629, %v4285
  %v4287 = vpop.f32.mrb[0].mxu0
  %4288 = vmatprep.mubr.f32.mxu0 0.0
  %v4289 = vand.u32 %v15, 4294901760
  %4290 = vmatmul.mubr.f32.gmra.mrb[0].mxu0 %v4289
  %v4291 = vpop.f32.mrb[0].mxu0
  %v4292 = vadd.f32 %v3635, %v4291
  %v4293 = vpop.f32.mrb[0].mxu0
  %4294 = vmatprep.mubr.f32.mxu0 0.0
  %v4295 = vand.u32 %v16, 4294901760
  %4296 = vmatmul.mubr.f32.gmra.mrb[0].mxu0 %v4295
  %v4297 = vpop.f32.mrb[0].mxu0
  %v4298 = vadd.f32 %v3641, %v4297
  %v4299 = vpop.f32.mrb[0].mxu0
  %4300 = vmatprep.mubr.f32.mxu0 0.0
  %v4301 = vand.u32 %v17, 4294901760
  %4302 = vmatmul.mubr.f32.gmra.mrb[0].mxu0 %v4301
  %v4303 = vpop.f32.mrb[0].mxu0
  %v4304 = vadd.f32 %v3647, %v4303
  %v4305 = vpop.f32.mrb[0].mxu0
  %4306 = vmatprep.mubr.f32.mxu0 0.0
  %v4307 = vand.u32 %v18, 4294901760
  %4308 = vmatmul.mubr.f32.gmra.mrb[0].mxu0 %v4307
  %v4309 = vpop.f32.mrb[0].mxu0
  %v4310 = vadd.f32 %v3653, %v4309
  %v4311 = vpop.f32.mrb[0].mxu0
  %4312 = vmatprep.mubr.f32.mxu0 0.0
  %v4313 = vand.u32 %v19, 4294901760
  %4314 = vmatmul.mubr.f32.gmra.mrb[0].mxu0 %v4313
  %v4315 = vpop.f32.mrb[0].mxu0
  %v4316 = vadd.f32 %v3659, %v4315
  %v4317 = vpop.f32.mrb[0].mxu0
  %4318 = vmatprep.mubr.f32.mxu0 0.0
  %v4319 = vand.u32 %v20, 4294901760
  %4320 = vmatmul.mubr.f32.gmra.mrb[0].mxu0 %v4319
  %v4321 = vpop.f32.mrb[0].mxu0
  %v4322 = vadd.f32 %v3665, %v4321
  %v4323 = vpop.f32.mrb[0].mxu0
  %4324 = vmatprep.mubr.f32.mxu0 0.0
  %v4325 = vand.u32 %v21, 4294901760
  %4326 = vmatmul.mubr.f32.gmra.mrb[0].mxu0 %v4325
  %v4327 = vpop.f32.mrb[0].mxu0
  %v4328 = vadd.f32 %v3671, %v4327
  %v4329 = vpop.f32.mrb[0].mxu0
  %4330 = vmatprep.mubr.f32.mxu0 0.0
  %v4331 = vand.u32 %v22, 4294901760
  %4332 = vmatmul.mubr.f32.gmra.mrb[0].mxu0 %v4331
  %v4333 = vpop.f32.mrb[0].mxu0
  %v4334 = vadd.f32 %v3677, %v4333
  %v4335 = vpop.f32.mrb[0].mxu0
  %4336 = vmatprep.mubr.f32.mxu0 0.0
  %v4337 = vand.u32 %v23, 4294901760
  %4338 = vmatmul.mubr.f32.gmra.mrb[0].mxu0 %v4337
  %v4339 = vpop.f32.mrb[0].mxu0
  %v4340 = vadd.f32 %v3683, %v4339
  %v4341 = vpop.f32.mrb[0].mxu0
  %4342 = vmatprep.mubr.f32.mxu0 0.0
  %v4343 = vand.u32 %v24, 4294901760
  %4344 = vmatmul.mubr.f32.gmra.mrb[0].mxu0 %v4343
  %v4345 = vpop.f32.mrb[0].mxu0
  %v4346 = vadd.f32 %v3689, %v4345
  %v4347 = vpop.f32.mrb[0].mxu0
  %4348 = vmatprep.mubr.f32.mxu0 0.0
  %v4349 = vand.u32 %v25, 4294901760
  %4350 = vmatmul.mubr.f32.gmra.mrb[0].mxu0 %v4349
  %v4351 = vpop.f32.mrb[0].mxu0
  %v4352 = vadd.f32 %v3695, %v4351
  %v4353 = vpop.f32.mrb[0].mxu0
  %4354 = vmatprep.mubr.f32.mxu0 0.0
  %v4355 = vand.u32 %v26, 4294901760
  %4356 = vmatmul.mubr.f32.gmra.mrb[0].mxu0 %v4355
  %v4357 = vpop.f32.mrb[0].mxu0
  %v4358 = vadd.f32 %v3701, %v4357
  %v4359 = vpop.f32.mrb[0].mxu0
  %4360 = vmatprep.mubr.f32.mxu0 0.0
  %v4361 = vand.u32 %v27, 4294901760
  %4362 = vmatmul.mubr.f32.gmra.mrb[0].mxu0 %v4361
  %v4363 = vpop.f32.mrb[0].mxu0
  %v4364 = vadd.f32 %v3707, %v4363
  %v4365 = vpop.f32.mrb[0].mxu0
  %4366 = vmatprep.mubr.f32.mxu0 0.0
  %v4367 = vand.u32 %v28, 4294901760
  %4368 = vmatmul.mubr.f32.gmra.mrb[0].mxu0 %v4367
  %v4369 = vpop.f32.mrb[0].mxu0
  %v4370 = vadd.f32 %v3713, %v4369
  %v4371 = vpop.f32.mrb[0].mxu0
  %4372 = vmatprep.mubr.f32.mxu0 0.0
  %v4373 = vand.u32 %v29, 4294901760
  %4374 = vmatmul.mubr.f32.gmra.mrb[0].mxu0 %v4373
  %v4375 = vpop.f32.mrb[0].mxu0
  %v4376 = vadd.f32 %v3719, %v4375
  %v4377 = vpop.f32.mrb[0].mxu0
  %4378 = vmatprep.mubr.f32.mxu0 0.0
  %v4379 = vand.u32 %v30, 4294901760
  %4380 = vmatmul.mubr.f32.gmra.mrb[0].mxu0 %v4379
  %v4381 = vpop.f32.mrb[0].mxu0
  %v4382 = vadd.f32 %v3725, %v4381
  %v4383 = vpop.f32.mrb[0].mxu0
  %4384 = vmatprep.mubr.f32.mxu0 0.0
  %v4385 = vand.u32 %v31, 4294901760
  %4386 = vmatmul.mubr.f32.gmra.mrb[0].mxu0 %v4385
  %v4387 = vpop.f32.mrb[0].mxu0
  %v4388 = vadd.f32 %v3731, %v4387
  %v4389 = vpop.f32.mrb[0].mxu0
  %4390 = vmatprep.mubr.f32.mxu0 0.0
  %v4391 = vand.u32 %v32, 4294901760
  %4392 = vmatmul.mubr.f32.gmra.mrb[0].mxu0 %v4391
  %v4393 = vpop.f32.mrb[0].mxu0
  %v4394 = vadd.f32 %v3737, %v4393
  %v4395 = vpop.f32.mrb[0].mxu0
  %4396 = vmatprep.mubr.f32.mxu0 0.0
  %v4397 = vand.u32 %v33, 4294901760
  %4398 = vmatmul.mubr.f32.gmra.mrb[0].mxu0 %v4397
  %v4399 = vpop.f32.mrb[0].mxu0
  %v4400 = vadd.f32 %v3743, %v4399
  %v4401 = vpop.f32.mrb[0].mxu0
  %4402 = vmatprep.mubr.f32.mxu0 0.0
  %v4403 = vand.u32 %v34, 4294901760
  %4404 = vmatmul.mubr.f32.gmra.mrb[0].mxu0 %v4403
  %v4405 = vpop.f32.mrb[0].mxu0
  %v4406 = vadd.f32 %v3749, %v4405
  %v4407 = vpop.f32.mrb[0].mxu0
  %4408 = vmatprep.mubr.f32.mxu0 0.0
  %v4409 = vand.u32 %v35, 4294901760
  %4410 = vmatmul.mubr.f32.gmra.mrb[0].mxu0 %v4409
  %v4411 = vpop.f32.mrb[0].mxu0
  %v4412 = vadd.f32 %v3755, %v4411
  %v4413 = vpop.f32.mrb[0].mxu0
  %4414 = vmatprep.mubr.f32.mxu0 0.0
  %v4415 = vand.u32 %v36, 4294901760
  %4416 = vmatmul.mubr.f32.gmra.mrb[0].mxu0 %v4415
  %v4417 = vpop.f32.mrb[0].mxu0
  %v4418 = vadd.f32 %v3761, %v4417
  %v4419 = vpop.f32.mrb[0].mxu0
  %4420 = vmatprep.mubr.f32.mxu0 0.0
  %v4421 = vand.u32 %v37, 4294901760
  %4422 = vmatmul.mubr.f32.gmra.mrb[0].mxu0 %v4421
  %v4423 = vpop.f32.mrb[0].mxu0
  %v4424 = vadd.f32 %v3767, %v4423
  %v4425 = vpop.f32.mrb[0].mxu0
  %4426 = vmatprep.mubr.f32.mxu0 0.0
  %v4427 = vand.u32 %v38, 4294901760
  %4428 = vmatmul.mubr.f32.gmra.mrb[0].mxu0 %v4427
  %v4429 = vpop.f32.mrb[0].mxu0
  %v4430 = vadd.f32 %v3773, %v4429
  %v4431 = vpop.f32.mrb[0].mxu0
  %4432 = vmatprep.mubr.f32.mxu0 0.0
  %v4433 = vand.u32 %v39, 4294901760
  %4434 = vmatmul.mubr.f32.gmra.mrb[0].mxu0 %v4433
  %v4435 = vpop.f32.mrb[0].mxu0
  %v4436 = vadd.f32 %v3779, %v4435
  %v4437 = vpop.f32.mrb[0].mxu0
  %4438 = vmatprep.mubr.f32.mxu0 0.0
  %v4439 = vand.u32 %v40, 4294901760
  %4440 = vmatmul.mubr.f32.gmra.mrb[0].mxu0 %v4439
  %v4441 = vpop.f32.mrb[0].mxu0
  %v4442 = vadd.f32 %v3785, %v4441
  %v4443 = vpop.f32.mrb[0].mxu0
  %4444 = vmatprep.mubr.f32.mxu0 0.0
  %v4445 = vand.u32 %v41, 4294901760
  %4446 = vmatmul.mubr.f32.gmra.mrb[0].mxu0 %v4445
  %v4447 = vpop.f32.mrb[0].mxu0
  %v4448 = vadd.f32 %v3791, %v4447
  %v4449 = vpop.f32.mrb[0].mxu0
  %4450 = vmatprep.mubr.f32.mxu0 0.0
  %v4451 = vand.u32 %v42, 4294901760
  %4452 = vmatmul.mubr.f32.gmra.mrb[0].mxu0 %v4451
  %v4453 = vpop.f32.mrb[0].mxu0
  %v4454 = vadd.f32 %v3797, %v4453
  %v4455 = vpop.f32.mrb[0].mxu0
  %4456 = vmatprep.mubr.f32.mxu0 0.0
  %v4457 = vand.u32 %v43, 4294901760
  %4458 = vmatmul.mubr.f32.gmra.mrb[0].mxu0 %v4457
  %v4459 = vpop.f32.mrb[0].mxu0
  %v4460 = vadd.f32 %v3803, %v4459
  %v4461 = vpop.f32.mrb[0].mxu0
  %4462 = vmatprep.mubr.f32.mxu0 0.0
  %v4463 = vand.u32 %v44, 4294901760
  %4464 = vmatmul.mubr.f32.gmra.mrb[0].mxu0 %v4463
  %v4465 = vpop.f32.mrb[0].mxu0
  %v4466 = vadd.f32 %v3809, %v4465
  %v4467 = vpop.f32.mrb[0].mxu0
  %4468 = vmatprep.mubr.f32.mxu0 0.0
  %v4469 = vand.u32 %v45, 4294901760
  %4470 = vmatmul.mubr.f32.gmra.mrb[0].mxu0 %v4469
  %v4471 = vpop.f32.mrb[0].mxu0
  %v4472 = vadd.f32 %v3815, %v4471
  %v4473 = vpop.f32.mrb[0].mxu0
  %4474 = vmatprep.mubr.f32.mxu0 0.0
  %v4475 = vand.u32 %v46, 4294901760
  %4476 = vmatmul.mubr.f32.gmra.mrb[0].mxu0 %v4475
  %v4477 = vpop.f32.mrb[0].mxu0
  %v4478 = vadd.f32 %v3821, %v4477
  %v4479 = vpop.f32.mrb[0].mxu0
  %4480 = vmatprep.mubr.f32.mxu0 0.0
  %v4481 = vand.u32 %v47, 4294901760
  %4482 = vmatmul.mubr.f32.gmra.mrb[0].mxu0 %v4481
  %v4483 = vpop.f32.mrb[0].mxu0
  %v4484 = vadd.f32 %v3827, %v4483
  %v4485 = vpop.f32.mrb[0].mxu0
  %4486 = vmatprep.mubr.f32.mxu0 0.0
  %v4487 = vand.u32 %v48, 4294901760
  %4488 = vmatmul.mubr.f32.gmra.mrb[0].mxu0 %v4487
  %v4489 = vpop.f32.mrb[0].mxu0
  %v4490 = vadd.f32 %v3833, %v4489
  %v4491 = vpop.f32.mrb[0].mxu0
  %4492 = vmatprep.mubr.f32.mxu0 0.0
  %v4493 = vand.u32 %v49, 4294901760
  %4494 = vmatmul.mubr.f32.gmra.mrb[0].mxu0 %v4493
  %v4495 = vpop.f32.mrb[0].mxu0
  %v4496 = vadd.f32 %v3839, %v4495
  %v4497 = vpop.f32.mrb[0].mxu0
  %4498 = vmatprep.mubr.f32.mxu0 0.0
  %v4499 = vand.u32 %v50, 4294901760
  %4500 = vmatmul.mubr.f32.gmra.mrb[0].mxu0 %v4499
  %v4501 = vpop.f32.mrb[0].mxu0
  %v4502 = vadd.f32 %v3845, %v4501
  %v4503 = vpop.f32.mrb[0].mxu0
  %4504 = vmatprep.mubr.f32.mxu0 0.0
  %v4505 = vand.u32 %v51, 4294901760
  %4506 = vmatmul.mubr.f32.gmra.mrb[0].mxu0 %v4505
  %v4507 = vpop.f32.mrb[0].mxu0
  %v4508 = vadd.f32 %v3851, %v4507
  %v4509 = vpop.f32.mrb[0].mxu0
  %4510 = vmatprep.mubr.f32.mxu0 0.0
  %v4511 = vand.u32 %v52, 4294901760
  %4512 = vmatmul.mubr.f32.gmra.mrb[0].mxu0 %v4511
  %v4513 = vpop.f32.mrb[0].mxu0
  %v4514 = vadd.f32 %v3857, %v4513
  %v4515 = vpop.f32.mrb[0].mxu0
  %4516 = vmatprep.mubr.f32.mxu0 0.0
  %v4517 = vand.u32 %v53, 4294901760
  %4518 = vmatmul.mubr.f32.gmra.mrb[0].mxu0 %v4517
  %v4519 = vpop.f32.mrb[0].mxu0
  %v4520 = vadd.f32 %v3863, %v4519
  %v4521 = vpop.f32.mrb[0].mxu0
  %4522 = vmatprep.mubr.f32.mxu0 0.0
  %v4523 = vand.u32 %v54, 4294901760
  %4524 = vmatmul.mubr.f32.gmra.mrb[0].mxu0 %v4523
  %v4525 = vpop.f32.mrb[0].mxu0
  %v4526 = vadd.f32 %v3869, %v4525
  %v4527 = vpop.f32.mrb[0].mxu0
  %4528 = vmatprep.mubr.f32.mxu0 0.0
  %v4529 = vand.u32 %v55, 4294901760
  %4530 = vmatmul.mubr.f32.gmra.mrb[0].mxu0 %v4529
  %v4531 = vpop.f32.mrb[0].mxu0
  %v4532 = vadd.f32 %v3875, %v4531
  %v4533 = vpop.f32.mrb[0].mxu0
  %4534 = vmatprep.mubr.f32.mxu0 0.0
  %v4535 = vand.u32 %v56, 4294901760
  %4536 = vmatmul.mubr.f32.gmra.mrb[0].mxu0 %v4535
  %v4537 = vpop.f32.mrb[0].mxu0
  %v4538 = vadd.f32 %v3881, %v4537
  %v4539 = vpop.f32.mrb[0].mxu0
  %4540 = vmatprep.mubr.f32.mxu0 0.0
  %v4541 = vand.u32 %v57, 4294901760
  %4542 = vmatmul.mubr.f32.gmra.mrb[0].mxu0 %v4541
  %v4543 = vpop.f32.mrb[0].mxu0
  %v4544 = vadd.f32 %v3887, %v4543
  %v4545 = vpop.f32.mrb[0].mxu0
  %4546 = vmatprep.mubr.f32.mxu0 0.0
  %v4547 = vand.u32 %v58, 4294901760
  %4548 = vmatmul.mubr.f32.gmra.mrb[0].mxu0 %v4547
  %v4549 = vpop.f32.mrb[0].mxu0
  %v4550 = vadd.f32 %v3893, %v4549
  %v4551 = vpop.f32.mrb[0].mxu0
  %4552 = vmatprep.mubr.f32.mxu0 0.0
  %v4553 = vand.u32 %v59, 4294901760
  %4554 = vmatmul.mubr.f32.gmra.mrb[0].mxu0 %v4553
  %v4555 = vpop.f32.mrb[0].mxu0
  %v4556 = vadd.f32 %v3899, %v4555
  %v4557 = vpop.f32.mrb[0].mxu0
  %4558 = vmatprep.mubr.f32.mxu0 0.0
  %v4559 = vand.u32 %v60, 4294901760
  %4560 = vmatmul.mubr.f32.gmra.mrb[0].mxu0 %v4559
  %v4561 = vpop.f32.mrb[0].mxu0
  %v4562 = vadd.f32 %v3905, %v4561
  %v4563 = vpop.f32.mrb[0].mxu0
  %4564 = vmatprep.mubr.f32.mxu0 0.0
  %v4565 = vand.u32 %v61, 4294901760
  %4566 = vmatmul.mubr.f32.gmra.mrb[0].mxu0 %v4565
  %v4567 = vpop.f32.mrb[0].mxu0
  %v4568 = vadd.f32 %v3911, %v4567
  %v4569 = vpop.f32.mrb[0].mxu0
  %4570 = vmatprep.mubr.f32.mxu0 0.0
  %v4571 = vand.u32 %v62, 4294901760
  %4572 = vmatmul.mubr.f32.gmra.mrb[0].mxu0 %v4571
  %v4573 = vpop.f32.mrb[0].mxu0
  %v4574 = vadd.f32 %v3917, %v4573
  %v4575 = vpop.f32.mrb[0].mxu0
  %4576 = vmatprep.mubr.f32.mxu0 0.0
  %v4577 = vand.u32 %v63, 4294901760
  %4578 = vmatmul.mubr.f32.gmra.mrb[0].mxu0 %v4577
  %v4579 = vpop.f32.mrb[0].mxu0
  %v4580 = vadd.f32 %v3923, %v4579
  %v4581 = vpop.f32.mrb[0].mxu0
  %4582 = vmatprep.mubr.f32.mxu0 0.0
  %v4583 = vand.u32 %v64, 4294901760
  %4584 = vmatmul.mubr.f32.gmra.mrb[0].mxu0 %v4583
  %v4585 = vpop.f32.mrb[0].mxu0
  %v4586 = vadd.f32 %v3929, %v4585
  %v4587 = vpop.f32.mrb[0].mxu0
  %4588 = vmatprep.mubr.f32.mxu0 0.0
  %v4589 = vand.u32 %v65, 4294901760
  %4590 = vmatmul.mubr.f32.gmra.mrb[0].mxu0 %v4589
  %v4591 = vpop.f32.mrb[0].mxu0
  %v4592 = vadd.f32 %v3935, %v4591
  %v4593 = vpop.f32.mrb[0].mxu0
  %4594 = vmatprep.mubr.f32.mxu0 0.0
  %v4595 = vand.u32 %v66, 4294901760
  %4596 = vmatmul.mubr.f32.gmra.mrb[0].mxu0 %v4595
  %v4597 = vpop.f32.mrb[0].mxu0
  %v4598 = vadd.f32 %v3941, %v4597
  %v4599 = vpop.f32.mrb[0].mxu0
  %4600 = vmatprep.mubr.f32.mxu0 0.0
  %v4601 = vand.u32 %v67, 4294901760
  %4602 = vmatmul.mubr.f32.gmra.mrb[0].mxu0 %v4601
  %v4603 = vpop.f32.mrb[0].mxu0
  %v4604 = vadd.f32 %v3947, %v4603
  %v4605 = vpop.f32.mrb[0].mxu0
  %4606 = vmatprep.mubr.f32.mxu0 0.0
  %v4607 = vand.u32 %v68, 4294901760
  %4608 = vmatmul.mubr.f32.gmra.mrb[0].mxu0 %v4607
  %v4609 = vpop.f32.mrb[0].mxu0
  %v4610 = vadd.f32 %v3953, %v4609
  %v4611 = vpop.f32.mrb[0].mxu0
  %4612 = vmatprep.mubr.f32.mxu0 0.0
  %v4613 = vand.u32 %v69, 4294901760
  %4614 = vmatmul.mubr.f32.gmra.mrb[0].mxu0 %v4613
  %v4615 = vpop.f32.mrb[0].mxu0
  %v4616 = vadd.f32 %v3959, %v4615
  %v4617 = vpop.f32.mrb[0].mxu0
  %4618 = vmatprep.mubr.f32.mxu0 0.0
  %v4619 = vand.u32 %v70, 4294901760
  %4620 = vmatmul.mubr.f32.gmra.mrb[0].mxu0 %v4619
  %v4621 = vpop.f32.mrb[0].mxu0
  %v4622 = vadd.f32 %v3965, %v4621
  %v4623 = vpop.f32.mrb[0].mxu0
  %4624 = vmatprep.mubr.f32.mxu0 0.0
  %v4625 = vand.u32 %v71, 4294901760
  %4626 = vmatmul.mubr.f32.gmra.mrb[0].mxu0 %v4625
  %v4627 = vpop.f32.mrb[0].mxu0
  %v4628 = vadd.f32 %v3971, %v4627
  %v4629 = vpop.f32.mrb[0].mxu0
  %4630 = vmatprep.mubr.f32.mxu0 0.0
  %v4631 = vand.u32 %v72, 4294901760
  %4632 = vmatmul.mubr.f32.gmra.mrb[0].mxu0 %v4631
  %v4633 = vpop.f32.mrb[0].mxu0
  %v4634 = vadd.f32 %v3977, %v4633
  %v4635 = vpop.f32.mrb[0].mxu0
  %4636 = vmatprep.mubr.f32.mxu0 0.0
  %v4637 = vand.u32 %v73, 4294901760
  %4638 = vmatmul.mubr.f32.gmra.mrb[0].mxu0 %v4637
  %v4639 = vpop.f32.mrb[0].mxu0
  %v4640 = vadd.f32 %v3983, %v4639
  %v4641 = vpop.f32.mrb[0].mxu0
  %4642 = vmatprep.mubr.f32.mxu0 0.0
  %v4643 = vand.u32 %v74, 4294901760
  %4644 = vmatmul.mubr.f32.gmra.mrb[0].mxu0 %v4643
  %v4645 = vpop.f32.mrb[0].mxu0
  %v4646 = vadd.f32 %v3989, %v4645
  %v4647 = vpop.f32.mrb[0].mxu0
  %4648 = vmatprep.mubr.f32.mxu0 0.0
  %v4649 = vand.u32 %v75, 4294901760
  %4650 = vmatmul.mubr.f32.gmra.mrb[0].mxu0 %v4649
  %v4651 = vpop.f32.mrb[0].mxu0
  %v4652 = vadd.f32 %v3995, %v4651
  %v4653 = vpop.f32.mrb[0].mxu0
  %4654 = vmatprep.mubr.f32.mxu0 0.0
  %v4655 = vand.u32 %v76, 4294901760
  %4656 = vmatmul.mubr.f32.gmra.mrb[0].mxu0 %v4655
  %v4657 = vpop.f32.mrb[0].mxu0
  %v4658 = vadd.f32 %v4001, %v4657
  %v4659 = vpop.f32.mrb[0].mxu0
  %4660 = vmatprep.mubr.f32.mxu0 0.0
  %v4661 = vand.u32 %v77, 4294901760
  %4662 = vmatmul.mubr.f32.gmra.mrb[0].mxu0 %v4661
  %v4663 = vpop.f32.mrb[0].mxu0
  %v4664 = vadd.f32 %v4007, %v4663
  %v4665 = vpop.f32.mrb[0].mxu0
  %4666 = vmatprep.mubr.f32.mxu0 0.0
  %v4667 = vand.u32 %v78, 4294901760
  %4668 = vmatmul.mubr.f32.gmra.mrb[0].mxu0 %v4667
  %v4669 = vpop.f32.mrb[0].mxu0
  %v4670 = vadd.f32 %v4013, %v4669
  %v4671 = vpop.f32.mrb[0].mxu0
  %4672 = vmatprep.mubr.f32.mxu0 0.0
  %v4673 = vand.u32 %v79, 4294901760
  %4674 = vmatmul.mubr.f32.gmra.mrb[0].mxu0 %v4673
  %v4675 = vpop.f32.mrb[0].mxu0
  %v4676 = vadd.f32 %v4019, %v4675
  %v4677 = vpop.f32.mrb[0].mxu0
  %4678 = vmatprep.mubr.f32.mxu0 0.0
  %v4679 = vand.u32 %v80, 4294901760
  %4680 = vmatmul.mubr.f32.gmra.mrb[0].mxu0 %v4679
  %v4681 = vpop.f32.mrb[0].mxu0
  %v4682 = vadd.f32 %v4025, %v4681
  %v4683 = vpop.f32.mrb[0].mxu0
  %4684 = vmatprep.mubr.f32.mxu0 0.0
  %v4685 = vand.u32 %v81, 4294901760
  %4686 = vmatmul.mubr.f32.gmra.mrb[0].mxu0 %v4685
  %v4687 = vpop.f32.mrb[0].mxu0
  %v4688 = vadd.f32 %v4031, %v4687
  %v4689 = vpop.f32.mrb[0].mxu0
  %4690 = vmatprep.mubr.f32.mxu0 0.0
  %v4691 = vand.u32 %v82, 4294901760
  %4692 = vmatmul.mubr.f32.gmra.mrb[0].mxu0 %v4691
  %v4693 = vpop.f32.mrb[0].mxu0
  %v4694 = vadd.f32 %v4037, %v4693
  %v4695 = vpop.f32.mrb[0].mxu0
  %4696 = vmatprep.mubr.f32.mxu0 0.0
  %v4697 = vand.u32 %v83, 4294901760
  %4698 = vmatmul.mubr.f32.gmra.mrb[0].mxu0 %v4697
  %v4699 = vpop.f32.mrb[0].mxu0
  %v4700 = vadd.f32 %v4043, %v4699
  %v4701 = vpop.f32.mrb[0].mxu0
  %4702 = vmatprep.mubr.f32.mxu0 0.0
  %v4703 = vand.u32 %v84, 4294901760
  %4704 = vmatmul.mubr.f32.gmra.mrb[0].mxu0 %v4703
  %v4705 = vpop.f32.mrb[0].mxu0
  %v4706 = vadd.f32 %v4049, %v4705
  %v4707 = vpop.f32.mrb[0].mxu0
  %4708 = vmatprep.mubr.f32.mxu0 0.0
  %v4709 = vand.u32 %v85, 4294901760
  %4710 = vmatmul.mubr.f32.gmra.mrb[0].mxu0 %v4709
  %v4711 = vpop.f32.mrb[0].mxu0
  %v4712 = vadd.f32 %v4055, %v4711
  %v4713 = vpop.f32.mrb[0].mxu0
  %4714 = vmatprep.mubr.f32.mxu0 0.0
  %v4715 = vand.u32 %v86, 4294901760
  %4716 = vmatmul.mubr.f32.gmra.mrb[0].mxu0 %v4715
  %v4717 = vpop.f32.mrb[0].mxu0
  %v4718 = vadd.f32 %v4061, %v4717
  %v4719 = vpop.f32.mrb[0].mxu0
  %4720 = vmatprep.mubr.f32.mxu0 0.0
  %v4721 = vand.u32 %v87, 4294901760
  %4722 = vmatmul.mubr.f32.gmra.mrb[0].mxu0 %v4721
  %v4723 = vpop.f32.mrb[0].mxu0
  %v4724 = vadd.f32 %v4067, %v4723
  %v4725 = vpop.f32.mrb[0].mxu0
  %4726 = vmatprep.mubr.f32.mxu0 0.0
  %v4727 = vand.u32 %v88, 4294901760
  %4728 = vmatmul.mubr.f32.gmra.mrb[0].mxu0 %v4727
  %v4729 = vpop.f32.mrb[0].mxu0
  %v4730 = vadd.f32 %v4073, %v4729
  %v4731 = vpop.f32.mrb[0].mxu0
  %4732 = vmatprep.mubr.f32.mxu0 0.0
  %v4733 = vand.u32 %v89, 4294901760
  %4734 = vmatmul.mubr.f32.gmra.mrb[0].mxu0 %v4733
  %v4735 = vpop.f32.mrb[0].mxu0
  %v4736 = vadd.f32 %v4079, %v4735
  %v4737 = vpop.f32.mrb[0].mxu0
  %4738 = vmatprep.mubr.f32.mxu0 0.0
  %v4739 = vand.u32 %v90, 4294901760
  %4740 = vmatmul.mubr.f32.gmra.mrb[0].mxu0 %v4739
  %v4741 = vpop.f32.mrb[0].mxu0
  %v4742 = vadd.f32 %v4085, %v4741
  %v4743 = vpop.f32.mrb[0].mxu0
  %4744 = vmatprep.mubr.f32.mxu0 0.0
  %v4745 = vand.u32 %v91, 4294901760
  %4746 = vmatmul.mubr.f32.gmra.mrb[0].mxu0 %v4745
  %v4747 = vpop.f32.mrb[0].mxu0
  %v4748 = vadd.f32 %v4091, %v4747
  %v4749 = vpop.f32.mrb[0].mxu0
  %4750 = vmatprep.mubr.f32.mxu0 0.0
  %v4751 = vand.u32 %v92, 4294901760
  %4752 = vmatmul.mubr.f32.gmra.mrb[0].mxu0 %v4751
  %v4753 = vpop.f32.mrb[0].mxu0
  %v4754 = vadd.f32 %v4097, %v4753
  %v4755 = vpop.f32.mrb[0].mxu0
  %4756 = vmatprep.mubr.f32.mxu0 0.0
  %v4757 = vand.u32 %v93, 4294901760
  %4758 = vmatmul.mubr.f32.gmra.mrb[0].mxu0 %v4757
  %v4759 = vpop.f32.mrb[0].mxu0
  %v4760 = vadd.f32 %v4103, %v4759
  %v4761 = vpop.f32.mrb[0].mxu0
  %4762 = vmatprep.mubr.f32.mxu0 0.0
  %v4763 = vand.u32 %v94, 4294901760
  %4764 = vmatmul.mubr.f32.gmra.mrb[0].mxu0 %v4763
  %v4765 = vpop.f32.mrb[0].mxu0
  %v4766 = vadd.f32 %v4109, %v4765
  %v4767 = vpop.f32.mrb[0].mxu0
  %4768 = vmatprep.mubr.f32.mxu0 0.0
  %v4769 = vand.u32 %v95, 4294901760
  %4770 = vmatmul.mubr.f32.gmra.mrb[0].mxu0 %v4769
  %v4771 = vpop.f32.mrb[0].mxu0
  %v4772 = vadd.f32 %v4115, %v4771
  %v4773 = vpop.f32.mrb[0].mxu0
  %4774 = vmatprep.mubr.f32.mxu0 0.0
  %v4775 = vand.u32 %v96, 4294901760
  %4776 = vmatmul.mubr.f32.gmra.mrb[0].mxu0 %v4775
  %v4777 = vpop.f32.mrb[0].mxu0
  %v4778 = vadd.f32 %v4121, %v4777
  %v4779 = vpop.f32.mrb[0].mxu0
  %4780 = vmatprep.mubr.f32.mxu0 0.0
  %v4781 = vand.u32 %v97, 4294901760
  %4782 = vmatmul.mubr.f32.gmra.mrb[0].mxu0 %v4781
  %v4783 = vpop.f32.mrb[0].mxu0
  %v4784 = vadd.f32 %v4127, %v4783
  %v4785 = vpop.f32.mrb[0].mxu0
  %4786 = vmatprep.mubr.f32.mxu0 0.0
  %v4787 = vand.u32 %v98, 4294901760
  %4788 = vmatmul.mubr.f32.gmra.mrb[0].mxu0 %v4787
  %v4789 = vpop.f32.mrb[0].mxu0
  %v4790 = vadd.f32 %v4133, %v4789
  %v4791 = vpop.f32.mrb[0].mxu0
  %4792 = vmatprep.mubr.f32.mxu0 0.0
  %v4793 = vand.u32 %v99, 4294901760
  %4794 = vmatmul.mubr.f32.gmra.mrb[0].mxu0 %v4793
  %v4795 = vpop.f32.mrb[0].mxu0
  %v4796 = vadd.f32 %v4139, %v4795
  %v4797 = vpop.f32.mrb[0].mxu0
  %4798 = vmatprep.mubr.f32.mxu0 0.0
  %v4799 = vand.u32 %v100, 4294901760
  %4800 = vmatmul.mubr.f32.gmra.mrb[0].mxu0 %v4799
  %v4801 = vpop.f32.mrb[0].mxu0
  %v4802 = vadd.f32 %v4145, %v4801
  %v4803 = vpop.f32.mrb[0].mxu0
  %4804 = vmatprep.mubr.f32.mxu0 0.0
  %v4805 = vand.u32 %v101, 4294901760
  %4806 = vmatmul.mubr.f32.gmra.mrb[0].mxu0 %v4805
  %v4807 = vpop.f32.mrb[0].mxu0
  %v4808 = vadd.f32 %v4151, %v4807
  %v4809 = vpop.f32.mrb[0].mxu0
  %4810 = vmatprep.mubr.f32.mxu0 0.0
  %v4811 = vand.u32 %v102, 4294901760
  %4812 = vmatmul.mubr.f32.gmra.mrb[0].mxu0 %v4811
  %v4813 = vpop.f32.mrb[0].mxu0
  %v4814 = vadd.f32 %v4157, %v4813
  %v4815 = vpop.f32.mrb[0].mxu0
  %4816 = vmatprep.mubr.f32.mxu0 0.0
  %v4817 = vand.u32 %v103, 4294901760
  %4818 = vmatmul.mubr.f32.gmra.mrb[0].mxu0 %v4817
  %v4819 = vpop.f32.mrb[0].mxu0
  %v4820 = vadd.f32 %v4163, %v4819
  %v4821 = vpop.f32.mrb[0].mxu0
  %4822 = vmatprep.mubr.f32.mxu0 0.0
  %v4823 = vand.u32 %v104, 4294901760
  %4824 = vmatmul.mubr.f32.gmra.mrb[0].mxu0 %v4823
  %v4825 = vpop.f32.mrb[0].mxu0
  %v4826 = vadd.f32 %v4169, %v4825
  %v4827 = vpop.f32.mrb[0].mxu0
  %4828 = vmatprep.mubr.f32.mxu0 0.0
  %v4829 = vand.u32 %v105, 4294901760
  %4830 = vmatmul.mubr.f32.gmra.mrb[0].mxu0 %v4829
  %v4831 = vpop.f32.mrb[0].mxu0
  %v4832 = vadd.f32 %v4175, %v4831
  %v4833 = vpop.f32.mrb[0].mxu0
  %4834 = vmatprep.mubr.f32.mxu0 0.0
  %v4835 = vand.u32 %v106, 4294901760
  %4836 = vmatmul.mubr.f32.gmra.mrb[0].mxu0 %v4835
  %v4837 = vpop.f32.mrb[0].mxu0
  %v4838 = vadd.f32 %v4181, %v4837
  %v4839 = vpop.f32.mrb[0].mxu0
  %4840 = vmatprep.mubr.f32.mxu0 0.0
  %v4841 = vand.u32 %v107, 4294901760
  %4842 = vmatmul.mubr.f32.gmra.mrb[0].mxu0 %v4841
  %v4843 = vpop.f32.mrb[0].mxu0
  %v4844 = vadd.f32 %v4187, %v4843
  %v4845 = vpop.f32.mrb[0].mxu0
  %4846 = vmatprep.mubr.f32.mxu0 0.0
  %v4847 = vand.u32 %v108, 4294901760
  %4848 = vmatmul.mubr.f32.gmra.mrb[0].mxu0 %v4847
  %v4849 = vpop.f32.mrb[0].mxu0
  %v4850 = vadd.f32 %v4193, %v4849
  %v4851 = vpop.f32.mrb[0].mxu0
  %4852 = vmatprep.mubr.f32.mxu0 0.0
  %v4853 = vand.u32 %v109, 4294901760
  %4854 = vmatmul.mubr.f32.gmra.mrb[0].mxu0 %v4853
  %v4855 = vpop.f32.mrb[0].mxu0
  %v4856 = vadd.f32 %v4199, %v4855
  %v4857 = vpop.f32.mrb[0].mxu0
  %4858 = vdwg.mxu0
  %vm4859 = vcmp.gt.f32.partialorder %v4286, 0.0
  %vm4860 = vcmp.gt.f32.partialorder %v4292, 0.0
  %vm4861 = vcmp.gt.f32.partialorder %v4298, 0.0
  %vm4862 = vcmp.gt.f32.partialorder %v4304, 0.0
  %vm4863 = vcmp.gt.f32.partialorder %v4310, 0.0
  %vm4864 = vcmp.gt.f32.partialorder %v4316, 0.0
  %vm4865 = vcmp.gt.f32.partialorder %v4322, 0.0
  %vm4866 = vcmp.gt.f32.partialorder %v4328, 0.0
  %vm4867 = vcmp.gt.f32.partialorder %v4334, 0.0
  %vm4868 = vcmp.gt.f32.partialorder %v4340, 0.0
  %vm4869 = vcmp.gt.f32.partialorder %v4346, 0.0
  %vm4870 = vcmp.gt.f32.partialorder %v4352, 0.0
  %vm4871 = vcmp.gt.f32.partialorder %v4358, 0.0
  %vm4872 = vcmp.gt.f32.partialorder %v4364, 0.0
  %vm4873 = vcmp.gt.f32.partialorder %v4370, 0.0
  %vm4874 = vcmp.gt.f32.partialorder %v4376, 0.0
  %vm4875 = vcmp.gt.f32.partialorder %v4382, 0.0
  %vm4876 = vcmp.gt.f32.partialorder %v4388, 0.0
  %vm4877 = vcmp.gt.f32.partialorder %v4394, 0.0
  %vm4878 = vcmp.gt.f32.partialorder %v4400, 0.0
  %vm4879 = vcmp.gt.f32.partialorder %v4406, 0.0
  %vm4880 = vcmp.gt.f32.partialorder %v4412, 0.0
  %vm4881 = vcmp.gt.f32.partialorder %v4418, 0.0
  %vm4882 = vcmp.gt.f32.partialorder %v4424, 0.0
  %vm4883 = vcmp.gt.f32.partialorder %v4430, 0.0
  %vm4884 = vcmp.gt.f32.partialorder %v4436, 0.0
  %vm4885 = vcmp.gt.f32.partialorder %v4442, 0.0
  %vm4886 = vcmp.gt.f32.partialorder %v4448, 0.0
  %vm4887 = vcmp.gt.f32.partialorder %v4454, 0.0
  %vm4888 = vcmp.gt.f32.partialorder %v4460, 0.0
  %vm4889 = vcmp.gt.f32.partialorder %v4466, 0.0
  %vm4890 = vcmp.gt.f32.partialorder %v4472, 0.0
  %vm4891 = vcmp.gt.f32.partialorder %v4478, 0.0
  %vm4892 = vcmp.gt.f32.partialorder %v4484, 0.0
  %vm4893 = vcmp.gt.f32.partialorder %v4490, 0.0
  %vm4894 = vcmp.gt.f32.partialorder %v4496, 0.0
  %vm4895 = vcmp.gt.f32.partialorder %v4502, 0.0
  %vm4896 = vcmp.gt.f32.partialorder %v4508, 0.0
  %vm4897 = vcmp.gt.f32.partialorder %v4514, 0.0
  %vm4898 = vcmp.gt.f32.partialorder %v4520, 0.0
  %vm4899 = vcmp.gt.f32.partialorder %v4526, 0.0
  %vm4900 = vcmp.gt.f32.partialorder %v4532, 0.0
  %vm4901 = vcmp.gt.f32.partialorder %v4538, 0.0
  %vm4902 = vcmp.gt.f32.partialorder %v4544, 0.0
  %vm4903 = vcmp.gt.f32.partialorder %v4550, 0.0
  %vm4904 = vcmp.gt.f32.partialorder %v4556, 0.0
  %vm4905 = vcmp.gt.f32.partialorder %v4562, 0.0
  %vm4906 = vcmp.gt.f32.partialorder %v4568, 0.0
  %vm4907 = vcmp.gt.f32.partialorder %v4574, 0.0
  %vm4908 = vcmp.gt.f32.partialorder %v4580, 0.0
  %vm4909 = vcmp.gt.f32.partialorder %v4586, 0.0
  %vm4910 = vcmp.gt.f32.partialorder %v4592, 0.0
  %vm4911 = vcmp.gt.f32.partialorder %v4598, 0.0
  %vm4912 = vcmp.gt.f32.partialorder %v4604, 0.0
  %vm4913 = vcmp.gt.f32.partialorder %v4610, 0.0
  %vm4914 = vcmp.gt.f32.partialorder %v4616, 0.0
  %vm4915 = vcmp.gt.f32.partialorder %v4622, 0.0
  %vm4916 = vcmp.gt.f32.partialorder %v4628, 0.0
  %vm4917 = vcmp.gt.f32.partialorder %v4634, 0.0
  %vm4918 = vcmp.gt.f32.partialorder %v4640, 0.0
  %vm4919 = vcmp.gt.f32.partialorder %v4646, 0.0
  %vm4920 = vcmp.gt.f32.partialorder %v4652, 0.0
  %vm4921 = vcmp.gt.f32.partialorder %v4658, 0.0
  %vm4922 = vcmp.gt.f32.partialorder %v4664, 0.0
  %vm4923 = vcmp.gt.f32.partialorder %v4670, 0.0
  %vm4924 = vcmp.gt.f32.partialorder %v4676, 0.0
  %vm4925 = vcmp.gt.f32.partialorder %v4682, 0.0
  %vm4926 = vcmp.gt.f32.partialorder %v4688, 0.0
  %vm4927 = vcmp.gt.f32.partialorder %v4694, 0.0
  %vm4928 = vcmp.gt.f32.partialorder %v4700, 0.0
  %vm4929 = vcmp.gt.f32.partialorder %v4706, 0.0
  %vm4930 = vcmp.gt.f32.partialorder %v4712, 0.0
  %vm4931 = vcmp.gt.f32.partialorder %v4718, 0.0
  %vm4932 = vcmp.gt.f32.partialorder %v4724, 0.0
  %vm4933 = vcmp.gt.f32.partialorder %v4730, 0.0
  %vm4934 = vcmp.gt.f32.partialorder %v4736, 0.0
  %vm4935 = vcmp.gt.f32.partialorder %v4742, 0.0
  %vm4936 = vcmp.gt.f32.partialorder %v4748, 0.0
  %vm4937 = vcmp.gt.f32.partialorder %v4754, 0.0
  %vm4938 = vcmp.gt.f32.partialorder %v4760, 0.0
  %vm4939 = vcmp.gt.f32.partialorder %v4766, 0.0
  %vm4940 = vcmp.gt.f32.partialorder %v4772, 0.0
  %vm4941 = vcmp.gt.f32.partialorder %v4778, 0.0
  %vm4942 = vcmp.gt.f32.partialorder %v4784, 0.0
  %vm4943 = vcmp.gt.f32.partialorder %v4790, 0.0
  %vm4944 = vcmp.gt.f32.partialorder %v4796, 0.0
  %vm4945 = vcmp.gt.f32.partialorder %v4802, 0.0
  %vm4946 = vcmp.gt.f32.partialorder %v4808, 0.0
  %vm4947 = vcmp.gt.f32.partialorder %v4814, 0.0
  %vm4948 = vcmp.gt.f32.partialorder %v4820, 0.0
  %vm4949 = vcmp.gt.f32.partialorder %v4826, 0.0
  %vm4950 = vcmp.gt.f32.partialorder %v4832, 0.0
  %vm4951 = vcmp.gt.f32.partialorder %v4838, 0.0
  %vm4952 = vcmp.gt.f32.partialorder %v4844, 0.0
  %vm4953 = vcmp.gt.f32.partialorder %v4850, 0.0
  %vm4954 = vcmp.gt.f32.partialorder %v4856, 0.0
  %v4955 = vmul.f32 %v4286, 0.1
  %v4956 = vmul.f32 %v4292, 0.1
  %v4957 = vmul.f32 %v4298, 0.1
  %v4958 = vmul.f32 %v4304, 0.1
  %v4959 = vmul.f32 %v4310, 0.1
  %v4960 = vmul.f32 %v4316, 0.1
  %v4961 = vmul.f32 %v4322, 0.1
  %v4962 = vmul.f32 %v4328, 0.1
  %v4963 = vmul.f32 %v4334, 0.1
  %v4964 = vmul.f32 %v4340, 0.1
  %v4965 = vmul.f32 %v4346, 0.1
  %v4966 = vmul.f32 %v4352, 0.1
  %v4967 = vmul.f32 %v4358, 0.1
  %v4968 = vmul.f32 %v4364, 0.1
  %v4969 = vmul.f32 %v4370, 0.1
  %v4970 = vmul.f32 %v4376, 0.1
  %v4971 = vmul.f32 %v4382, 0.1
  %v4972 = vmul.f32 %v4388, 0.1
  %v4973 = vmul.f32 %v4394, 0.1
  %v4974 = vmul.f32 %v4400, 0.1
  %v4975 = vmul.f32 %v4406, 0.1
  %v4976 = vmul.f32 %v4412, 0.1
  %v4977 = vmul.f32 %v4418, 0.1
  %v4978 = vmul.f32 %v4424, 0.1
  %v4979 = vmul.f32 %v4430, 0.1
  %v4980 = vmul.f32 %v4436, 0.1
  %v4981 = vmul.f32 %v4442, 0.1
  %v4982 = vmul.f32 %v4448, 0.1
  %v4983 = vmul.f32 %v4454, 0.1
  %v4984 = vmul.f32 %v4460, 0.1
  %v4985 = vmul.f32 %v4466, 0.1
  %v4986 = vmul.f32 %v4472, 0.1
  %v4987 = vmul.f32 %v4478, 0.1
  %v4988 = vmul.f32 %v4484, 0.1
  %v4989 = vmul.f32 %v4490, 0.1
  %v4990 = vmul.f32 %v4496, 0.1
  %v4991 = vmul.f32 %v4502, 0.1
  %v4992 = vmul.f32 %v4508, 0.1
  %v4993 = vmul.f32 %v4514, 0.1
  %v4994 = vmul.f32 %v4520, 0.1
  %v4995 = vmul.f32 %v4526, 0.1
  %v4996 = vmul.f32 %v4532, 0.1
  %v4997 = vmul.f32 %v4538, 0.1
  %v4998 = vmul.f32 %v4544, 0.1
  %v4999 = vmul.f32 %v4550, 0.1
  %v5000 = vmul.f32 %v4556, 0.1
  %v5001 = vmul.f32 %v4562, 0.1
  %v5002 = vmul.f32 %v4568, 0.1
  %v5003 = vmul.f32 %v4574, 0.1
  %v5004 = vmul.f32 %v4580, 0.1
  %v5005 = vmul.f32 %v4586, 0.1
  %v5006 = vmul.f32 %v4592, 0.1
  %v5007 = vmul.f32 %v4598, 0.1
  %v5008 = vmul.f32 %v4604, 0.1
  %v5009 = vmul.f32 %v4610, 0.1
  %v5010 = vmul.f32 %v4616, 0.1
  %v5011 = vmul.f32 %v4622, 0.1
  %v5012 = vmul.f32 %v4628, 0.1
  %v5013 = vmul.f32 %v4634, 0.1
  %v5014 = vmul.f32 %v4640, 0.1
  %v5015 = vmul.f32 %v4646, 0.1
  %v5016 = vmul.f32 %v4652, 0.1
  %v5017 = vmul.f32 %v4658, 0.1
  %v5018 = vmul.f32 %v4664, 0.1
  %v5019 = vmul.f32 %v4670, 0.1
  %v5020 = vmul.f32 %v4676, 0.1
  %v5021 = vmul.f32 %v4682, 0.1
  %v5022 = vmul.f32 %v4688, 0.1
  %v5023 = vmul.f32 %v4694, 0.1
  %v5024 = vmul.f32 %v4700, 0.1
  %v5025 = vmul.f32 %v4706, 0.1
  %v5026 = vmul.f32 %v4712, 0.1
  %v5027 = vmul.f32 %v4718, 0.1
  %v5028 = vmul.f32 %v4724, 0.1
  %v5029 = vmul.f32 %v4730, 0.1
  %v5030 = vmul.f32 %v4736, 0.1
  %v5031 = vmul.f32 %v4742, 0.1
  %v5032 = vmul.f32 %v4748, 0.1
  %v5033 = vmul.f32 %v4754, 0.1
  %v5034 = vmul.f32 %v4760, 0.1
  %v5035 = vmul.f32 %v4766, 0.1
  %v5036 = vmul.f32 %v4772, 0.1
  %v5037 = vmul.f32 %v4778, 0.1
  %v5038 = vmul.f32 %v4784, 0.1
  %v5039 = vmul.f32 %v4790, 0.1
  %v5040 = vmul.f32 %v4796, 0.1
  %v5041 = vmul.f32 %v4802, 0.1
  %v5042 = vmul.f32 %v4808, 0.1
  %v5043 = vmul.f32 %v4814, 0.1
  %v5044 = vmul.f32 %v4820, 0.1
  %v5045 = vmul.f32 %v4826, 0.1
  %v5046 = vmul.f32 %v4832, 0.1
  %v5047 = vmul.f32 %v4838, 0.1
  %v5048 = vmul.f32 %v4844, 0.1
  %v5049 = vmul.f32 %v4850, 0.1
  %v5050 = vmul.f32 %v4856, 0.1
  %v5051 = vsel %vm4859, %v4286, %v4955
  %v5052 = vsel %vm4860, %v4292, %v4956
  %v5053 = vsel %vm4861, %v4298, %v4957
  %v5054 = vsel %vm4862, %v4304, %v4958
  %v5055 = vsel %vm4863, %v4310, %v4959
  %v5056 = vsel %vm4864, %v4316, %v4960
  %v5057 = vsel %vm4865, %v4322, %v4961
  %v5058 = vsel %vm4866, %v4328, %v4962
  %v5059 = vsel %vm4867, %v4334, %v4963
  %v5060 = vsel %vm4868, %v4340, %v4964
  %v5061 = vsel %vm4869, %v4346, %v4965
  %v5062 = vsel %vm4870, %v4352, %v4966
  %v5063 = vsel %vm4871, %v4358, %v4967
  %v5064 = vsel %vm4872, %v4364, %v4968
  %v5065 = vsel %vm4873, %v4370, %v4969
  %v5066 = vsel %vm4874, %v4376, %v4970
  %v5067 = vsel %vm4875, %v4382, %v4971
  %v5068 = vsel %vm4876, %v4388, %v4972
  %v5069 = vsel %vm4877, %v4394, %v4973
  %v5070 = vsel %vm4878, %v4400, %v4974
  %v5071 = vsel %vm4879, %v4406, %v4975
  %v5072 = vsel %vm4880, %v4412, %v4976
  %v5073 = vsel %vm4881, %v4418, %v4977
  %v5074 = vsel %vm4882, %v4424, %v4978
  %v5075 = vsel %vm4883, %v4430, %v4979
  %v5076 = vsel %vm4884, %v4436, %v4980
  %v5077 = vsel %vm4885, %v4442, %v4981
  %v5078 = vsel %vm4886, %v4448, %v4982
  %v5079 = vsel %vm4887, %v4454, %v4983
  %v5080 = vsel %vm4888, %v4460, %v4984
  %v5081 = vsel %vm4889, %v4466, %v4985
  %v5082 = vsel %vm4890, %v4472, %v4986
  %v5083 = vsel %vm4891, %v4478, %v4987
  %v5084 = vsel %vm4892, %v4484, %v4988
  %v5085 = vsel %vm4893, %v4490, %v4989
  %v5086 = vsel %vm4894, %v4496, %v4990
  %v5087 = vsel %vm4895, %v4502, %v4991
  %v5088 = vsel %vm4896, %v4508, %v4992
  %v5089 = vsel %vm4897, %v4514, %v4993
  %v5090 = vsel %vm4898, %v4520, %v4994
  %v5091 = vsel %vm4899, %v4526, %v4995
  %v5092 = vsel %vm4900, %v4532, %v4996
  %v5093 = vsel %vm4901, %v4538, %v4997
  %v5094 = vsel %vm4902, %v4544, %v4998
  %v5095 = vsel %vm4903, %v4550, %v4999
  %v5096 = vsel %vm4904, %v4556, %v5000
  %v5097 = vsel %vm4905, %v4562, %v5001
  %v5098 = vsel %vm4906, %v4568, %v5002
  %v5099 = vsel %vm4907, %v4574, %v5003
  %v5100 = vsel %vm4908, %v4580, %v5004
  %v5101 = vsel %vm4909, %v4586, %v5005
  %v5102 = vsel %vm4910, %v4592, %v5006
  %v5103 = vsel %vm4911, %v4598, %v5007
  %v5104 = vsel %vm4912, %v4604, %v5008
  %v5105 = vsel %vm4913, %v4610, %v5009
  %v5106 = vsel %vm4914, %v4616, %v5010
  %v5107 = vsel %vm4915, %v4622, %v5011
  %v5108 = vsel %vm4916, %v4628, %v5012
  %v5109 = vsel %vm4917, %v4634, %v5013
  %v5110 = vsel %vm4918, %v4640, %v5014
  %v5111 = vsel %vm4919, %v4646, %v5015
  %v5112 = vsel %vm4920, %v4652, %v5016
  %v5113 = vsel %vm4921, %v4658, %v5017
  %v5114 = vsel %vm4922, %v4664, %v5018
  %v5115 = vsel %vm4923, %v4670, %v5019
  %v5116 = vsel %vm4924, %v4676, %v5020
  %v5117 = vsel %vm4925, %v4682, %v5021
  %v5118 = vsel %vm4926, %v4688, %v5022
  %v5119 = vsel %vm4927, %v4694, %v5023
  %v5120 = vsel %vm4928, %v4700, %v5024
  %v5121 = vsel %vm4929, %v4706, %v5025
  %v5122 = vsel %vm4930, %v4712, %v5026
  %v5123 = vsel %vm4931, %v4718, %v5027
  %v5124 = vsel %vm4932, %v4724, %v5028
  %v5125 = vsel %vm4933, %v4730, %v5029
  %v5126 = vsel %vm4934, %v4736, %v5030
  %v5127 = vsel %vm4935, %v4742, %v5031
  %v5128 = vsel %vm4936, %v4748, %v5032
  %v5129 = vsel %vm4937, %v4754, %v5033
  %v5130 = vsel %vm4938, %v4760, %v5034
  %v5131 = vsel %vm4939, %v4766, %v5035
  %v5132 = vsel %vm4940, %v4772, %v5036
  %v5133 = vsel %vm4941, %v4778, %v5037
  %v5134 = vsel %vm4942, %v4784, %v5038
  %v5135 = vsel %vm4943, %v4790, %v5039
  %v5136 = vsel %vm4944, %v4796, %v5040
  %v5137 = vsel %vm4945, %v4802, %v5041
  %v5138 = vsel %vm4946, %v4808, %v5042
  %v5139 = vsel %vm4947, %v4814, %v5043
  %v5140 = vsel %vm4948, %v4820, %v5044
  %v5141 = vsel %vm4949, %v4826, %v5045
  %v5142 = vsel %vm4950, %v4832, %v5046
  %v5143 = vsel %vm4951, %v4838, %v5047
  %v5144 = vsel %vm4952, %v4844, %v5048
  %v5145 = vsel %vm4953, %v4850, %v5049
  %v5146 = vsel %vm4954, %v4856, %v5050
  %5147 = vst [vmem:[%s3] sm:$0xff] %v5051
  %5148 = vst [vmem:[%s3 + $0x8] sm:$0xff] %v5052
  %5149 = vst [vmem:[%s3 + $0x10] sm:$0xff] %v5053
  %5150 = vst [vmem:[%s3 + $0x18] sm:$0xff] %v5054
  %5151 = vst [vmem:[%s3 + $0x20] sm:$0xff] %v5055
  %5152 = vst [vmem:[%s3 + $0x28] sm:$0xff] %v5056
  %5153 = vst [vmem:[%s3 + $0x30] sm:$0xff] %v5057
  %5154 = vst [vmem:[%s3 + $0x38] sm:$0xff] %v5058
  %5155 = vst [vmem:[%s3 + $0x40] sm:$0xff] %v5059
  %5156 = vst [vmem:[%s3 + $0x48] sm:$0xff] %v5060
  %5157 = vst [vmem:[%s3 + $0x50] sm:$0xff] %v5061
  %5158 = vst [vmem:[%s3 + $0x58] sm:$0xff] %v5062
  %5159 = vst [vmem:[%s3 + $0x60] sm:$0xff] %v5063
  %5160 = vst [vmem:[%s3 + $0x68] sm:$0xff] %v5064
  %5161 = vst [vmem:[%s3 + $0x70] sm:$0xff] %v5065
  %5162 = vst [vmem:[%s3 + $0x78] sm:$0xff] %v5066
  %5163 = vst [vmem:[%s3 + $0x80] sm:$0xff] %v5067
  %5164 = vst [vmem:[%s3 + $0x88] sm:$0xff] %v5068
  %5165 = vst [vmem:[%s3 + $0x90] sm:$0xff] %v5069
  %5166 = vst [vmem:[%s3 + $0x98] sm:$0xff] %v5070
  %5167 = vst [vmem:[%s3 + $0xa0] sm:$0xff] %v5071
  %5168 = vst [vmem:[%s3 + $0xa8] sm:$0xff] %v5072
  %5169 = vst [vmem:[%s3 + $0xb0] sm:$0xff] %v5073
  %5170 = vst [vmem:[%s3 + $0xb8] sm:$0xff] %v5074
  %5171 = vst [vmem:[%s3 + $0xc0] sm:$0xff] %v5075
  %5172 = vst [vmem:[%s3 + $0xc8] sm:$0xff] %v5076
  %5173 = vst [vmem:[%s3 + $0xd0] sm:$0xff] %v5077
  %5174 = vst [vmem:[%s3 + $0xd8] sm:$0xff] %v5078
  %5175 = vst [vmem:[%s3 + $0xe0] sm:$0xff] %v5079
  %5176 = vst [vmem:[%s3 + $0xe8] sm:$0xff] %v5080
  %5177 = vst [vmem:[%s3 + $0xf0] sm:$0xff] %v5081
  %5178 = vst [vmem:[%s3 + $0xf8] sm:$0xff] %v5082
  %5179 = vst [vmem:[%s3 + $0x100] sm:$0xff] %v5083
  %5180 = vst [vmem:[%s3 + $0x108] sm:$0xff] %v5084
  %5181 = vst [vmem:[%s3 + $0x110] sm:$0xff] %v5085
  %5182 = vst [vmem:[%s3 + $0x118] sm:$0xff] %v5086
  %5183 = vst [vmem:[%s3 + $0x120] sm:$0xff] %v5087
  %5184 = vst [vmem:[%s3 + $0x128] sm:$0xff] %v5088
  %5185 = vst [vmem:[%s3 + $0x130] sm:$0xff] %v5089
  %5186 = vst [vmem:[%s3 + $0x138] sm:$0xff] %v5090
  %5187 = vst [vmem:[%s3 + $0x140] sm:$0xff] %v5091
  %5188 = vst [vmem:[%s3 + $0x148] sm:$0xff] %v5092
  %5189 = vst [vmem:[%s3 + $0x150] sm:$0xff] %v5093
  %5190 = vst [vmem:[%s3 + $0x158] sm:$0xff] %v5094
  %5191 = vst [vmem:[%s3 + $0x160] sm:$0xff] %v5095
  %5192 = vst [vmem:[%s3 + $0x168] sm:$0xff] %v5096
  %5193 = vst [vmem:[%s3 + $0x170] sm:$0xff] %v5097
  %5194 = vst [vmem:[%s3 + $0x178] sm:$0xff] %v5098
  %5195 = vst [vmem:[%s3 + $0x180] sm:$0xff] %v5099
  %5196 = vst [vmem:[%s3 + $0x188] sm:$0xff] %v5100
  %5197 = vst [vmem:[%s3 + $0x190] sm:$0xff] %v5101
  %5198 = vst [vmem:[%s3 + $0x198] sm:$0xff] %v5102
  %5199 = vst [vmem:[%s3 + $0x1a0] sm:$0xff] %v5103
  %5200 = vst [vmem:[%s3 + $0x1a8] sm:$0xff] %v5104
  %5201 = vst [vmem:[%s3 + $0x1b0] sm:$0xff] %v5105
  %5202 = vst [vmem:[%s3 + $0x1b8] sm:$0xff] %v5106
  %5203 = vst [vmem:[%s3 + $0x1c0] sm:$0xff] %v5107
  %5204 = vst [vmem:[%s3 + $0x1c8] sm:$0xff] %v5108
  %5205 = vst [vmem:[%s3 + $0x1d0] sm:$0xff] %v5109
  %5206 = vst [vmem:[%s3 + $0x1d8] sm:$0xff] %v5110
  %5207 = vst [vmem:[%s3 + $0x1e0] sm:$0xff] %v5111
  %5208 = vst [vmem:[%s3 + $0x1e8] sm:$0xff] %v5112
  %5209 = vst [vmem:[%s3 + $0x1f0] sm:$0xff] %v5113
  %5210 = vst [vmem:[%s3 + $0x1f8] sm:$0xff] %v5114
  %5211 = vst [vmem:[%s3 + $0x200] sm:$0xff] %v5115
  %5212 = vst [vmem:[%s3 + $0x208] sm:$0xff] %v5116
  %5213 = vst [vmem:[%s3 + $0x210] sm:$0xff] %v5117
  %5214 = vst [vmem:[%s3 + $0x218] sm:$0xff] %v5118
  %5215 = vst [vmem:[%s3 + $0x220] sm:$0xff] %v5119
  %5216 = vst [vmem:[%s3 + $0x228] sm:$0xff] %v5120
  %5217 = vst [vmem:[%s3 + $0x230] sm:$0xff] %v5121
  %5218 = vst [vmem:[%s3 + $0x238] sm:$0xff] %v5122
  %5219 = vst [vmem:[%s3 + $0x240] sm:$0xff] %v5123
  %5220 = vst [vmem:[%s3 + $0x248] sm:$0xff] %v5124
  %5221 = vst [vmem:[%s3 + $0x250] sm:$0xff] %v5125
  %5222 = vst [vmem:[%s3 + $0x258] sm:$0xff] %v5126
  %5223 = vst [vmem:[%s3 + $0x260] sm:$0xff] %v5127
  %5224 = vst [vmem:[%s3 + $0x268] sm:$0xff] %v5128
  %5225 = vst [vmem:[%s3 + $0x270] sm:$0xff] %v5129
  %5226 = vst [vmem:[%s3 + $0x278] sm:$0xff] %v5130
  %5227 = vst [vmem:[%s3 + $0x280] sm:$0xff] %v5131
  %5228 = vst [vmem:[%s3 + $0x288] sm:$0xff] %v5132
  %5229 = vst [vmem:[%s3 + $0x290] sm:$0xff] %v5133
  %5230 = vst [vmem:[%s3 + $0x298] sm:$0xff] %v5134
  %5231 = vst [vmem:[%s3 + $0x2a0] sm:$0xff] %v5135
  %5232 = vst [vmem:[%s3 + $0x2a8] sm:$0xff] %v5136
  %5233 = vst [vmem:[%s3 + $0x2b0] sm:$0xff] %v5137
  %5234 = vst [vmem:[%s3 + $0x2b8] sm:$0xff] %v5138
  %5235 = vst [vmem:[%s3 + $0x2c0] sm:$0xff] %v5139
  %5236 = vst [vmem:[%s3 + $0x2c8] sm:$0xff] %v5140
  %5237 = vst [vmem:[%s3 + $0x2d0] sm:$0xff] %v5141
  %5238 = vst [vmem:[%s3 + $0x2d8] sm:$0xff] %v5142
  %5239 = vst [vmem:[%s3 + $0x2e0] sm:$0xff] %v5143
  %5240 = vst [vmem:[%s3 + $0x2e8] sm:$0xff] %v5144
  %5241 = vst [vmem:[%s3 + $0x2f0] sm:$0xff] %v5145
  %5242 = vst [vmem:[%s3 + $0x2f8] sm:$0xff] %v5146
  // Predicated region
  $region14: #{linear_leakyrelu.1} parent=0 // pred_check
    _
  $region15: #{linear_leakyrelu.1} parent=0 // pred_check_branch
    %5244 = sbr.rel (0) target = $region17
  $region16: #{linear_leakyrelu.1} parent=0 // pred_region
    _
  $region17: #{linear_leakyrelu.1} parent=0 // pred_fallthru
    _
  // Predicated region
  $region18: #{linear_leakyrelu.1} parent=0 // pred_check
    _
  $region19: #{linear_leakyrelu.1} parent=0 // pred_check_branch
    %5246 = sbr.rel (0) target = $region21
  $region20: #{linear_leakyrelu.1} parent=0 // pred_region
    _
  $region21: #{linear_leakyrelu.1} parent=0 // pred_fallthru
    _

</llo_original>
